<compile_context>
chip_gen: v5e
topology: v5e:2x2
jax: 0.10.0
libtpu: 0.0.40
codegen_flags: <defaults>
</compile_context>

<pallas_src>
import jax
import jax.numpy as jnp
from jax.experimental import pallas as pl
from jax.experimental.pallas import tpu as pltpu

_LOSS_LANES = 128


# ---------------------------------------------------------------------------
# Pallas kernel: Bb graphs (one block of the batch) per grid step.
# ---------------------------------------------------------------------------
def _diffpool_kernel(h_ref, adj_ref, w0_ref, b0_ref, w1_ref, b1_ref,
                     wp_ref, bp_ref,
                     h_out_ref, adj_out_ref, link_ref, ent_ref):
    Bb = h_ref.shape[0]
    C = wp_ref.shape[1]

    w0 = w0_ref[...]
    b0 = b0_ref[...]
    w1 = w1_ref[...]
    b1 = b1_ref[...]
    wp = wp_ref[...]
    bp = bp_ref[...]

    # (C, C) identity mask for the trace term; hoisted out of the graph loop.
    rows = jax.lax.broadcasted_iota(jnp.int32, (C, C), 0)
    cols = jax.lax.broadcasted_iota(jnp.int32, (C, C), 1)
    eye = (rows == cols).astype(jnp.float32)

    # dot_general contracting dim 0 of both operands  ==  lhs^T @ rhs.
    dn_t = (((0,), (0,)), ((), ()))

    def _sum_all(x):  # full 2-D reduction, keepdims -> (1, 1)
        return jnp.sum(jnp.sum(x, axis=-1, keepdims=True), axis=0, keepdims=True)

    for i in range(Bb):                      # static unroll over the block batch
        h_b = h_ref[i]                       # (N, D) bf16
        adj_b = adj_ref[i]                   # (N, N) bf16
        h_f = h_b.astype(jnp.float32)

        # ---- assignLayers: GnnLayerwithAdj ---------------------------------
        # TODO(synk): GnnLayerwithAdj source was not provided; implemented as
        # the standard DiffPool GraphConv stack (add_self=True since
        # concat=False, JK='last', ReLU on hidden layer, linear last layer).
        agg0 = jnp.dot(adj_b, h_b, preferred_element_type=jnp.float32) + h_f
        x = jnp.dot(agg0, w0, preferred_element_type=jnp.float32) + b0
        x = jnp.maximum(x, 0.0)                                       # ReLU
        agg1 = jnp.dot(adj_b, x.astype(jnp.bfloat16),
                       preferred_element_type=jnp.float32) + x
        x = jnp.dot(agg1, w1, preferred_element_type=jnp.float32) + b1

        # ---- assignPredLayer + Softmax (log-softmax kept for entropy) -------
        logits = jnp.dot(x, wp, preferred_element_type=jnp.float32) + bp
        m = jnp.max(logits, axis=-1, keepdims=True)
        shifted = logits - m
        e = jnp.exp(shifted)
        denom = jnp.sum(e, axis=-1, keepdims=True)
        s = e * pl.reciprocal(denom, approx=True)                     # (N, C)
        logp = shifted - jnp.log(denom)                               # log-softmax
        s_b = s.astype(jnp.bfloat16)

        # ---- pooled node features: S^T @ h  -> (C, D) ------------------------
        h_out_ref[i] = jax.lax.dot_general(
            s_b, h_b, dn_t, preferred_element_type=jnp.float32
        ).astype(h_out_ref.dtype)

        # ---- pooled adjacency: S^T @ A @ S -> (C, C) -------------------------
        sta = jax.lax.dot_general(s_b, adj_b, dn_t,
                                  preferred_element_type=jnp.float32)  # (C, N)
        adj_new = jnp.dot(sta, s, preferred_element_type=jnp.float32)  # (C, C)
        adj_out_ref[i] = adj_new.astype(adj_out_ref.dtype)

        # ---- LinkPredLoss (squared Frobenius norm, no (N,N) diff) ------------
        #   ||A - S S^T||_F^2 = ||A||_F^2 - 2*tr(S^T A S) + ||S^T S||_F^2
        adj_f = adj_b.astype(jnp.float32)        # f32 VPU math (v5e-friendly)
        a_sq = _sum_all(adj_f * adj_f)                                # (1, 1)
        tr = _sum_all(adj_new * eye)                                  # (1, 1)
        sts = jax.lax.dot_general(s_b, s_b, dn_t,
                                  preferred_element_type=jnp.float32)  # (C, C)
        link_sq = a_sq - 2.0 * tr + _sum_all(sts * sts)               # (1, 1)

        # ---- EntropyLoss: sum_n Categorical(probs=S_n).entropy() -------------
        ent = -_sum_all(s * logp)                                     # (1, 1)

        # Lane-dense loss writeback (value broadcast across 128 lanes).
        link_ref[i] = jnp.broadcast_to(link_sq, (1, _LOSS_LANES))
        ent_ref[i] = jnp.broadcast_to(ent, (1, _LOSS_LANES))


# ---------------------------------------------------------------------------
# Wrapper: block-batch selection, pallas_call, scalar loss normalisation.
# ---------------------------------------------------------------------------
def _pick_block_batch(B, N, D, C, budget_bytes=8 * 1024 * 1024, cap=4):
    """Largest divisor of B (<= cap) whose double-buffered blocks fit budget."""
    per_graph = (N * N * 2 + N * D * 2            # bf16 adj + bf16 h
                 + C * D * 4 + C * C * 4          # pooled outputs (f32)
                 + 2 * _LOSS_LANES * 4)           # loss rows (f32)
    best = 1
    for cand in range(1, min(B, cap) + 1):
        if B % cand == 0 and 2 * cand * per_graph <= budget_bytes:
            best = cand
    return best


def diffpool_forward(h, adj, params, *, block_batch=None):
    B, N, D = h.shape
    w0, b0 = params["w0"], params["b0"]
    w1, b1 = params["w1"], params["b1"]
    wp, bp = params["w_pred"], params["b_pred"]
    C = wp.shape[1]

    # bf16 on the HBM side / MXU operands; all accumulation stays f32.
    h_bf = h.astype(jnp.bfloat16)
    adj_bf = adj.astype(jnp.bfloat16)

    Bb = block_batch if block_batch is not None else _pick_block_batch(B, N, D, C)
    assert B % Bb == 0, "block batch must divide the batch size"
    grid = (B // Bb,)

    out_shapes = (
        jax.ShapeDtypeStruct((B, C, D), jnp.float32),            # pooled feats
        jax.ShapeDtypeStruct((B, C, C), jnp.float32),            # pooled adj
        jax.ShapeDtypeStruct((B, 1, _LOSS_LANES), jnp.float32),  # ||A-SS^T||^2
        jax.ShapeDtypeStruct((B, 1, _LOSS_LANES), jnp.float32),  # entropy sum
    )

    grid_spec = pltpu.PrefetchScalarGridSpec(
        num_scalar_prefetch=0,
        grid=grid,
        in_specs=[
            pl.BlockSpec((Bb, N, D), lambda g: (g, 0, 0)),       # h (bf16)
            pl.BlockSpec((Bb, N, N), lambda g: (g, 0, 0)),       # adj (bf16)
            pl.BlockSpec(w0.shape, lambda g: (0, 0)),            # W0
            pl.BlockSpec(b0.shape, lambda g: (0, 0)),            # b0
            pl.BlockSpec(w1.shape, lambda g: (0, 0)),            # W1
            pl.BlockSpec(b1.shape, lambda g: (0, 0)),            # b1
            pl.BlockSpec(wp.shape, lambda g: (0, 0)),            # W_pred
            pl.BlockSpec(bp.shape, lambda g: (0, 0)),            # b_pred
        ],
        out_specs=[
            pl.BlockSpec((Bb, C, D), lambda g: (g, 0, 0)),
            pl.BlockSpec((Bb, C, C), lambda g: (g, 0, 0)),
            pl.BlockSpec((Bb, 1, _LOSS_LANES), lambda g: (g, 0, 0)),
            pl.BlockSpec((Bb, 1, _LOSS_LANES), lambda g: (g, 0, 0)),
        ],
    )

    flops_per_graph = (
        2 * N * N * D + 2 * N * D * C + 2 * N * N * C + 4 * N * C * C  # assign GNN+pred
        + 2 * N * C * D + 2 * C * N * N + 2 * C * N * C                # pooling
        + 2 * N * C * C)                                               # S^T S
    cost = pl.CostEstimate(
        flops=int(B * flops_per_graph),
        transcendentals=int(2 * B * N * C),
        bytes_accessed=int(
            B * (N * N * 2 + N * D * 2 + C * D * 4 + C * C * 4 + 2 * _LOSS_LANES * 4)
            + 4 * (D * C + 2 * C * C + 3 * C)),
    )

    h_new, adj_next, link_sq, ent_sum = pl.pallas_call(
        _diffpool_kernel,
        out_shape=out_shapes,
        grid_spec=grid_spec,
        compiler_params=pltpu.CompilerParams(
            dimension_semantics=("parallel",),   # megacore sharding on v7x
            vmem_limit_bytes=32 * 1024 * 1024,   # fits v5e/v6e/v7x
        ),
        cost_estimate=cost,
    )(h_bf, adj_bf, w0, b0, w1, b1, wp, bp)

    # Final (cheap, scalar) normalisation matching LinkPredLoss / EntropyLoss.
    link_per_graph = jnp.sqrt(jnp.maximum(link_sq[:, 0, 0], 0.0)) / (N * N)
    pooling_loss = {
        "LinkPredLoss": jnp.mean(link_per_graph),
        "EntropyLoss": jnp.mean(ent_sum[:, 0, 0]),
    }
    return h_new, adj_next, pooling_loss


# ---------------------------------------------------------------------------
# Deterministic parameter init (xavier_uniform w/ relu gain for GCN weights,
# zero biases, as in DiffPool.init_weights).
# ---------------------------------------------------------------------------
def _xavier_uniform(key, shape, gain):
    fan_in, fan_out = shape
    bound = gain * jnp.sqrt(6.0 / (fan_in + fan_out))
    return jax.random.uniform(key, shape, jnp.float32, -bound, bound)


def init_params(key, in_dim, assign_dim):
    gain_relu = jnp.sqrt(2.0)
    k0, k1, k2 = jax.random.split(key, 3)
    return {
        "w0": _xavier_uniform(k0, (in_dim, assign_dim), gain_relu),
        "b0": jnp.zeros((1, assign_dim), jnp.float32),
        "w1": _xavier_uniform(k1, (assign_dim, assign_dim), gain_relu),
        "b1": jnp.zeros((1, assign_dim), jnp.float32),
        "w_pred": _xavier_uniform(k2, (assign_dim, assign_dim), 1.0),
        "b_pred": jnp.zeros((1, assign_dim), jnp.float32),
    }


# ---------------------------------------------------------------------------
# Pure-JAX reference (for a sanity check of the kernel).
# ---------------------------------------------------------------------------
def diffpool_reference(h, adj, p):
    x = jnp.einsum("bij,bjd->bid", adj, h) + h
    x = jnp.maximum(x @ p["w0"] + p["b0"], 0.0)
    x = jnp.einsum("bij,bjd->bid", adj, x) + x
    x = x @ p["w1"] + p["b1"]
    logits = x @ p["w_pred"] + p["b_pred"]
    s = jax.nn.softmax(logits, axis=-1)
    st = jnp.swapaxes(s, -1, -2)
    h_new = st @ h
    adj_next = st @ adj @ s
    diff = adj - s @ st
    link = jnp.mean(jnp.sqrt(jnp.sum(diff * diff, axis=(1, 2))) /
                    (adj.shape[1] * adj.shape[2]))
    ent = jnp.mean(jnp.sum(-jnp.sum(s * jnp.log(s + 1e-30), axis=-1), axis=-1))
    return h_new, adj_next, link, ent


if __name__ == "__main__":
    B, N, D = 8, 128, 128        # batch, max_num_nodes, in_dim
    assign_dim = 32              # max_num_nodes * assign_ratio (0.25)

    key = jax.random.PRNGKey(0)
    kh, ka, kp = jax.random.split(key, 3)
    h = jax.random.normal(kh, (B, N, D), jnp.float32)
    a = jax.random.uniform(ka, (B, N, N), jnp.float32)
    adj = 0.5 * (a + jnp.swapaxes(a, -1, -2)) / N     # symmetric, normalised
    params = init_params(kp, D, assign_dim)

    h_new, adj_next, losses = diffpool_forward(h, adj, params)
    jax.block_until_ready((h_new, adj_next, losses))

    # Reference run on the same bf16-quantised inputs the kernel consumes.
    h_q = h.astype(jnp.bfloat16).astype(jnp.float32)
    adj_q = adj.astype(jnp.bfloat16).astype(jnp.float32)
    h_ref, adj_ref, link_ref, ent_ref = diffpool_reference(h_q, adj_q, params)

    assert h_new.shape == (B, assign_dim, D)
    assert adj_next.shape == (B, assign_dim, assign_dim)
    assert jnp.allclose(h_new, h_ref, rtol=5e-2, atol=5e-2)
    assert jnp.allclose(adj_next, adj_ref, rtol=5e-2, atol=5e-3)
    assert jnp.allclose(losses["LinkPredLoss"], link_ref, rtol=5e-2, atol=1e-5)
    assert jnp.allclose(losses["EntropyLoss"], ent_ref, rtol=5e-2, atol=1e-1)
    assert bool(jnp.all(jnp.isfinite(h_new))) and bool(jnp.all(jnp.isfinite(adj_next)))

    print("KERNEL_OK")
</pallas_src>

<mosaic_0001>
module attributes {stable_mosaic.version = 11 : i64} {
  func.func @_diffpool_kernel(%arg0: i32, %arg1: memref<4x128x128xbf16, #tpu.memory_space<vmem>>, %arg2: memref<4x128x128xbf16, #tpu.memory_space<vmem>>, %arg3: memref<128x32xf32, #tpu.memory_space<vmem>>, %arg4: memref<1x32xf32, #tpu.memory_space<vmem>>, %arg5: memref<32x32xf32, #tpu.memory_space<vmem>>, %arg6: memref<1x32xf32, #tpu.memory_space<vmem>>, %arg7: memref<32x32xf32, #tpu.memory_space<vmem>>, %arg8: memref<1x32xf32, #tpu.memory_space<vmem>>, %arg9: memref<4x32x128xf32, #tpu.memory_space<vmem>>, %arg10: memref<4x32x32xf32, #tpu.memory_space<vmem>>, %arg11: memref<4x1x128xf32, #tpu.memory_space<vmem>>, %arg12: memref<4x1x128xf32, #tpu.memory_space<vmem>>) attributes {dimension_semantics = [#tpu.dimension_semantics<parallel>], iteration_bounds = array<i64: 2>, scalar_prefetch = 0 : i64, scratch_operands = 0 : i64, tpu.core_type = #tpu.core_type<tc>, window_params = [{transform_indices = @transform_0, window_bounds = array<i64: 4, 128, 128>}, {transform_indices = @transform_1, window_bounds = array<i64: 4, 128, 128>}, {pipeline_mode = #tpu.pipeline_mode<synchronous>, transform_indices = @transform_2, window_bounds = array<i64: 128, 32>}, {pipeline_mode = #tpu.pipeline_mode<synchronous>, transform_indices = @transform_3, window_bounds = array<i64: 1, 32>}, {pipeline_mode = #tpu.pipeline_mode<synchronous>, transform_indices = @transform_4, window_bounds = array<i64: 32, 32>}, {pipeline_mode = #tpu.pipeline_mode<synchronous>, transform_indices = @transform_5, window_bounds = array<i64: 1, 32>}, {pipeline_mode = #tpu.pipeline_mode<synchronous>, transform_indices = @transform_6, window_bounds = array<i64: 32, 32>}, {pipeline_mode = #tpu.pipeline_mode<synchronous>, transform_indices = @transform_7, window_bounds = array<i64: 1, 32>}, {transform_indices = @transform_8, window_bounds = array<i64: 4, 32, 128>}, {transform_indices = @transform_9, window_bounds = array<i64: 4, 32, 32>}, {transform_indices = @transform_10, window_bounds = array<i64: 4, 1, 128>}, {transform_indices = @transform_11, window_bounds = array<i64: 4, 1, 128>}]} {
    %c0 = arith.constant 0 : index
    %c0_0 = arith.constant 0 : index
    %0 = vector.load %arg3[%c0, %c0_0] : memref<128x32xf32, #tpu.memory_space<vmem>>, vector<128x32xf32>
    %c0_1 = arith.constant 0 : index
    %c0_2 = arith.constant 0 : index
    %1 = vector.load %arg4[%c0_1, %c0_2] : memref<1x32xf32, #tpu.memory_space<vmem>>, vector<1x32xf32>
    %c0_3 = arith.constant 0 : index
    %c0_4 = arith.constant 0 : index
    %2 = vector.load %arg5[%c0_3, %c0_4] : memref<32x32xf32, #tpu.memory_space<vmem>>, vector<32x32xf32>
    %c0_5 = arith.constant 0 : index
    %c0_6 = arith.constant 0 : index
    %3 = vector.load %arg6[%c0_5, %c0_6] : memref<1x32xf32, #tpu.memory_space<vmem>>, vector<1x32xf32>
    %c0_7 = arith.constant 0 : index
    %c0_8 = arith.constant 0 : index
    %4 = vector.load %arg7[%c0_7, %c0_8] : memref<32x32xf32, #tpu.memory_space<vmem>>, vector<32x32xf32>
    %c0_9 = arith.constant 0 : index
    %c0_10 = arith.constant 0 : index
    %5 = vector.load %arg8[%c0_9, %c0_10] : memref<1x32xf32, #tpu.memory_space<vmem>>, vector<1x32xf32>
    %6 = tpu.iota {dimensions = array<i32: 0>} : vector<32x32xi32>
    %7 = tpu.iota {dimensions = array<i32: 1>} : vector<32x32xi32>
    %8 = arith.cmpi eq, %6, %7 : vector<32x32xi32>
    %9 = arith.extui %8 : vector<32x32xi1> to vector<32x32xi32>
    %10 = arith.sitofp %9 : vector<32x32xi32> to vector<32x32xf32>
    %c0_11 = arith.constant 0 : index
    %c0_12 = arith.constant 0 : index
    %c0_13 = arith.constant 0 : index
    %11 = vector.load %arg1[%c0_11, %c0_12, %c0_13] : memref<4x128x128xbf16, #tpu.memory_space<vmem>>, vector<1x128x128xbf16>
    %12 = vector.shape_cast %11 : vector<1x128x128xbf16> to vector<128x128xbf16>
    %c0_14 = arith.constant 0 : index
    %c0_15 = arith.constant 0 : index
    %c0_16 = arith.constant 0 : index
    %13 = vector.load %arg2[%c0_14, %c0_15, %c0_16] : memref<4x128x128xbf16, #tpu.memory_space<vmem>>, vector<1x128x128xbf16>
    %14 = vector.shape_cast %13 : vector<1x128x128xbf16> to vector<128x128xbf16>
    %15 = arith.extf %12 : vector<128x128xbf16> to vector<128x128xf32>
    %cst = arith.constant dense<0.000000e+00> : vector<128x128xf32>
    %16 = tpu.matmul %14, %12, %cst {dimension_numbers = #tpu.dot_dimension_numbers<[1], [0], [0], [1], [0, 0, 1, 1], [], []>} : vector<128x128xbf16>, vector<128x128xbf16>, vector<128x128xf32> -> vector<128x128xf32>
    %17 = arith.addf %16, %15 : vector<128x128xf32>
    %cst_17 = arith.constant dense<0.000000e+00> : vector<128x32xf32>
    %18 = tpu.matmul %17, %0, %cst_17 {dimension_numbers = #tpu.dot_dimension_numbers<[1], [0], [0], [1], [0, 0, 1, 1], [], []>} : vector<128x128xf32>, vector<128x32xf32>, vector<128x32xf32> -> vector<128x32xf32>
    %19 = vector.broadcast %1 : vector<1x32xf32> to vector<128x32xf32>
    %20 = arith.addf %18, %19 : vector<128x32xf32>
    %cst_18 = arith.constant 0.000000e+00 : f32
    %21 = vector.broadcast %cst_18 : f32 to vector<128x32xf32>
    %22 = arith.maximumf %20, %21 : vector<128x32xf32>
    %23 = arith.truncf %22 : vector<128x32xf32> to vector<128x32xbf16>
    %cst_19 = arith.constant dense<0.000000e+00> : vector<128x32xf32>
    %24 = tpu.matmul %14, %23, %cst_19 {dimension_numbers = #tpu.dot_dimension_numbers<[1], [0], [0], [1], [0, 0, 1, 1], [], []>} : vector<128x128xbf16>, vector<128x32xbf16>, vector<128x32xf32> -> vector<128x32xf32>
    %25 = arith.addf %24, %22 : vector<128x32xf32>
    %cst_20 = arith.constant dense<0.000000e+00> : vector<128x32xf32>
    %26 = tpu.matmul %25, %2, %cst_20 {dimension_numbers = #tpu.dot_dimension_numbers<[1], [0], [0], [1], [0, 0, 1, 1], [], []>} : vector<128x32xf32>, vector<32x32xf32>, vector<128x32xf32> -> vector<128x32xf32>
    %27 = vector.broadcast %3 : vector<1x32xf32> to vector<128x32xf32>
    %28 = arith.addf %26, %27 : vector<128x32xf32>
    %cst_21 = arith.constant dense<0.000000e+00> : vector<128x32xf32>
    %29 = tpu.matmul %28, %4, %cst_21 {dimension_numbers = #tpu.dot_dimension_numbers<[1], [0], [0], [1], [0, 0, 1, 1], [], []>} : vector<128x32xf32>, vector<32x32xf32>, vector<128x32xf32> -> vector<128x32xf32>
    %30 = vector.broadcast %5 : vector<1x32xf32> to vector<128x32xf32>
    %31 = arith.addf %29, %30 : vector<128x32xf32>
    %cst_22 = arith.constant dense<0xFF800000> : vector<128xf32>
    %32 = vector.multi_reduction <maximumf>, %31, %cst_22 [1] : vector<128x32xf32> to vector<128xf32>
    %33 = vector.shape_cast %32 : vector<128xf32> to vector<128x1xf32>
    %34 = vector.broadcast %33 : vector<128x1xf32> to vector<128x32xf32>
    %35 = arith.subf %31, %34 : vector<128x32xf32>
    %36 = math.exp %35 : vector<128x32xf32>
    %cst_23 = arith.constant dense<0.000000e+00> : vector<128xf32>
    %37 = vector.multi_reduction <add>, %36, %cst_23 [1] : vector<128x32xf32> to vector<128xf32>
    %38 = vector.shape_cast %37 : vector<128xf32> to vector<128x1xf32>
    %39 = tpu.reciprocal %38 {approx = true} : vector<128x1xf32> -> vector<128x1xf32>
    %40 = vector.broadcast %39 : vector<128x1xf32> to vector<128x32xf32>
    %41 = arith.mulf %36, %40 : vector<128x32xf32>
    %42 = math.log %38 : vector<128x1xf32>
    %43 = vector.broadcast %42 : vector<128x1xf32> to vector<128x32xf32>
    %44 = arith.subf %35, %43 : vector<128x32xf32>
    %45 = arith.truncf %41 : vector<128x32xf32> to vector<128x32xbf16>
    %cst_24 = arith.constant dense<0.000000e+00> : vector<32x128xf32>
    %46 = tpu.matmul %45, %12, %cst_24 {dimension_numbers = #tpu.dot_dimension_numbers<[0], [0], [1], [1], [0, 1, 1, 1], [], []>} : vector<128x32xbf16>, vector<128x128xbf16>, vector<32x128xf32> -> vector<32x128xf32>
    %c0_25 = arith.constant 0 : index
    %c0_26 = arith.constant 0 : index
    %c0_27 = arith.constant 0 : index
    %47 = vector.load %arg9[%c0_25, %c0_26, %c0_27] : memref<4x32x128xf32, #tpu.memory_space<vmem>>, vector<1x32x128xf32>
    %48 = vector.shape_cast %47 : vector<1x32x128xf32> to vector<32x128xf32>
    %49 = vector.shape_cast %46 : vector<32x128xf32> to vector<1x32x128xf32>
    tpu.vector_store %arg9[%c0_25, %c0_26, %c0_27], %49 {strides = array<i32>} : memref<4x32x128xf32, #tpu.memory_space<vmem>>, vector<1x32x128xf32>,
    %cst_28 = arith.constant dense<0.000000e+00> : vector<32x128xf32>
    %50 = tpu.matmul %45, %14, %cst_28 {dimension_numbers = #tpu.dot_dimension_numbers<[0], [0], [1], [1], [0, 1, 1, 1], [], []>} : vector<128x32xbf16>, vector<128x128xbf16>, vector<32x128xf32> -> vector<32x128xf32>
    %cst_29 = arith.constant dense<0.000000e+00> : vector<32x32xf32>
    %51 = tpu.matmul %50, %41, %cst_29 {dimension_numbers = #tpu.dot_dimension_numbers<[1], [0], [0], [1], [0, 0, 1, 1], [], []>} : vector<32x128xf32>, vector<128x32xf32>, vector<32x32xf32> -> vector<32x32xf32>
    %c0_30 = arith.constant 0 : index
    %c0_31 = arith.constant 0 : index
    %c0_32 = arith.constant 0 : index
    %52 = vector.load %arg10[%c0_30, %c0_31, %c0_32] : memref<4x32x32xf32, #tpu.memory_space<vmem>>, vector<1x32x32xf32>
    %53 = vector.shape_cast %52 : vector<1x32x32xf32> to vector<32x32xf32>
    %54 = vector.shape_cast %51 : vector<32x32xf32> to vector<1x32x32xf32>
    tpu.vector_store %arg10[%c0_30, %c0_31, %c0_32], %54 {strides = array<i32>} : memref<4x32x32xf32, #tpu.memory_space<vmem>>, vector<1x32x32xf32>,
    %55 = arith.extf %14 : vector<128x128xbf16> to vector<128x128xf32>
    %56 = arith.mulf %55, %55 : vector<128x128xf32>
    %cst_33 = arith.constant dense<0.000000e+00> : vector<128xf32>
    %57 = vector.multi_reduction <add>, %56, %cst_33 [1] : vector<128x128xf32> to vector<128xf32>
    %58 = vector.shape_cast %57 : vector<128xf32> to vector<128x1xf32>
    %cst_34 = arith.constant dense<0.000000e+00> : vector<1xf32>
    %59 = vector.multi_reduction <add>, %58, %cst_34 [0] : vector<128x1xf32> to vector<1xf32>
    %60 = vector.shape_cast %59 : vector<1xf32> to vector<1x1xf32>
    %61 = arith.mulf %51, %10 : vector<32x32xf32>
    %cst_35 = arith.constant dense<0.000000e+00> : vector<32xf32>
    %62 = vector.multi_reduction <add>, %61, %cst_35 [1] : vector<32x32xf32> to vector<32xf32>
    %63 = vector.shape_cast %62 : vector<32xf32> to vector<32x1xf32>
    %cst_36 = arith.constant dense<0.000000e+00> : vector<1xf32>
    %64 = vector.multi_reduction <add>, %63, %cst_36 [0] : vector<32x1xf32> to vector<1xf32>
    %65 = vector.shape_cast %64 : vector<1xf32> to vector<1x1xf32>
    %cst_37 = arith.constant dense<0.000000e+00> : vector<32x32xf32>
    %66 = tpu.matmul %45, %45, %cst_37 {dimension_numbers = #tpu.dot_dimension_numbers<[0], [0], [1], [1], [0, 1, 1, 1], [], []>} : vector<128x32xbf16>, vector<128x32xbf16>, vector<32x32xf32> -> vector<32x32xf32>
    %cst_38 = arith.constant 2.000000e+00 : f32
    %67 = vector.broadcast %cst_38 : f32 to vector<1x1xf32>
    %68 = arith.mulf %67, %65 : vector<1x1xf32>
    %69 = arith.subf %60, %68 : vector<1x1xf32>
    %70 = arith.mulf %66, %66 : vector<32x32xf32>
    %cst_39 = arith.constant dense<0.000000e+00> : vector<32xf32>
    %71 = vector.multi_reduction <add>, %70, %cst_39 [1] : vector<32x32xf32> to vector<32xf32>
    %72 = vector.shape_cast %71 : vector<32xf32> to vector<32x1xf32>
    %cst_40 = arith.constant dense<0.000000e+00> : vector<1xf32>
    %73 = vector.multi_reduction <add>, %72, %cst_40 [0] : vector<32x1xf32> to vector<1xf32>
    %74 = vector.shape_cast %73 : vector<1xf32> to vector<1x1xf32>
    %75 = arith.addf %69, %74 : vector<1x1xf32>
    %76 = arith.mulf %41, %44 : vector<128x32xf32>
    %cst_41 = arith.constant dense<0.000000e+00> : vector<128xf32>
    %77 = vector.multi_reduction <add>, %76, %cst_41 [1] : vector<128x32xf32> to vector<128xf32>
    %78 = vector.shape_cast %77 : vector<128xf32> to vector<128x1xf32>
    %cst_42 = arith.constant dense<0.000000e+00> : vector<1xf32>
    %79 = vector.multi_reduction <add>, %78, %cst_42 [0] : vector<128x1xf32> to vector<1xf32>
    %80 = vector.shape_cast %79 : vector<1xf32> to vector<1x1xf32>
    %cst_43 = arith.constant 0.000000e+00 : f32
    %81 = vector.broadcast %cst_43 : f32 to vector<1x1xf32>
    %82 = arith.subf %81, %80 : vector<1x1xf32>
    %83 = vector.shape_cast %75 : vector<1x1xf32> to vector<1x1xf32>
    %84 = vector.broadcast %83 : vector<1x1xf32> to vector<1x128xf32>
    %c0_44 = arith.constant 0 : index
    %c0_45 = arith.constant 0 : index
    %c0_46 = arith.constant 0 : index
    %85 = vector.load %arg11[%c0_44, %c0_45, %c0_46] : memref<4x1x128xf32, #tpu.memory_space<vmem>>, vector<1x1x128xf32>
    %86 = vector.shape_cast %85 : vector<1x1x128xf32> to vector<1x128xf32>
    %87 = vector.shape_cast %84 : vector<1x128xf32> to vector<1x1x128xf32>
    tpu.vector_store %arg11[%c0_44, %c0_45, %c0_46], %87 {strides = array<i32>} : memref<4x1x128xf32, #tpu.memory_space<vmem>>, vector<1x1x128xf32>,
    %88 = vector.shape_cast %82 : vector<1x1xf32> to vector<1x1xf32>
    %89 = vector.broadcast %88 : vector<1x1xf32> to vector<1x128xf32>
    %c0_47 = arith.constant 0 : index
    %c0_48 = arith.constant 0 : index
    %c0_49 = arith.constant 0 : index
    %90 = vector.load %arg12[%c0_47, %c0_48, %c0_49] : memref<4x1x128xf32, #tpu.memory_space<vmem>>, vector<1x1x128xf32>
    %91 = vector.shape_cast %90 : vector<1x1x128xf32> to vector<1x128xf32>
    %92 = vector.shape_cast %89 : vector<1x128xf32> to vector<1x1x128xf32>
    tpu.vector_store %arg12[%c0_47, %c0_48, %c0_49], %92 {strides = array<i32>} : memref<4x1x128xf32, #tpu.memory_space<vmem>>, vector<1x1x128xf32>,
    %c1 = arith.constant 1 : index
    %c0_50 = arith.constant 0 : index
    %c0_51 = arith.constant 0 : index
    %93 = vector.load %arg1[%c1, %c0_50, %c0_51] : memref<4x128x128xbf16, #tpu.memory_space<vmem>>, vector<1x128x128xbf16>
    %94 = vector.shape_cast %93 : vector<1x128x128xbf16> to vector<128x128xbf16>
    %c1_52 = arith.constant 1 : index
    %c0_53 = arith.constant 0 : index
    %c0_54 = arith.constant 0 : index
    %95 = vector.load %arg2[%c1_52, %c0_53, %c0_54] : memref<4x128x128xbf16, #tpu.memory_space<vmem>>, vector<1x128x128xbf16>
    %96 = vector.shape_cast %95 : vector<1x128x128xbf16> to vector<128x128xbf16>
    %97 = arith.extf %94 : vector<128x128xbf16> to vector<128x128xf32>
    %cst_55 = arith.constant dense<0.000000e+00> : vector<128x128xf32>
    %98 = tpu.matmul %96, %94, %cst_55 {dimension_numbers = #tpu.dot_dimension_numbers<[1], [0], [0], [1], [0, 0, 1, 1], [], []>} : vector<128x128xbf16>, vector<128x128xbf16>, vector<128x128xf32> -> vector<128x128xf32>
    %99 = arith.addf %98, %97 : vector<128x128xf32>
    %cst_56 = arith.constant dense<0.000000e+00> : vector<128x32xf32>
    %100 = tpu.matmul %99, %0, %cst_56 {dimension_numbers = #tpu.dot_dimension_numbers<[1], [0], [0], [1], [0, 0, 1, 1], [], []>} : vector<128x128xf32>, vector<128x32xf32>, vector<128x32xf32> -> vector<128x32xf32>
    %101 = vector.broadcast %1 : vector<1x32xf32> to vector<128x32xf32>
    %102 = arith.addf %100, %101 : vector<128x32xf32>
    %cst_57 = arith.constant 0.000000e+00 : f32
    %103 = vector.broadcast %cst_57 : f32 to vector<128x32xf32>
    %104 = arith.maximumf %102, %103 : vector<128x32xf32>
    %105 = arith.truncf %104 : vector<128x32xf32> to vector<128x32xbf16>
    %cst_58 = arith.constant dense<0.000000e+00> : vector<128x32xf32>
    %106 = tpu.matmul %96, %105, %cst_58 {dimension_numbers = #tpu.dot_dimension_numbers<[1], [0], [0], [1], [0, 0, 1, 1], [], []>} : vector<128x128xbf16>, vector<128x32xbf16>, vector<128x32xf32> -> vector<128x32xf32>
    %107 = arith.addf %106, %104 : vector<128x32xf32>
    %cst_59 = arith.constant dense<0.000000e+00> : vector<128x32xf32>
    %108 = tpu.matmul %107, %2, %cst_59 {dimension_numbers = #tpu.dot_dimension_numbers<[1], [0], [0], [1], [0, 0, 1, 1], [], []>} : vector<128x32xf32>, vector<32x32xf32>, vector<128x32xf32> -> vector<128x32xf32>
    %109 = vector.broadcast %3 : vector<1x32xf32> to vector<128x32xf32>
    %110 = arith.addf %108, %109 : vector<128x32xf32>
    %cst_60 = arith.constant dense<0.000000e+00> : vector<128x32xf32>
    %111 = tpu.matmul %110, %4, %cst_60 {dimension_numbers = #tpu.dot_dimension_numbers<[1], [0], [0], [1], [0, 0, 1, 1], [], []>} : vector<128x32xf32>, vector<32x32xf32>, vector<128x32xf32> -> vector<128x32xf32>
    %112 = vector.broadcast %5 : vector<1x32xf32> to vector<128x32xf32>
    %113 = arith.addf %111, %112 : vector<128x32xf32>
    %cst_61 = arith.constant dense<0xFF800000> : vector<128xf32>
    %114 = vector.multi_reduction <maximumf>, %113, %cst_61 [1] : vector<128x32xf32> to vector<128xf32>
    %115 = vector.shape_cast %114 : vector<128xf32> to vector<128x1xf32>
    %116 = vector.broadcast %115 : vector<128x1xf32> to vector<128x32xf32>
    %117 = arith.subf %113, %116 : vector<128x32xf32>
    %118 = math.exp %117 : vector<128x32xf32>
    %cst_62 = arith.constant dense<0.000000e+00> : vector<128xf32>
    %119 = vector.multi_reduction <add>, %118, %cst_62 [1] : vector<128x32xf32> to vector<128xf32>
    %120 = vector.shape_cast %119 : vector<128xf32> to vector<128x1xf32>
    %121 = tpu.reciprocal %120 {approx = true} : vector<128x1xf32> -> vector<128x1xf32>
    %122 = vector.broadcast %121 : vector<128x1xf32> to vector<128x32xf32>
    %123 = arith.mulf %118, %122 : vector<128x32xf32>
    %124 = math.log %120 : vector<128x1xf32>
    %125 = vector.broadcast %124 : vector<128x1xf32> to vector<128x32xf32>
    %126 = arith.subf %117, %125 : vector<128x32xf32>
    %127 = arith.truncf %123 : vector<128x32xf32> to vector<128x32xbf16>
    %cst_63 = arith.constant dense<0.000000e+00> : vector<32x128xf32>
    %128 = tpu.matmul %127, %94, %cst_63 {dimension_numbers = #tpu.dot_dimension_numbers<[0], [0], [1], [1], [0, 1, 1, 1], [], []>} : vector<128x32xbf16>, vector<128x128xbf16>, vector<32x128xf32> -> vector<32x128xf32>
    %c1_64 = arith.constant 1 : index
    %c0_65 = arith.constant 0 : index
    %c0_66 = arith.constant 0 : index
    %129 = vector.load %arg9[%c1_64, %c0_65, %c0_66] : memref<4x32x128xf32, #tpu.memory_space<vmem>>, vector<1x32x128xf32>
    %130 = vector.shape_cast %129 : vector<1x32x128xf32> to vector<32x128xf32>
    %131 = vector.shape_cast %128 : vector<32x128xf32> to vector<1x32x128xf32>
    tpu.vector_store %arg9[%c1_64, %c0_65, %c0_66], %131 {strides = array<i32>} : memref<4x32x128xf32, #tpu.memory_space<vmem>>, vector<1x32x128xf32>,
    %cst_67 = arith.constant dense<0.000000e+00> : vector<32x128xf32>
    %132 = tpu.matmul %127, %96, %cst_67 {dimension_numbers = #tpu.dot_dimension_numbers<[0], [0], [1], [1], [0, 1, 1, 1], [], []>} : vector<128x32xbf16>, vector<128x128xbf16>, vector<32x128xf32> -> vector<32x128xf32>
    %cst_68 = arith.constant dense<0.000000e+00> : vector<32x32xf32>
    %133 = tpu.matmul %132, %123, %cst_68 {dimension_numbers = #tpu.dot_dimension_numbers<[1], [0], [0], [1], [0, 0, 1, 1], [], []>} : vector<32x128xf32>, vector<128x32xf32>, vector<32x32xf32> -> vector<32x32xf32>
    %c1_69 = arith.constant 1 : index
    %c0_70 = arith.constant 0 : index
    %c0_71 = arith.constant 0 : index
    %134 = vector.load %arg10[%c1_69, %c0_70, %c0_71] : memref<4x32x32xf32, #tpu.memory_space<vmem>>, vector<1x32x32xf32>
    %135 = vector.shape_cast %134 : vector<1x32x32xf32> to vector<32x32xf32>
    %136 = vector.shape_cast %133 : vector<32x32xf32> to vector<1x32x32xf32>
    tpu.vector_store %arg10[%c1_69, %c0_70, %c0_71], %136 {strides = array<i32>} : memref<4x32x32xf32, #tpu.memory_space<vmem>>, vector<1x32x32xf32>,
    %137 = arith.extf %96 : vector<128x128xbf16> to vector<128x128xf32>
    %138 = arith.mulf %137, %137 : vector<128x128xf32>
    %cst_72 = arith.constant dense<0.000000e+00> : vector<128xf32>
    %139 = vector.multi_reduction <add>, %138, %cst_72 [1] : vector<128x128xf32> to vector<128xf32>
    %140 = vector.shape_cast %139 : vector<128xf32> to vector<128x1xf32>
    %cst_73 = arith.constant dense<0.000000e+00> : vector<1xf32>
    %141 = vector.multi_reduction <add>, %140, %cst_73 [0] : vector<128x1xf32> to vector<1xf32>
    %142 = vector.shape_cast %141 : vector<1xf32> to vector<1x1xf32>
    %143 = arith.mulf %133, %10 : vector<32x32xf32>
    %cst_74 = arith.constant dense<0.000000e+00> : vector<32xf32>
    %144 = vector.multi_reduction <add>, %143, %cst_74 [1] : vector<32x32xf32> to vector<32xf32>
    %145 = vector.shape_cast %144 : vector<32xf32> to vector<32x1xf32>
    %cst_75 = arith.constant dense<0.000000e+00> : vector<1xf32>
    %146 = vector.multi_reduction <add>, %145, %cst_75 [0] : vector<32x1xf32> to vector<1xf32>
    %147 = vector.shape_cast %146 : vector<1xf32> to vector<1x1xf32>
    %cst_76 = arith.constant dense<0.000000e+00> : vector<32x32xf32>
    %148 = tpu.matmul %127, %127, %cst_76 {dimension_numbers = #tpu.dot_dimension_numbers<[0], [0], [1], [1], [0, 1, 1, 1], [], []>} : vector<128x32xbf16>, vector<128x32xbf16>, vector<32x32xf32> -> vector<32x32xf32>
    %cst_77 = arith.constant 2.000000e+00 : f32
    %149 = vector.broadcast %cst_77 : f32 to vector<1x1xf32>
    %150 = arith.mulf %149, %147 : vector<1x1xf32>
    %151 = arith.subf %142, %150 : vector<1x1xf32>
    %152 = arith.mulf %148, %148 : vector<32x32xf32>
    %cst_78 = arith.constant dense<0.000000e+00> : vector<32xf32>
    %153 = vector.multi_reduction <add>, %152, %cst_78 [1] : vector<32x32xf32> to vector<32xf32>
    %154 = vector.shape_cast %153 : vector<32xf32> to vector<32x1xf32>
    %cst_79 = arith.constant dense<0.000000e+00> : vector<1xf32>
    %155 = vector.multi_reduction <add>, %154, %cst_79 [0] : vector<32x1xf32> to vector<1xf32>
    %156 = vector.shape_cast %155 : vector<1xf32> to vector<1x1xf32>
    %157 = arith.addf %151, %156 : vector<1x1xf32>
    %158 = arith.mulf %123, %126 : vector<128x32xf32>
    %cst_80 = arith.constant dense<0.000000e+00> : vector<128xf32>
    %159 = vector.multi_reduction <add>, %158, %cst_80 [1] : vector<128x32xf32> to vector<128xf32>
    %160 = vector.shape_cast %159 : vector<128xf32> to vector<128x1xf32>
    %cst_81 = arith.constant dense<0.000000e+00> : vector<1xf32>
    %161 = vector.multi_reduction <add>, %160, %cst_81 [0] : vector<128x1xf32> to vector<1xf32>
    %162 = vector.shape_cast %161 : vector<1xf32> to vector<1x1xf32>
    %cst_82 = arith.constant 0.000000e+00 : f32
    %163 = vector.broadcast %cst_82 : f32 to vector<1x1xf32>
    %164 = arith.subf %163, %162 : vector<1x1xf32>
    %165 = vector.shape_cast %157 : vector<1x1xf32> to vector<1x1xf32>
    %166 = vector.broadcast %165 : vector<1x1xf32> to vector<1x128xf32>
    %c1_83 = arith.constant 1 : index
    %c0_84 = arith.constant 0 : index
    %c0_85 = arith.constant 0 : index
    %167 = vector.load %arg11[%c1_83, %c0_84, %c0_85] : memref<4x1x128xf32, #tpu.memory_space<vmem>>, vector<1x1x128xf32>
    %168 = vector.shape_cast %167 : vector<1x1x128xf32> to vector<1x128xf32>
    %169 = vector.shape_cast %166 : vector<1x128xf32> to vector<1x1x128xf32>
    tpu.vector_store %arg11[%c1_83, %c0_84, %c0_85], %169 {strides = array<i32>} : memref<4x1x128xf32, #tpu.memory_space<vmem>>, vector<1x1x128xf32>,
    %170 = vector.shape_cast %164 : vector<1x1xf32> to vector<1x1xf32>
    %171 = vector.broadcast %170 : vector<1x1xf32> to vector<1x128xf32>
    %c1_86 = arith.constant 1 : index
    %c0_87 = arith.constant 0 : index
    %c0_88 = arith.constant 0 : index
    %172 = vector.load %arg12[%c1_86, %c0_87, %c0_88] : memref<4x1x128xf32, #tpu.memory_space<vmem>>, vector<1x1x128xf32>
    %173 = vector.shape_cast %172 : vector<1x1x128xf32> to vector<1x128xf32>
    %174 = vector.shape_cast %171 : vector<1x128xf32> to vector<1x1x128xf32>
    tpu.vector_store %arg12[%c1_86, %c0_87, %c0_88], %174 {strides = array<i32>} : memref<4x1x128xf32, #tpu.memory_space<vmem>>, vector<1x1x128xf32>,
    %c2 = arith.constant 2 : index
    %c0_89 = arith.constant 0 : index
    %c0_90 = arith.constant 0 : index
    %175 = vector.load %arg1[%c2, %c0_89, %c0_90] : memref<4x128x128xbf16, #tpu.memory_space<vmem>>, vector<1x128x128xbf16>
    %176 = vector.shape_cast %175 : vector<1x128x128xbf16> to vector<128x128xbf16>
    %c2_91 = arith.constant 2 : index
    %c0_92 = arith.constant 0 : index
    %c0_93 = arith.constant 0 : index
    %177 = vector.load %arg2[%c2_91, %c0_92, %c0_93] : memref<4x128x128xbf16, #tpu.memory_space<vmem>>, vector<1x128x128xbf16>
    %178 = vector.shape_cast %177 : vector<1x128x128xbf16> to vector<128x128xbf16>
    %179 = arith.extf %176 : vector<128x128xbf16> to vector<128x128xf32>
    %cst_94 = arith.constant dense<0.000000e+00> : vector<128x128xf32>
    %180 = tpu.matmul %178, %176, %cst_94 {dimension_numbers = #tpu.dot_dimension_numbers<[1], [0], [0], [1], [0, 0, 1, 1], [], []>} : vector<128x128xbf16>, vector<128x128xbf16>, vector<128x128xf32> -> vector<128x128xf32>
    %181 = arith.addf %180, %179 : vector<128x128xf32>
    %cst_95 = arith.constant dense<0.000000e+00> : vector<128x32xf32>
    %182 = tpu.matmul %181, %0, %cst_95 {dimension_numbers = #tpu.dot_dimension_numbers<[1], [0], [0], [1], [0, 0, 1, 1], [], []>} : vector<128x128xf32>, vector<128x32xf32>, vector<128x32xf32> -> vector<128x32xf32>
    %183 = vector.broadcast %1 : vector<1x32xf32> to vector<128x32xf32>
    %184 = arith.addf %182, %183 : vector<128x32xf32>
    %cst_96 = arith.constant 0.000000e+00 : f32
    %185 = vector.broadcast %cst_96 : f32 to vector<128x32xf32>
    %186 = arith.maximumf %184, %185 : vector<128x32xf32>
    %187 = arith.truncf %186 : vector<128x32xf32> to vector<128x32xbf16>
    %cst_97 = arith.constant dense<0.000000e+00> : vector<128x32xf32>
    %188 = tpu.matmul %178, %187, %cst_97 {dimension_numbers = #tpu.dot_dimension_numbers<[1], [0], [0], [1], [0, 0, 1, 1], [], []>} : vector<128x128xbf16>, vector<128x32xbf16>, vector<128x32xf32> -> vector<128x32xf32>
    %189 = arith.addf %188, %186 : vector<128x32xf32>
    %cst_98 = arith.constant dense<0.000000e+00> : vector<128x32xf32>
    %190 = tpu.matmul %189, %2, %cst_98 {dimension_numbers = #tpu.dot_dimension_numbers<[1], [0], [0], [1], [0, 0, 1, 1], [], []>} : vector<128x32xf32>, vector<32x32xf32>, vector<128x32xf32> -> vector<128x32xf32>
    %191 = vector.broadcast %3 : vector<1x32xf32> to vector<128x32xf32>
    %192 = arith.addf %190, %191 : vector<128x32xf32>
    %cst_99 = arith.constant dense<0.000000e+00> : vector<128x32xf32>
    %193 = tpu.matmul %192, %4, %cst_99 {dimension_numbers = #tpu.dot_dimension_numbers<[1], [0], [0], [1], [0, 0, 1, 1], [], []>} : vector<128x32xf32>, vector<32x32xf32>, vector<128x32xf32> -> vector<128x32xf32>
    %194 = vector.broadcast %5 : vector<1x32xf32> to vector<128x32xf32>
    %195 = arith.addf %193, %194 : vector<128x32xf32>
    %cst_100 = arith.constant dense<0xFF800000> : vector<128xf32>
    %196 = vector.multi_reduction <maximumf>, %195, %cst_100 [1] : vector<128x32xf32> to vector<128xf32>
    %197 = vector.shape_cast %196 : vector<128xf32> to vector<128x1xf32>
    %198 = vector.broadcast %197 : vector<128x1xf32> to vector<128x32xf32>
    %199 = arith.subf %195, %198 : vector<128x32xf32>
    %200 = math.exp %199 : vector<128x32xf32>
    %cst_101 = arith.constant dense<0.000000e+00> : vector<128xf32>
    %201 = vector.multi_reduction <add>, %200, %cst_101 [1] : vector<128x32xf32> to vector<128xf32>
    %202 = vector.shape_cast %201 : vector<128xf32> to vector<128x1xf32>
    %203 = tpu.reciprocal %202 {approx = true} : vector<128x1xf32> -> vector<128x1xf32>
    %204 = vector.broadcast %203 : vector<128x1xf32> to vector<128x32xf32>
    %205 = arith.mulf %200, %204 : vector<128x32xf32>
    %206 = math.log %202 : vector<128x1xf32>
    %207 = vector.broadcast %206 : vector<128x1xf32> to vector<128x32xf32>
    %208 = arith.subf %199, %207 : vector<128x32xf32>
    %209 = arith.truncf %205 : vector<128x32xf32> to vector<128x32xbf16>
    %cst_102 = arith.constant dense<0.000000e+00> : vector<32x128xf32>
    %210 = tpu.matmul %209, %176, %cst_102 {dimension_numbers = #tpu.dot_dimension_numbers<[0], [0], [1], [1], [0, 1, 1, 1], [], []>} : vector<128x32xbf16>, vector<128x128xbf16>, vector<32x128xf32> -> vector<32x128xf32>
    %c2_103 = arith.constant 2 : index
    %c0_104 = arith.constant 0 : index
    %c0_105 = arith.constant 0 : index
    %211 = vector.load %arg9[%c2_103, %c0_104, %c0_105] : memref<4x32x128xf32, #tpu.memory_space<vmem>>, vector<1x32x128xf32>
    %212 = vector.shape_cast %211 : vector<1x32x128xf32> to vector<32x128xf32>
    %213 = vector.shape_cast %210 : vector<32x128xf32> to vector<1x32x128xf32>
    tpu.vector_store %arg9[%c2_103, %c0_104, %c0_105], %213 {strides = array<i32>} : memref<4x32x128xf32, #tpu.memory_space<vmem>>, vector<1x32x128xf32>,
    %cst_106 = arith.constant dense<0.000000e+00> : vector<32x128xf32>
    %214 = tpu.matmul %209, %178, %cst_106 {dimension_numbers = #tpu.dot_dimension_numbers<[0], [0], [1], [1], [0, 1, 1, 1], [], []>} : vector<128x32xbf16>, vector<128x128xbf16>, vector<32x128xf32> -> vector<32x128xf32>
    %cst_107 = arith.constant dense<0.000000e+00> : vector<32x32xf32>
    %215 = tpu.matmul %214, %205, %cst_107 {dimension_numbers = #tpu.dot_dimension_numbers<[1], [0], [0], [1], [0, 0, 1, 1], [], []>} : vector<32x128xf32>, vector<128x32xf32>, vector<32x32xf32> -> vector<32x32xf32>
    %c2_108 = arith.constant 2 : index
    %c0_109 = arith.constant 0 : index
    %c0_110 = arith.constant 0 : index
    %216 = vector.load %arg10[%c2_108, %c0_109, %c0_110] : memref<4x32x32xf32, #tpu.memory_space<vmem>>, vector<1x32x32xf32>
    %217 = vector.shape_cast %216 : vector<1x32x32xf32> to vector<32x32xf32>
    %218 = vector.shape_cast %215 : vector<32x32xf32> to vector<1x32x32xf32>
    tpu.vector_store %arg10[%c2_108, %c0_109, %c0_110], %218 {strides = array<i32>} : memref<4x32x32xf32, #tpu.memory_space<vmem>>, vector<1x32x32xf32>,
    %219 = arith.extf %178 : vector<128x128xbf16> to vector<128x128xf32>
    %220 = arith.mulf %219, %219 : vector<128x128xf32>
    %cst_111 = arith.constant dense<0.000000e+00> : vector<128xf32>
    %221 = vector.multi_reduction <add>, %220, %cst_111 [1] : vector<128x128xf32> to vector<128xf32>
    %222 = vector.shape_cast %221 : vector<128xf32> to vector<128x1xf32>
    %cst_112 = arith.constant dense<0.000000e+00> : vector<1xf32>
    %223 = vector.multi_reduction <add>, %222, %cst_112 [0] : vector<128x1xf32> to vector<1xf32>
    %224 = vector.shape_cast %223 : vector<1xf32> to vector<1x1xf32>
    %225 = arith.mulf %215, %10 : vector<32x32xf32>
    %cst_113 = arith.constant dense<0.000000e+00> : vector<32xf32>
    %226 = vector.multi_reduction <add>, %225, %cst_113 [1] : vector<32x32xf32> to vector<32xf32>
    %227 = vector.shape_cast %226 : vector<32xf32> to vector<32x1xf32>
    %cst_114 = arith.constant dense<0.000000e+00> : vector<1xf32>
    %228 = vector.multi_reduction <add>, %227, %cst_114 [0] : vector<32x1xf32> to vector<1xf32>
    %229 = vector.shape_cast %228 : vector<1xf32> to vector<1x1xf32>
    %cst_115 = arith.constant dense<0.000000e+00> : vector<32x32xf32>
    %230 = tpu.matmul %209, %209, %cst_115 {dimension_numbers = #tpu.dot_dimension_numbers<[0], [0], [1], [1], [0, 1, 1, 1], [], []>} : vector<128x32xbf16>, vector<128x32xbf16>, vector<32x32xf32> -> vector<32x32xf32>
    %cst_116 = arith.constant 2.000000e+00 : f32
    %231 = vector.broadcast %cst_116 : f32 to vector<1x1xf32>
    %232 = arith.mulf %231, %229 : vector<1x1xf32>
    %233 = arith.subf %224, %232 : vector<1x1xf32>
    %234 = arith.mulf %230, %230 : vector<32x32xf32>
    %cst_117 = arith.constant dense<0.000000e+00> : vector<32xf32>
    %235 = vector.multi_reduction <add>, %234, %cst_117 [1] : vector<32x32xf32> to vector<32xf32>
    %236 = vector.shape_cast %235 : vector<32xf32> to vector<32x1xf32>
    %cst_118 = arith.constant dense<0.000000e+00> : vector<1xf32>
    %237 = vector.multi_reduction <add>, %236, %cst_118 [0] : vector<32x1xf32> to vector<1xf32>
    %238 = vector.shape_cast %237 : vector<1xf32> to vector<1x1xf32>
    %239 = arith.addf %233, %238 : vector<1x1xf32>
    %240 = arith.mulf %205, %208 : vector<128x32xf32>
    %cst_119 = arith.constant dense<0.000000e+00> : vector<128xf32>
    %241 = vector.multi_reduction <add>, %240, %cst_119 [1] : vector<128x32xf32> to vector<128xf32>
    %242 = vector.shape_cast %241 : vector<128xf32> to vector<128x1xf32>
    %cst_120 = arith.constant dense<0.000000e+00> : vector<1xf32>
    %243 = vector.multi_reduction <add>, %242, %cst_120 [0] : vector<128x1xf32> to vector<1xf32>
    %244 = vector.shape_cast %243 : vector<1xf32> to vector<1x1xf32>
    %cst_121 = arith.constant 0.000000e+00 : f32
    %245 = vector.broadcast %cst_121 : f32 to vector<1x1xf32>
    %246 = arith.subf %245, %244 : vector<1x1xf32>
    %247 = vector.shape_cast %239 : vector<1x1xf32> to vector<1x1xf32>
    %248 = vector.broadcast %247 : vector<1x1xf32> to vector<1x128xf32>
    %c2_122 = arith.constant 2 : index
    %c0_123 = arith.constant 0 : index
    %c0_124 = arith.constant 0 : index
    %249 = vector.load %arg11[%c2_122, %c0_123, %c0_124] : memref<4x1x128xf32, #tpu.memory_space<vmem>>, vector<1x1x128xf32>
    %250 = vector.shape_cast %249 : vector<1x1x128xf32> to vector<1x128xf32>
    %251 = vector.shape_cast %248 : vector<1x128xf32> to vector<1x1x128xf32>
    tpu.vector_store %arg11[%c2_122, %c0_123, %c0_124], %251 {strides = array<i32>} : memref<4x1x128xf32, #tpu.memory_space<vmem>>, vector<1x1x128xf32>,
    %252 = vector.shape_cast %246 : vector<1x1xf32> to vector<1x1xf32>
    %253 = vector.broadcast %252 : vector<1x1xf32> to vector<1x128xf32>
    %c2_125 = arith.constant 2 : index
    %c0_126 = arith.constant 0 : index
    %c0_127 = arith.constant 0 : index
    %254 = vector.load %arg12[%c2_125, %c0_126, %c0_127] : memref<4x1x128xf32, #tpu.memory_space<vmem>>, vector<1x1x128xf32>
    %255 = vector.shape_cast %254 : vector<1x1x128xf32> to vector<1x128xf32>
    %256 = vector.shape_cast %253 : vector<1x128xf32> to vector<1x1x128xf32>
    tpu.vector_store %arg12[%c2_125, %c0_126, %c0_127], %256 {strides = array<i32>} : memref<4x1x128xf32, #tpu.memory_space<vmem>>, vector<1x1x128xf32>,
    %c3 = arith.constant 3 : index
    %c0_128 = arith.constant 0 : index
    %c0_129 = arith.constant 0 : index
    %257 = vector.load %arg1[%c3, %c0_128, %c0_129] : memref<4x128x128xbf16, #tpu.memory_space<vmem>>, vector<1x128x128xbf16>
    %258 = vector.shape_cast %257 : vector<1x128x128xbf16> to vector<128x128xbf16>
    %c3_130 = arith.constant 3 : index
    %c0_131 = arith.constant 0 : index
    %c0_132 = arith.constant 0 : index
    %259 = vector.load %arg2[%c3_130, %c0_131, %c0_132] : memref<4x128x128xbf16, #tpu.memory_space<vmem>>, vector<1x128x128xbf16>
    %260 = vector.shape_cast %259 : vector<1x128x128xbf16> to vector<128x128xbf16>
    %261 = arith.extf %258 : vector<128x128xbf16> to vector<128x128xf32>
    %cst_133 = arith.constant dense<0.000000e+00> : vector<128x128xf32>
    %262 = tpu.matmul %260, %258, %cst_133 {dimension_numbers = #tpu.dot_dimension_numbers<[1], [0], [0], [1], [0, 0, 1, 1], [], []>} : vector<128x128xbf16>, vector<128x128xbf16>, vector<128x128xf32> -> vector<128x128xf32>
    %263 = arith.addf %262, %261 : vector<128x128xf32>
    %cst_134 = arith.constant dense<0.000000e+00> : vector<128x32xf32>
    %264 = tpu.matmul %263, %0, %cst_134 {dimension_numbers = #tpu.dot_dimension_numbers<[1], [0], [0], [1], [0, 0, 1, 1], [], []>} : vector<128x128xf32>, vector<128x32xf32>, vector<128x32xf32> -> vector<128x32xf32>
    %265 = vector.broadcast %1 : vector<1x32xf32> to vector<128x32xf32>
    %266 = arith.addf %264, %265 : vector<128x32xf32>
    %cst_135 = arith.constant 0.000000e+00 : f32
    %267 = vector.broadcast %cst_135 : f32 to vector<128x32xf32>
    %268 = arith.maximumf %266, %267 : vector<128x32xf32>
    %269 = arith.truncf %268 : vector<128x32xf32> to vector<128x32xbf16>
    %cst_136 = arith.constant dense<0.000000e+00> : vector<128x32xf32>
    %270 = tpu.matmul %260, %269, %cst_136 {dimension_numbers = #tpu.dot_dimension_numbers<[1], [0], [0], [1], [0, 0, 1, 1], [], []>} : vector<128x128xbf16>, vector<128x32xbf16>, vector<128x32xf32> -> vector<128x32xf32>
    %271 = arith.addf %270, %268 : vector<128x32xf32>
    %cst_137 = arith.constant dense<0.000000e+00> : vector<128x32xf32>
    %272 = tpu.matmul %271, %2, %cst_137 {dimension_numbers = #tpu.dot_dimension_numbers<[1], [0], [0], [1], [0, 0, 1, 1], [], []>} : vector<128x32xf32>, vector<32x32xf32>, vector<128x32xf32> -> vector<128x32xf32>
    %273 = vector.broadcast %3 : vector<1x32xf32> to vector<128x32xf32>
    %274 = arith.addf %272, %273 : vector<128x32xf32>
    %cst_138 = arith.constant dense<0.000000e+00> : vector<128x32xf32>
    %275 = tpu.matmul %274, %4, %cst_138 {dimension_numbers = #tpu.dot_dimension_numbers<[1], [0], [0], [1], [0, 0, 1, 1], [], []>} : vector<128x32xf32>, vector<32x32xf32>, vector<128x32xf32> -> vector<128x32xf32>
    %276 = vector.broadcast %5 : vector<1x32xf32> to vector<128x32xf32>
    %277 = arith.addf %275, %276 : vector<128x32xf32>
    %cst_139 = arith.constant dense<0xFF800000> : vector<128xf32>
    %278 = vector.multi_reduction <maximumf>, %277, %cst_139 [1] : vector<128x32xf32> to vector<128xf32>
    %279 = vector.shape_cast %278 : vector<128xf32> to vector<128x1xf32>
    %280 = vector.broadcast %279 : vector<128x1xf32> to vector<128x32xf32>
    %281 = arith.subf %277, %280 : vector<128x32xf32>
    %282 = math.exp %281 : vector<128x32xf32>
    %cst_140 = arith.constant dense<0.000000e+00> : vector<128xf32>
    %283 = vector.multi_reduction <add>, %282, %cst_140 [1] : vector<128x32xf32> to vector<128xf32>
    %284 = vector.shape_cast %283 : vector<128xf32> to vector<128x1xf32>
    %285 = tpu.reciprocal %284 {approx = true} : vector<128x1xf32> -> vector<128x1xf32>
    %286 = vector.broadcast %285 : vector<128x1xf32> to vector<128x32xf32>
    %287 = arith.mulf %282, %286 : vector<128x32xf32>
    %288 = math.log %284 : vector<128x1xf32>
    %289 = vector.broadcast %288 : vector<128x1xf32> to vector<128x32xf32>
    %290 = arith.subf %281, %289 : vector<128x32xf32>
    %291 = arith.truncf %287 : vector<128x32xf32> to vector<128x32xbf16>
    %cst_141 = arith.constant dense<0.000000e+00> : vector<32x128xf32>
    %292 = tpu.matmul %291, %258, %cst_141 {dimension_numbers = #tpu.dot_dimension_numbers<[0], [0], [1], [1], [0, 1, 1, 1], [], []>} : vector<128x32xbf16>, vector<128x128xbf16>, vector<32x128xf32> -> vector<32x128xf32>
    %c3_142 = arith.constant 3 : index
    %c0_143 = arith.constant 0 : index
    %c0_144 = arith.constant 0 : index
    %293 = vector.load %arg9[%c3_142, %c0_143, %c0_144] : memref<4x32x128xf32, #tpu.memory_space<vmem>>, vector<1x32x128xf32>
    %294 = vector.shape_cast %293 : vector<1x32x128xf32> to vector<32x128xf32>
    %295 = vector.shape_cast %292 : vector<32x128xf32> to vector<1x32x128xf32>
    tpu.vector_store %arg9[%c3_142, %c0_143, %c0_144], %295 {strides = array<i32>} : memref<4x32x128xf32, #tpu.memory_space<vmem>>, vector<1x32x128xf32>,
    %cst_145 = arith.constant dense<0.000000e+00> : vector<32x128xf32>
    %296 = tpu.matmul %291, %260, %cst_145 {dimension_numbers = #tpu.dot_dimension_numbers<[0], [0], [1], [1], [0, 1, 1, 1], [], []>} : vector<128x32xbf16>, vector<128x128xbf16>, vector<32x128xf32> -> vector<32x128xf32>
    %cst_146 = arith.constant dense<0.000000e+00> : vector<32x32xf32>
    %297 = tpu.matmul %296, %287, %cst_146 {dimension_numbers = #tpu.dot_dimension_numbers<[1], [0], [0], [1], [0, 0, 1, 1], [], []>} : vector<32x128xf32>, vector<128x32xf32>, vector<32x32xf32> -> vector<32x32xf32>
    %c3_147 = arith.constant 3 : index
    %c0_148 = arith.constant 0 : index
    %c0_149 = arith.constant 0 : index
    %298 = vector.load %arg10[%c3_147, %c0_148, %c0_149] : memref<4x32x32xf32, #tpu.memory_space<vmem>>, vector<1x32x32xf32>
    %299 = vector.shape_cast %298 : vector<1x32x32xf32> to vector<32x32xf32>
    %300 = vector.shape_cast %297 : vector<32x32xf32> to vector<1x32x32xf32>
    tpu.vector_store %arg10[%c3_147, %c0_148, %c0_149], %300 {strides = array<i32>} : memref<4x32x32xf32, #tpu.memory_space<vmem>>, vector<1x32x32xf32>,
    %301 = arith.extf %260 : vector<128x128xbf16> to vector<128x128xf32>
    %302 = arith.mulf %301, %301 : vector<128x128xf32>
    %cst_150 = arith.constant dense<0.000000e+00> : vector<128xf32>
    %303 = vector.multi_reduction <add>, %302, %cst_150 [1] : vector<128x128xf32> to vector<128xf32>
    %304 = vector.shape_cast %303 : vector<128xf32> to vector<128x1xf32>
    %cst_151 = arith.constant dense<0.000000e+00> : vector<1xf32>
    %305 = vector.multi_reduction <add>, %304, %cst_151 [0] : vector<128x1xf32> to vector<1xf32>
    %306 = vector.shape_cast %305 : vector<1xf32> to vector<1x1xf32>
    %307 = arith.mulf %297, %10 : vector<32x32xf32>
    %cst_152 = arith.constant dense<0.000000e+00> : vector<32xf32>
    %308 = vector.multi_reduction <add>, %307, %cst_152 [1] : vector<32x32xf32> to vector<32xf32>
    %309 = vector.shape_cast %308 : vector<32xf32> to vector<32x1xf32>
    %cst_153 = arith.constant dense<0.000000e+00> : vector<1xf32>
    %310 = vector.multi_reduction <add>, %309, %cst_153 [0] : vector<32x1xf32> to vector<1xf32>
    %311 = vector.shape_cast %310 : vector<1xf32> to vector<1x1xf32>
    %cst_154 = arith.constant dense<0.000000e+00> : vector<32x32xf32>
    %312 = tpu.matmul %291, %291, %cst_154 {dimension_numbers = #tpu.dot_dimension_numbers<[0], [0], [1], [1], [0, 1, 1, 1], [], []>} : vector<128x32xbf16>, vector<128x32xbf16>, vector<32x32xf32> -> vector<32x32xf32>
    %cst_155 = arith.constant 2.000000e+00 : f32
    %313 = vector.broadcast %cst_155 : f32 to vector<1x1xf32>
    %314 = arith.mulf %313, %311 : vector<1x1xf32>
    %315 = arith.subf %306, %314 : vector<1x1xf32>
    %316 = arith.mulf %312, %312 : vector<32x32xf32>
    %cst_156 = arith.constant dense<0.000000e+00> : vector<32xf32>
    %317 = vector.multi_reduction <add>, %316, %cst_156 [1] : vector<32x32xf32> to vector<32xf32>
    %318 = vector.shape_cast %317 : vector<32xf32> to vector<32x1xf32>
    %cst_157 = arith.constant dense<0.000000e+00> : vector<1xf32>
    %319 = vector.multi_reduction <add>, %318, %cst_157 [0] : vector<32x1xf32> to vector<1xf32>
    %320 = vector.shape_cast %319 : vector<1xf32> to vector<1x1xf32>
    %321 = arith.addf %315, %320 : vector<1x1xf32>
    %322 = arith.mulf %287, %290 : vector<128x32xf32>
    %cst_158 = arith.constant dense<0.000000e+00> : vector<128xf32>
    %323 = vector.multi_reduction <add>, %322, %cst_158 [1] : vector<128x32xf32> to vector<128xf32>
    %324 = vector.shape_cast %323 : vector<128xf32> to vector<128x1xf32>
    %cst_159 = arith.constant dense<0.000000e+00> : vector<1xf32>
    %325 = vector.multi_reduction <add>, %324, %cst_159 [0] : vector<128x1xf32> to vector<1xf32>
    %326 = vector.shape_cast %325 : vector<1xf32> to vector<1x1xf32>
    %cst_160 = arith.constant 0.000000e+00 : f32
    %327 = vector.broadcast %cst_160 : f32 to vector<1x1xf32>
    %328 = arith.subf %327, %326 : vector<1x1xf32>
    %329 = vector.shape_cast %321 : vector<1x1xf32> to vector<1x1xf32>
    %330 = vector.broadcast %329 : vector<1x1xf32> to vector<1x128xf32>
    %c3_161 = arith.constant 3 : index
    %c0_162 = arith.constant 0 : index
    %c0_163 = arith.constant 0 : index
    %331 = vector.load %arg11[%c3_161, %c0_162, %c0_163] : memref<4x1x128xf32, #tpu.memory_space<vmem>>, vector<1x1x128xf32>
    %332 = vector.shape_cast %331 : vector<1x1x128xf32> to vector<1x128xf32>
    %333 = vector.shape_cast %330 : vector<1x128xf32> to vector<1x1x128xf32>
    tpu.vector_store %arg11[%c3_161, %c0_162, %c0_163], %333 {strides = array<i32>} : memref<4x1x128xf32, #tpu.memory_space<vmem>>, vector<1x1x128xf32>,
    %334 = vector.shape_cast %328 : vector<1x1xf32> to vector<1x1xf32>
    %335 = vector.broadcast %334 : vector<1x1xf32> to vector<1x128xf32>
    %c3_164 = arith.constant 3 : index
    %c0_165 = arith.constant 0 : index
    %c0_166 = arith.constant 0 : index
    %336 = vector.load %arg12[%c3_164, %c0_165, %c0_166] : memref<4x1x128xf32, #tpu.memory_space<vmem>>, vector<1x1x128xf32>
    %337 = vector.shape_cast %336 : vector<1x1x128xf32> to vector<1x128xf32>
    %338 = vector.shape_cast %335 : vector<1x128xf32> to vector<1x1x128xf32>
    tpu.vector_store %arg12[%c3_164, %c0_165, %c0_166], %338 {strides = array<i32>} : memref<4x1x128xf32, #tpu.memory_space<vmem>>, vector<1x1x128xf32>,
    return
  }
  func.func @transform_0(%arg0: i32) -> (i32, i32, i32) {
    %c0_i32 = arith.constant 0 : i32
    %c0_i32_0 = arith.constant 0 : i32
    %c0_i32_1 = arith.constant 0 : i32
    return %arg0, %c0_i32, %c0_i32_0 : i32, i32, i32
  }
  func.func @transform_1(%arg0: i32) -> (i32, i32, i32) {
    %c0_i32 = arith.constant 0 : i32
    %c0_i32_0 = arith.constant 0 : i32
    %c0_i32_1 = arith.constant 0 : i32
    return %arg0, %c0_i32, %c0_i32_0 : i32, i32, i32
  }
  func.func @transform_2(%arg0: i32) -> (i32, i32) {
    %c0_i32 = arith.constant 0 : i32
    %c0_i32_0 = arith.constant 0 : i32
    %c0_i32_1 = arith.constant 0 : i32
    return %c0_i32, %c0_i32_0 : i32, i32
  }
  func.func @transform_3(%arg0: i32) -> (i32, i32) {
    %c0_i32 = arith.constant 0 : i32
    %c0_i32_0 = arith.constant 0 : i32
    %c0_i32_1 = arith.constant 0 : i32
    return %c0_i32, %c0_i32_0 : i32, i32
  }
  func.func @transform_4(%arg0: i32) -> (i32, i32) {
    %c0_i32 = arith.constant 0 : i32
    %c0_i32_0 = arith.constant 0 : i32
    %c0_i32_1 = arith.constant 0 : i32
    return %c0_i32, %c0_i32_0 : i32, i32
  }
  func.func @transform_5(%arg0: i32) -> (i32, i32) {
    %c0_i32 = arith.constant 0 : i32
    %c0_i32_0 = arith.constant 0 : i32
    %c0_i32_1 = arith.constant 0 : i32
    return %c0_i32, %c0_i32_0 : i32, i32
  }
  func.func @transform_6(%arg0: i32) -> (i32, i32) {
    %c0_i32 = arith.constant 0 : i32
    %c0_i32_0 = arith.constant 0 : i32
    %c0_i32_1 = arith.constant 0 : i32
    return %c0_i32, %c0_i32_0 : i32, i32
  }
  func.func @transform_7(%arg0: i32) -> (i32, i32) {
    %c0_i32 = arith.constant 0 : i32
    %c0_i32_0 = arith.constant 0 : i32
    %c0_i32_1 = arith.constant 0 : i32
    return %c0_i32, %c0_i32_0 : i32, i32
  }
  func.func @transform_8(%arg0: i32) -> (i32, i32, i32) {
    %c0_i32 = arith.constant 0 : i32
    %c0_i32_0 = arith.constant 0 : i32
    %c0_i32_1 = arith.constant 0 : i32
    return %arg0, %c0_i32, %c0_i32_0 : i32, i32, i32
  }
  func.func @transform_9(%arg0: i32) -> (i32, i32, i32) {
    %c0_i32 = arith.constant 0 : i32
    %c0_i32_0 = arith.constant 0 : i32
    %c0_i32_1 = arith.constant 0 : i32
    return %arg0, %c0_i32, %c0_i32_0 : i32, i32, i32
  }
  func.func @transform_10(%arg0: i32) -> (i32, i32, i32) {
    %c0_i32 = arith.constant 0 : i32
    %c0_i32_0 = arith.constant 0 : i32
    %c0_i32_1 = arith.constant 0 : i32
    return %arg0, %c0_i32, %c0_i32_0 : i32, i32, i32
  }
  func.func @transform_11(%arg0: i32) -> (i32, i32, i32) {
    %c0_i32 = arith.constant 0 : i32
    %c0_i32_0 = arith.constant 0 : i32
    %c0_i32_1 = arith.constant 0 : i32
    return %arg0, %c0_i32, %c0_i32_0 : i32, i32, i32
  }
}

</mosaic_0001>

<llo_original>
// kernel: tpu_custom_call.1
$region0: #{tpu_custom_call.1}
  #allocation0 [shape = 'u32[]', space=smem, size = 0x4, offset = 0x4, fixed_abs, tag = 'smem constant byte address 0x4 - core index']
  #allocation1 [shape = 'u32[72,128]{1,0:T(1,128)}', space=vmem, size = 0x9000, scoped, tag = 'internal scratch']
  %s0 = inlined_call_operand.hbm [shape: bf16[8,128,128], index: 0, kind: input, shape index: {}]
  %s1 = inlined_call_operand.hbm [shape: bf16[8,128,128], index: 1, kind: input, shape index: {}]
  %s2 = inlined_call_operand.vmem [shape: f32[128,32], index: 2, kind: input, shape index: {}]
  %s3 = inlined_call_operand.vmem [shape: f32[1,32], index: 3, kind: input, shape index: {}]
  %s4 = inlined_call_operand.vmem [shape: f32[32,32], index: 4, kind: input, shape index: {}]
  %s5 = inlined_call_operand.vmem [shape: f32[1,32], index: 5, kind: input, shape index: {}]
  %s6 = inlined_call_operand.vmem [shape: f32[32,32], index: 6, kind: input, shape index: {}]
  %s7 = inlined_call_operand.vmem [shape: f32[1,32], index: 7, kind: input, shape index: {}]
  %s8 = inlined_call_operand.hbm [shape: f32[8,32,128], index: 8, kind: output, shape index: {0}]
  %s9 = inlined_call_operand.hbm [shape: f32[8,32,32], index: 9, kind: output, shape index: {1}]
  %s10 = inlined_call_operand.hbm [shape: f32[8,1,128], index: 10, kind: output, shape index: {2}]
  %s11 = inlined_call_operand.hbm [shape: f32[8,1,128], index: 11, kind: output, shape index: {3}]
  %12 = xla_tuple %s8, %s9, %s10, %s11
  %s13 = sld [smem:[#allocation0]]
  $region97: #{tpu_custom_call.1} parent=0
    _
  %s15 = ssub.s32 1, %s13
  %s16 = scalar_select 0, %s15, %s13
  $region1: #{tpu_custom_call.1} parent=0
    #allocation2 [shape = 'u8[262144]{0}', space=vmem, size = 0x40000, scoped, tag = 'input window, operand 0']
    #allocation3 [shape = 's32[2]{0}', space=sflag, size = 0x8, scoped, tag = 'scoped memory for tpu_custom_call.1']
    #allocation4 [shape = 's32[2]{0}', space=sflag, size = 0x8, scoped, tag = 'scoped memory for tpu_custom_call.1']
    #allocation5 [shape = 'u8[262144]{0}', space=vmem, size = 0x40000, scoped, tag = 'input window, operand 1']
    #allocation6 [shape = 's32[2]{0}', space=sflag, size = 0x8, scoped, tag = 'scoped memory for tpu_custom_call.1']
    #allocation7 [shape = 'u8[131072]{0}', space=vmem, size = 0x20000, scoped, tag = 'output window, operand 0']
    #allocation8 [shape = 'u8[131072]{0}', space=vmem, size = 0x20000, scoped, tag = 'output window, operand 1']
    #allocation9 [shape = 's32[2]{0}', space=sflag, size = 0x8, scoped, tag = 'scoped memory for tpu_custom_call.1']
    #allocation10 [shape = 'u8[4096]{0}', space=vmem, size = 0x1000, scoped, tag = 'output window, operand 2']
    #allocation11 [shape = 'u8[4096]{0}', space=vmem, size = 0x1000, scoped, tag = 'output window, operand 3']
    #allocation12 [shape = 's32[2]{0}', space=sflag, size = 0x8, scoped, tag = 'scoped memory for tpu_custom_call.1']
    %17 = vsyncpa [#allocation3], 0
    %s18 = scalar_lea.sflag [#allocation3], 1
    %19 = vsyncpa %s18, 0
    %20 = vsyncpa [#allocation6], 0
    %s21 = scalar_lea.sflag [#allocation6], 1
    %22 = vsyncpa %s21, 0
    %23 = vsyncpa [#allocation4], 0
    %s24 = scalar_lea.sflag [#allocation4], 1
    %25 = vsyncpa %s24, 0
    %26 = vsyncpa [#allocation9], 0
    %s27 = scalar_lea.sflag [#allocation9], 1
    %28 = vsyncpa %s27, 0
    %29 = vsyncpa [#allocation12], 0
    %s30 = scalar_lea.sflag [#allocation12], 1
    %31 = vsyncpa %s30, 0
    loop: start=0, step=1, limit=4
    $region2: #{tpu_custom_call.1} parent=1 // loop_pre_header
      _
    $region3: #{tpu_custom_call.1} parent=1 // loop_header
      %s33 = sphi 0, %s37
      %p34 = scmp.ge.s32.totalorder %s33, 4
      %s43 = sphi 0, %s45
      %s46 = sphi 0, %s43
      %s47 = sphi 0, %s46
      %s63 = sphi 0, %s47
      %s69 = sphi 0, %s71
      %s72 = sphi 0, %s69
      %s73 = sphi 0, %s72
      %s89 = sphi 0, %s73
      %s93 = sphi 0, %s93
      %s95 = sphi 0, %s93
      %s96 = sphi 0, %s95
      %s110 = sphi 0, %s96
      %s114 = sphi 0, %s114
      %s116 = sphi 0, %s114
      %s117 = sphi 0, %s116
      %s131 = sphi 0, %s117
      %s135 = sphi 0, %s135
      %s137 = sphi 0, %s135
      %s138 = sphi 0, %s137
      %s152 = sphi 0, %s138
      %s156 = sphi 0, %s156
      %s158 = sphi 0, %s156
      %s159 = sphi 0, %s158
      %s173 = sphi 0, %s159
      %s177 = sphi 0, %s177
      %s179 = sphi 0, %s177
      %s180 = sphi 0, %s179
      %s194 = sphi 0, %s180
      %s198 = sphi 0, %s198
      %s200 = sphi 0, %s198
      %s201 = sphi 0, %s200
      %s215 = sphi 0, %s201
      %s221 = sphi 0, %s223
      %s224 = sphi 0, %s221
      %s225 = sphi 0, %s224
      %s241 = sphi 0, %s225
      %s247 = sphi 0, %s249
      %s250 = sphi 0, %s247
      %s251 = sphi 0, %s250
      %s267 = sphi 0, %s251
      %s273 = sphi 0, %s275
      %s276 = sphi 0, %s273
      %s277 = sphi 0, %s276
      %s293 = sphi 0, %s277
      %s299 = sphi 0, %s301
      %s302 = sphi 0, %s299
      %s303 = sphi 0, %s302
      %s319 = sphi 0, %s303
    $region4: #{tpu_custom_call.1} parent=1 // loop_header_branch
      %36 = sbr.rel (%p34) target = $region8
    $region5: #{tpu_custom_call.1} parent=1 // loop_body
      %s38 = ssub.s32 %s33, 1
      %s39 = ssub.s32 %s33, 2
      %s40 = sadd.s32 %s33, 1
      %s41 = ssub.s32 %s33, %s40
      %p42 = scmp.eq.s32.totalorder %s41, 0
      %s44 = sadd.s32 %s43, 1
      %s45 = scalar_select %p42, %s43, %s44
      %p48 = pneg %p42
      %p49 = scmp.eq.s32.totalorder %s33, 1
      %p50 = por %p48, %p49
      %p51 = scmp.ne.s32.totalorder %s43, %s46
      %p52 = scmp.eq.s32.totalorder %s33, 0
      %p53 = por %p51, %p52
      %p54 = scmp.ne.s32.totalorder %s43, %s46
      %p55 = scmp.eq.s32.totalorder %s38, 1
      %p56 = por %p54, %p55
      %p57 = scmp.ne.s32.totalorder %s46, %s47
      %p58 = scmp.eq.s32.totalorder %s38, 0
      %p59 = por %p57, %p58
      %p60 = scmp.ne.s32.totalorder %s46, %s47
      %p61 = scmp.eq.s32.totalorder %s39, 1
      %p62 = por %p60, %p61
      %p64 = scmp.ne.s32.totalorder %s47, %s63
      %p65 = scmp.eq.s32.totalorder %s39, 0
      %p66 = por %p64, %p65
      %s67 = ssub.s32 %s33, %s40
      %p68 = scmp.eq.s32.totalorder %s67, 0
      %s70 = sadd.s32 %s69, 1
      %s71 = scalar_select %p68, %s69, %s70
      %p74 = pneg %p68
      %p75 = scmp.eq.s32.totalorder %s33, 1
      %p76 = por %p74, %p75
      %p77 = scmp.ne.s32.totalorder %s69, %s72
      %p78 = scmp.eq.s32.totalorder %s33, 0
      %p79 = por %p77, %p78
      %p80 = scmp.ne.s32.totalorder %s69, %s72
      %p81 = scmp.eq.s32.totalorder %s38, 1
      %p82 = por %p80, %p81
      %p83 = scmp.ne.s32.totalorder %s72, %s73
      %p84 = scmp.eq.s32.totalorder %s38, 0
      %p85 = por %p83, %p84
      %p86 = scmp.ne.s32.totalorder %s72, %s73
      %p87 = scmp.eq.s32.totalorder %s39, 1
      %p88 = por %p86, %p87
      %p90 = scmp.ne.s32.totalorder %s73, %s89
      %p91 = scmp.eq.s32.totalorder %s39, 0
      %p92 = por %p90, %p91
      %s94 = sadd.s32 %s93, 1
      %p97 = scmp.eq.s32.totalorder %s33, 1
      %p98 = scmp.ne.s32.totalorder %s93, %s95
      %p99 = scmp.eq.s32.totalorder %s33, 0
      %p100 = por %p98, %p99
      %p101 = scmp.ne.s32.totalorder %s93, %s95
      %p102 = scmp.eq.s32.totalorder %s38, 1
      %p103 = por %p101, %p102
      %p104 = scmp.ne.s32.totalorder %s95, %s96
      %p105 = scmp.eq.s32.totalorder %s38, 0
      %p106 = por %p104, %p105
      %p107 = scmp.ne.s32.totalorder %s95, %s96
      %p108 = scmp.eq.s32.totalorder %s39, 1
      %p109 = por %p107, %p108
      %p111 = scmp.ne.s32.totalorder %s96, %s110
      %p112 = scmp.eq.s32.totalorder %s39, 0
      %p113 = por %p111, %p112
      %s115 = sadd.s32 %s114, 1
      %p118 = scmp.eq.s32.totalorder %s33, 1
      %p119 = scmp.ne.s32.totalorder %s114, %s116
      %p120 = scmp.eq.s32.totalorder %s33, 0
      %p121 = por %p119, %p120
      %p122 = scmp.ne.s32.totalorder %s114, %s116
      %p123 = scmp.eq.s32.totalorder %s38, 1
      %p124 = por %p122, %p123
      %p125 = scmp.ne.s32.totalorder %s116, %s117
      %p126 = scmp.eq.s32.totalorder %s38, 0
      %p127 = por %p125, %p126
      %p128 = scmp.ne.s32.totalorder %s116, %s117
      %p129 = scmp.eq.s32.totalorder %s39, 1
      %p130 = por %p128, %p129
      %p132 = scmp.ne.s32.totalorder %s117, %s131
      %p133 = scmp.eq.s32.totalorder %s39, 0
      %p134 = por %p132, %p133
      %s136 = sadd.s32 %s135, 1
      %p139 = scmp.eq.s32.totalorder %s33, 1
      %p140 = scmp.ne.s32.totalorder %s135, %s137
      %p141 = scmp.eq.s32.totalorder %s33, 0
      %p142 = por %p140, %p141
      %p143 = scmp.ne.s32.totalorder %s135, %s137
      %p144 = scmp.eq.s32.totalorder %s38, 1
      %p145 = por %p143, %p144
      %p146 = scmp.ne.s32.totalorder %s137, %s138
      %p147 = scmp.eq.s32.totalorder %s38, 0
      %p148 = por %p146, %p147
      %p149 = scmp.ne.s32.totalorder %s137, %s138
      %p150 = scmp.eq.s32.totalorder %s39, 1
      %p151 = por %p149, %p150
      %p153 = scmp.ne.s32.totalorder %s138, %s152
      %p154 = scmp.eq.s32.totalorder %s39, 0
      %p155 = por %p153, %p154
      %s157 = sadd.s32 %s156, 1
      %p160 = scmp.eq.s32.totalorder %s33, 1
      %p161 = scmp.ne.s32.totalorder %s156, %s158
      %p162 = scmp.eq.s32.totalorder %s33, 0
      %p163 = por %p161, %p162
      %p164 = scmp.ne.s32.totalorder %s156, %s158
      %p165 = scmp.eq.s32.totalorder %s38, 1
      %p166 = por %p164, %p165
      %p167 = scmp.ne.s32.totalorder %s158, %s159
      %p168 = scmp.eq.s32.totalorder %s38, 0
      %p169 = por %p167, %p168
      %p170 = scmp.ne.s32.totalorder %s158, %s159
      %p171 = scmp.eq.s32.totalorder %s39, 1
      %p172 = por %p170, %p171
      %p174 = scmp.ne.s32.totalorder %s159, %s173
      %p175 = scmp.eq.s32.totalorder %s39, 0
      %p176 = por %p174, %p175
      %s178 = sadd.s32 %s177, 1
      %p181 = scmp.eq.s32.totalorder %s33, 1
      %p182 = scmp.ne.s32.totalorder %s177, %s179
      %p183 = scmp.eq.s32.totalorder %s33, 0
      %p184 = por %p182, %p183
      %p185 = scmp.ne.s32.totalorder %s177, %s179
      %p186 = scmp.eq.s32.totalorder %s38, 1
      %p187 = por %p185, %p186
      %p188 = scmp.ne.s32.totalorder %s179, %s180
      %p189 = scmp.eq.s32.totalorder %s38, 0
      %p190 = por %p188, %p189
      %p191 = scmp.ne.s32.totalorder %s179, %s180
      %p192 = scmp.eq.s32.totalorder %s39, 1
      %p193 = por %p191, %p192
      %p195 = scmp.ne.s32.totalorder %s180, %s194
      %p196 = scmp.eq.s32.totalorder %s39, 0
      %p197 = por %p195, %p196
      %s199 = sadd.s32 %s198, 1
      %p202 = scmp.eq.s32.totalorder %s33, 1
      %p203 = scmp.ne.s32.totalorder %s198, %s200
      %p204 = scmp.eq.s32.totalorder %s33, 0
      %p205 = por %p203, %p204
      %p206 = scmp.ne.s32.totalorder %s198, %s200
      %p207 = scmp.eq.s32.totalorder %s38, 1
      %p208 = por %p206, %p207
      %p209 = scmp.ne.s32.totalorder %s200, %s201
      %p210 = scmp.eq.s32.totalorder %s38, 0
      %p211 = por %p209, %p210
      %p212 = scmp.ne.s32.totalorder %s200, %s201
      %p213 = scmp.eq.s32.totalorder %s39, 1
      %p214 = por %p212, %p213
      %p216 = scmp.ne.s32.totalorder %s201, %s215
      %p217 = scmp.eq.s32.totalorder %s39, 0
      %p218 = por %p216, %p217
      %s219 = ssub.s32 %s33, %s40
      %p220 = scmp.eq.s32.totalorder %s219, 0
      %s222 = sadd.s32 %s221, 1
      %s223 = scalar_select %p220, %s221, %s222
      %p226 = pneg %p220
      %p227 = scmp.eq.s32.totalorder %s33, 1
      %p228 = por %p226, %p227
      %p229 = scmp.ne.s32.totalorder %s221, %s224
      %p230 = scmp.eq.s32.totalorder %s33, 0
      %p231 = por %p229, %p230
      %p232 = scmp.ne.s32.totalorder %s221, %s224
      %p233 = scmp.eq.s32.totalorder %s38, 1
      %p234 = por %p232, %p233
      %p235 = scmp.ne.s32.totalorder %s224, %s225
      %p236 = scmp.eq.s32.totalorder %s38, 0
      %p237 = por %p235, %p236
      %p238 = scmp.ne.s32.totalorder %s224, %s225
      %p239 = scmp.eq.s32.totalorder %s39, 1
      %p240 = por %p238, %p239
      %p242 = scmp.ne.s32.totalorder %s225, %s241
      %p243 = scmp.eq.s32.totalorder %s39, 0
      %p244 = por %p242, %p243
      %s245 = ssub.s32 %s33, %s40
      %p246 = scmp.eq.s32.totalorder %s245, 0
      %s248 = sadd.s32 %s247, 1
      %s249 = scalar_select %p246, %s247, %s248
      %p252 = pneg %p246
      %p253 = scmp.eq.s32.totalorder %s33, 1
      %p254 = por %p252, %p253
      %p255 = scmp.ne.s32.totalorder %s247, %s250
      %p256 = scmp.eq.s32.totalorder %s33, 0
      %p257 = por %p255, %p256
      %p258 = scmp.ne.s32.totalorder %s247, %s250
      %p259 = scmp.eq.s32.totalorder %s38, 1
      %p260 = por %p258, %p259
      %p261 = scmp.ne.s32.totalorder %s250, %s251
      %p262 = scmp.eq.s32.totalorder %s38, 0
      %p263 = por %p261, %p262
      %p264 = scmp.ne.s32.totalorder %s250, %s251
      %p265 = scmp.eq.s32.totalorder %s39, 1
      %p266 = por %p264, %p265
      %p268 = scmp.ne.s32.totalorder %s251, %s267
      %p269 = scmp.eq.s32.totalorder %s39, 0
      %p270 = por %p268, %p269
      %s271 = ssub.s32 %s33, %s40
      %p272 = scmp.eq.s32.totalorder %s271, 0
      %s274 = sadd.s32 %s273, 1
      %s275 = scalar_select %p272, %s273, %s274
      %p278 = pneg %p272
      %p279 = scmp.eq.s32.totalorder %s33, 1
      %p280 = por %p278, %p279
      %p281 = scmp.ne.s32.totalorder %s273, %s276
      %p282 = scmp.eq.s32.totalorder %s33, 0
      %p283 = por %p281, %p282
      %p284 = scmp.ne.s32.totalorder %s273, %s276
      %p285 = scmp.eq.s32.totalorder %s38, 1
      %p286 = por %p284, %p285
      %p287 = scmp.ne.s32.totalorder %s276, %s277
      %p288 = scmp.eq.s32.totalorder %s38, 0
      %p289 = por %p287, %p288
      %p290 = scmp.ne.s32.totalorder %s276, %s277
      %p291 = scmp.eq.s32.totalorder %s39, 1
      %p292 = por %p290, %p291
      %p294 = scmp.ne.s32.totalorder %s277, %s293
      %p295 = scmp.eq.s32.totalorder %s39, 0
      %p296 = por %p294, %p295
      %s297 = ssub.s32 %s33, %s40
      %p298 = scmp.eq.s32.totalorder %s297, 0
      %s300 = sadd.s32 %s299, 1
      %s301 = scalar_select %p298, %s299, %s300
      %p304 = pneg %p298
      %p305 = scmp.eq.s32.totalorder %s33, 1
      %p306 = por %p304, %p305
      %p307 = scmp.ne.s32.totalorder %s299, %s302
      %p308 = scmp.eq.s32.totalorder %s33, 0
      %p309 = por %p307, %p308
      %p310 = scmp.ne.s32.totalorder %s299, %s302
      %p311 = scmp.eq.s32.totalorder %s38, 1
      %p312 = por %p310, %p311
      %p313 = scmp.ne.s32.totalorder %s302, %s303
      %p314 = scmp.eq.s32.totalorder %s38, 0
      %p315 = por %p313, %p314
      %p316 = scmp.ne.s32.totalorder %s302, %s303
      %p317 = scmp.eq.s32.totalorder %s39, 1
      %p318 = por %p316, %p317
      %p320 = scmp.ne.s32.totalorder %s303, %s319
      %p321 = scmp.eq.s32.totalorder %s39, 0
      %p322 = por %p320, %p321
      %p323 = scmp.le.s32.totalorder 1, %s33
      %p324 = scmp.lt.s32.totalorder %s33, 3
      %p325 = pnand %p323, %p324
      %p326 = pneg %p325
      // Predicated region
      $region9: #{tpu_custom_call.1} parent=5 // pred_check
        _
      $region10: #{tpu_custom_call.1} parent=5 // pred_check_branch
        %328 = sbr.rel (%p325) target = $region12
      $region11: #{tpu_custom_call.1} parent=5 // pred_region
        %s329 = ssub.s32 %s33, 1
        // Predicated region
        $region13: #{tpu_custom_call.1} parent=11 // pred_check
          %p330 = pneg %p106
        $region14: #{tpu_custom_call.1} parent=11 // pred_check_branch
          %332 = sbr.rel (%p330) target = $region16
        $region15: #{tpu_custom_call.1} parent=11 // pred_region
          _
        $region16: #{tpu_custom_call.1} parent=11 // pred_fallthru
          _
        // Predicated region
        $region17: #{tpu_custom_call.1} parent=11 // pred_check
          %p333 = pneg %p127
        $region18: #{tpu_custom_call.1} parent=11 // pred_check_branch
          %335 = sbr.rel (%p333) target = $region20
        $region19: #{tpu_custom_call.1} parent=11 // pred_region
          _
        $region20: #{tpu_custom_call.1} parent=11 // pred_fallthru
          _
        // Predicated region
        $region21: #{tpu_custom_call.1} parent=11 // pred_check
          %p336 = pneg %p148
        $region22: #{tpu_custom_call.1} parent=11 // pred_check_branch
          %338 = sbr.rel (%p336) target = $region24
        $region23: #{tpu_custom_call.1} parent=11 // pred_region
          _
        $region24: #{tpu_custom_call.1} parent=11 // pred_fallthru
          _
        // Predicated region
        $region25: #{tpu_custom_call.1} parent=11 // pred_check
          %p339 = pneg %p169
        $region26: #{tpu_custom_call.1} parent=11 // pred_check_branch
          %341 = sbr.rel (%p339) target = $region28
        $region27: #{tpu_custom_call.1} parent=11 // pred_region
          _
        $region28: #{tpu_custom_call.1} parent=11 // pred_fallthru
          _
        // Predicated region
        $region29: #{tpu_custom_call.1} parent=11 // pred_check
          %p342 = pneg %p190
        $region30: #{tpu_custom_call.1} parent=11 // pred_check_branch
          %344 = sbr.rel (%p342) target = $region32
        $region31: #{tpu_custom_call.1} parent=11 // pred_region
          _
        $region32: #{tpu_custom_call.1} parent=11 // pred_fallthru
          _
        // Predicated region
        $region33: #{tpu_custom_call.1} parent=11 // pred_check
          %p345 = pneg %p211
        $region34: #{tpu_custom_call.1} parent=11 // pred_check_branch
          %347 = sbr.rel (%p345) target = $region36
        $region35: #{tpu_custom_call.1} parent=11 // pred_region
          _
        $region36: #{tpu_custom_call.1} parent=11 // pred_fallthru
          _
      $region12: #{tpu_custom_call.1} parent=5 // pred_fallthru
        _
      %p348 = scmp.lt.s32.totalorder %s33, 2
      // Predicated region
      $region37: #{tpu_custom_call.1} parent=5 // pred_check
        %p349 = pneg %p348
      $region38: #{tpu_custom_call.1} parent=5 // pred_check_branch
        %351 = sbr.rel (%p349) target = $region40
      $region39: #{tpu_custom_call.1} parent=5 // pred_region
        // Predicated region
        $region41: #{tpu_custom_call.1} parent=39 // pred_check
          %p352 = pneg %p53
        $region42: #{tpu_custom_call.1} parent=39 // pred_check_branch
          %354 = sbr.rel (%p352) target = $region44
        $region43: #{tpu_custom_call.1} parent=39 // pred_region
          %s355 = sand.u32 %s43, 1
          %s356 = scalar_lea.sflag [#allocation3], %s355
          %s357 = sand.u32 %s43, 1
          %s358 = smul.addr %s357, 256
          %s359 = scalar_lea.vmem [#allocation2], %s358
          %s360 = smul.u32 4, %s33
          %362 = vsyncadd %s356, 0
          %s363 = smul.addr %s360, 16
          %s364 = smul.addr %s363, 4
          %s365 = scalar_lea.hbm %s0, %s364
          %s366 = sshll.u32 %s365, 4
          %s367 = int_to_ptr.hbm [resolvable:$true] %s366
          %s368 = sshll.u32 %s359, 4
          %s369 = int_to_ptr.vmem [resolvable:$true] %s368
          %374 = dma.hbm_to_vmem [thread:$0]  %s367, 4096, %s369, %s356, 64, 64, 4
        $region44: #{tpu_custom_call.1} parent=39 // pred_fallthru
          _
        // Predicated region
        $region45: #{tpu_custom_call.1} parent=39 // pred_check
          %p375 = pneg %p79
        $region46: #{tpu_custom_call.1} parent=39 // pred_check_branch
          %377 = sbr.rel (%p375) target = $region48
        $region47: #{tpu_custom_call.1} parent=39 // pred_region
          %s378 = sand.u32 %s69, 1
          %s379 = scalar_lea.sflag [#allocation6], %s378
          %s380 = sand.u32 %s69, 1
          %s381 = smul.addr %s380, 256
          %s382 = scalar_lea.vmem [#allocation5], %s381
          %s383 = smul.u32 4, %s33
          %385 = vsyncadd %s379, 0
          %s386 = smul.addr %s383, 16
          %s387 = smul.addr %s386, 4
          %s388 = scalar_lea.hbm %s1, %s387
          %s389 = sshll.u32 %s388, 4
          %s390 = int_to_ptr.hbm [resolvable:$true] %s389
          %s391 = sshll.u32 %s382, 4
          %s392 = int_to_ptr.vmem [resolvable:$true] %s391
          %397 = dma.hbm_to_vmem [thread:$0]  %s390, 4096, %s392, %s379, 64, 64, 4
        $region48: #{tpu_custom_call.1} parent=39 // pred_fallthru
          _
      $region40: #{tpu_custom_call.1} parent=5 // pred_fallthru
        _
      %p398 = scmp.le.s32.totalorder 1, %s33
      %p399 = scmp.lt.s32.totalorder %s33, 3
      %p400 = pnand %p398, %p399
      %p401 = pneg %p400
      // Predicated region
      $region49: #{tpu_custom_call.1} parent=5 // pred_check
        _
      $region50: #{tpu_custom_call.1} parent=5 // pred_check_branch
        %403 = sbr.rel (%p400) target = $region52
      $region51: #{tpu_custom_call.1} parent=5 // pred_region
        %s404 = ssub.s32 %s33, 1
        %s405 = sand.u32 %s46, 1
        %s406 = scalar_lea.sflag [#allocation3], %s405
        %s407 = sand.u32 %s46, 1
        %s408 = smul.addr %s407, 256
        %s409 = scalar_lea.vmem [#allocation2], %s408
        // Predicated region
        $region53: #{tpu_custom_call.1} parent=51 // pred_check
          %p410 = pneg %p59
        $region54: #{tpu_custom_call.1} parent=51 // pred_check_branch
          %412 = sbr.rel (%p410) target = $region56
        $region55: #{tpu_custom_call.1} parent=51 // pred_region
          %414 = dma.done %s406, 4096
        $region56: #{tpu_custom_call.1} parent=51 // pred_fallthru
          _
        %s415 = sand.u32 %s72, 1
        %s416 = scalar_lea.sflag [#allocation6], %s415
        %s417 = sand.u32 %s72, 1
        %s418 = smul.addr %s417, 256
        %s419 = scalar_lea.vmem [#allocation5], %s418
        // Predicated region
        $region57: #{tpu_custom_call.1} parent=51 // pred_check
          %p420 = pneg %p85
        $region58: #{tpu_custom_call.1} parent=51 // pred_check_branch
          %422 = sbr.rel (%p420) target = $region60
        $region59: #{tpu_custom_call.1} parent=51 // pred_region
          %424 = dma.done %s416, 4096
        $region60: #{tpu_custom_call.1} parent=51 // pred_fallthru
          _
        %s425 = sand.u32 %s46, 1
        %s426 = scalar_lea.sflag [#allocation3], %s425
        %s427 = sand.u32 %s46, 1
        %s428 = smul.addr %s427, 256
        %s429 = scalar_lea.vmem [#allocation2], %s428
        %p430 = pneg %p59
        %p431 = pneg %p56
        %s432 = sand.u32 %s72, 1
        %s433 = scalar_lea.sflag [#allocation6], %s432
        %s434 = sand.u32 %s72, 1
        %s435 = smul.addr %s434, 256
        %s436 = scalar_lea.vmem [#allocation5], %s435
        %p437 = pneg %p85
        %p438 = pneg %p82
        %p439 = pneg %p106
        %p440 = pneg %p103
        %p441 = pneg %p127
        %p442 = pneg %p124
        %p443 = pneg %p148
        %p444 = pneg %p145
        %p445 = pneg %p169
        %p446 = pneg %p166
        %p447 = pneg %p190
        %p448 = pneg %p187
        %p449 = pneg %p211
        %p450 = pneg %p208
        %p451 = pneg %p237
        %p452 = pneg %p234
        %s453 = sand.u32 %s224, 1
        %s454 = scalar_lea.sflag [#allocation4], %s453
        %s455 = sand.u32 %s224, 1
        %s456 = smul.addr %s455, 128
        %s457 = scalar_lea.vmem [#allocation7], %s456
        %p458 = pneg %p263
        %p459 = pneg %p260
        %s460 = sand.u32 %s38, 1
        %s461 = scalar_lea.sflag [#allocation9], %s460
        %s462 = sand.u32 %s250, 1
        %s463 = smul.addr %s462, 128
        %s464 = scalar_lea.vmem [#allocation8], %s463
        %p465 = pneg %p289
        %p466 = pneg %p286
        %s467 = sand.u32 %s38, 1
        %s468 = scalar_lea.sflag [#allocation9], %s467
        %s469 = sand.u32 %s276, 1
        %s470 = smul.addr %s469, 4
        %s471 = scalar_lea.vmem [#allocation10], %s470
        %p472 = pneg %p315
        %p473 = pneg %p312
        %s474 = sand.u32 %s302, 1
        %s475 = scalar_lea.sflag [#allocation12], %s474
        %s476 = sand.u32 %s302, 1
        %s477 = smul.addr %s476, 4
        %s478 = scalar_lea.vmem [#allocation11], %s477
        %s479 = smul.u32 4, %s38
        %s480 = smul.u32 4, %s38
        %s481 = smul.u32 4, %s38
        %s482 = smul.u32 4, %s38
        %s483 = smul.u32 4, %s38
        %s484 = smul.u32 4, %s38
        %v485 = vld [vmem:[%s2] sm:$0xff]
        %v486 = vld [vmem:[%s2 + $0x8] sm:$0xff]
        %v487 = vld [vmem:[%s2 + $0x10] sm:$0xff]
        %v488 = vld [vmem:[%s2 + $0x18] sm:$0xff]
        %v489 = vld [vmem:[%s2 + $0x20] sm:$0xff]
        %v490 = vld [vmem:[%s2 + $0x28] sm:$0xff]
        %v491 = vld [vmem:[%s2 + $0x30] sm:$0xff]
        %v492 = vld [vmem:[%s2 + $0x38] sm:$0xff]
        %v493 = vld [vmem:[%s2 + $0x40] sm:$0xff]
        %v494 = vld [vmem:[%s2 + $0x48] sm:$0xff]
        %v495 = vld [vmem:[%s2 + $0x50] sm:$0xff]
        %v496 = vld [vmem:[%s2 + $0x58] sm:$0xff]
        %v497 = vld [vmem:[%s2 + $0x60] sm:$0xff]
        %v498 = vld [vmem:[%s2 + $0x68] sm:$0xff]
        %v499 = vld [vmem:[%s2 + $0x70] sm:$0xff]
        %v500 = vld [vmem:[%s2 + $0x78] sm:$0xff]
        %v501 = vld [vmem:[%s3] sm:$0x1]
        %v502 = vld [vmem:[%s4] sm:$0xff]
        %v503 = vld [vmem:[%s4 + $0x8] sm:$0xff]
        %v504 = vld [vmem:[%s4 + $0x10] sm:$0xff]
        %v505 = vld [vmem:[%s4 + $0x18] sm:$0xff]
        %v506 = vld [vmem:[%s5] sm:$0x1]
        %v507 = vld [vmem:[%s6] sm:$0xff]
        %v508 = vld [vmem:[%s6 + $0x8] sm:$0xff]
        %v509 = vld [vmem:[%s6 + $0x10] sm:$0xff]
        %v510 = vld [vmem:[%s6 + $0x18] sm:$0xff]
        %v511 = vld [vmem:[%s7] sm:$0x1]
        %v512 = vlaneseq
        %v513 = vshrl.u32 %v512, 7
        %v514 = vadd.s32 %v513, 8
        %v515 = vadd.s32 %v513, 16
        %v516 = vadd.s32 %v513, 24
        %v517 = vlaneseq
        %v518 = vand.u32 %v517, 127
        %vm519 = vcmp.eq.s32.totalorder %v513, %v518
        %vm520 = vcmp.eq.s32.totalorder %v514, %v518
        %vm521 = vcmp.eq.s32.totalorder %v515, %v518
        %vm522 = vcmp.eq.s32.totalorder %v516, %v518
        %v523 = vsel %vm519, 1, 0
        %v524 = vsel %vm520, 1, 0
        %v525 = vsel %vm521, 1, 0
        %v526 = vsel %vm522, 1, 0
        %v527 = vcvt.s32.f32 %v523
        %v528 = vcvt.s32.f32 %v524
        %v529 = vcvt.s32.f32 %v525
        %v530 = vcvt.s32.f32 %v526
        %v531 = vld [vmem:[%s409] sm:$0xf]
        %v532 = vld [vmem:[%s409 + $0x4] sm:$0xf]
        %v533 = vld [vmem:[%s409 + $0x8] sm:$0xf]
        %v534 = vld [vmem:[%s409 + $0xc] sm:$0xf]
        %v535 = vld [vmem:[%s409 + $0x10] sm:$0xf]
        %v536 = vld [vmem:[%s409 + $0x14] sm:$0xf]
        %v537 = vld [vmem:[%s409 + $0x18] sm:$0xf]
        %v538 = vld [vmem:[%s409 + $0x1c] sm:$0xf]
        %v539 = vld [vmem:[%s409 + $0x20] sm:$0xf]
        %v540 = vld [vmem:[%s409 + $0x24] sm:$0xf]
        %v541 = vld [vmem:[%s409 + $0x28] sm:$0xf]
        %v542 = vld [vmem:[%s409 + $0x2c] sm:$0xf]
        %v543 = vld [vmem:[%s409 + $0x30] sm:$0xf]
        %v544 = vld [vmem:[%s409 + $0x34] sm:$0xf]
        %v545 = vld [vmem:[%s409 + $0x38] sm:$0xf]
        %v546 = vld [vmem:[%s409 + $0x3c] sm:$0xf]
        %v547 = vld [vmem:[%s419] sm:$0xf]
        %v548 = vld [vmem:[%s419 + $0x4] sm:$0xf]
        %v549 = vld [vmem:[%s419 + $0x8] sm:$0xf]
        %v550 = vld [vmem:[%s419 + $0xc] sm:$0xf]
        %v551 = vld [vmem:[%s419 + $0x10] sm:$0xf]
        %v552 = vld [vmem:[%s419 + $0x14] sm:$0xf]
        %v553 = vld [vmem:[%s419 + $0x18] sm:$0xf]
        %v554 = vld [vmem:[%s419 + $0x1c] sm:$0xf]
        %v555 = vld [vmem:[%s419 + $0x20] sm:$0xf]
        %v556 = vld [vmem:[%s419 + $0x24] sm:$0xf]
        %v557 = vld [vmem:[%s419 + $0x28] sm:$0xf]
        %v558 = vld [vmem:[%s419 + $0x2c] sm:$0xf]
        %v559 = vld [vmem:[%s419 + $0x30] sm:$0xf]
        %v560 = vld [vmem:[%s419 + $0x34] sm:$0xf]
        %v561 = vld [vmem:[%s419 + $0x38] sm:$0xf]
        %v562 = vld [vmem:[%s419 + $0x3c] sm:$0xf]
        %v563 = vunpack.c.l.bf16 %v531
        %v564 = vunpack.c.l.bf16 %v532
        %v565 = vunpack.c.l.bf16 %v533
        %v566 = vunpack.c.l.bf16 %v534
        %v567 = vunpack.c.l.bf16 %v535
        %v568 = vunpack.c.l.bf16 %v536
        %v569 = vunpack.c.l.bf16 %v537
        %v570 = vunpack.c.l.bf16 %v538
        %v571 = vunpack.c.l.bf16 %v539
        %v572 = vunpack.c.l.bf16 %v540
        %v573 = vunpack.c.l.bf16 %v541
        %v574 = vunpack.c.l.bf16 %v542
        %v575 = vunpack.c.l.bf16 %v543
        %v576 = vunpack.c.l.bf16 %v544
        %v577 = vunpack.c.l.bf16 %v545
        %v578 = vunpack.c.l.bf16 %v546
        %v595 = vunpack.c.l.b16 %v547
        %v596 = vunpack.c.l.b16 %v548
        %v597 = vunpack.c.l.b16 %v549
        %v598 = vunpack.c.l.b16 %v550
        %v599 = vunpack.c.l.b16 %v551
        %v600 = vunpack.c.l.b16 %v552
        %v601 = vunpack.c.l.b16 %v553
        %v602 = vunpack.c.l.b16 %v554
        %v603 = vunpack.c.l.b16 %v555
        %v604 = vunpack.c.l.b16 %v556
        %v605 = vunpack.c.l.b16 %v557
        %v606 = vunpack.c.l.b16 %v558
        %v607 = vunpack.c.l.b16 %v559
        %v608 = vunpack.c.l.b16 %v560
        %v609 = vunpack.c.l.b16 %v561
        %v610 = vunpack.c.l.b16 %v562
        %v611 = vpack.c.b16 %v596, %v595
        %v612 = vpack.c.b16 %v598, %v597
        %v613 = vpack.c.b16 %v600, %v599
        %v614 = vpack.c.b16 %v602, %v601
        %v615 = vpack.c.b16 %v604, %v603
        %v616 = vpack.c.b16 %v606, %v605
        %v617 = vpack.c.b16 %v608, %v607
        %v618 = vpack.c.b16 %v610, %v609
        %v643 = vunpack.c.l.b16 %v531
        %v644 = vunpack.c.l.b16 %v532
        %v645 = vunpack.c.l.b16 %v533
        %v646 = vunpack.c.l.b16 %v534
        %v647 = vunpack.c.l.b16 %v535
        %v648 = vunpack.c.l.b16 %v536
        %v649 = vunpack.c.l.b16 %v537
        %v650 = vunpack.c.l.b16 %v538
        %v651 = vunpack.c.l.b16 %v539
        %v652 = vunpack.c.l.b16 %v540
        %v653 = vunpack.c.l.b16 %v541
        %v654 = vunpack.c.l.b16 %v542
        %v655 = vunpack.c.l.b16 %v543
        %v656 = vunpack.c.l.b16 %v544
        %v657 = vunpack.c.l.b16 %v545
        %v658 = vunpack.c.l.b16 %v546
        %v659 = vpack.c.b16 %v644, %v643
        %v660 = vpack.c.b16 %v646, %v645
        %v661 = vpack.c.b16 %v648, %v647
        %v662 = vpack.c.b16 %v650, %v649
        %v663 = vpack.c.b16 %v652, %v651
        %v664 = vpack.c.b16 %v654, %v653
        %v665 = vpack.c.b16 %v656, %v655
        %v666 = vpack.c.b16 %v658, %v657
        %675 = vmatpush.bf16.msra.mxu0 %v666
        %676 = vmatpush.bf16.msra.mxu0 %v665
        %677 = vmatpush.bf16.msra.mxu0 %v664
        %678 = vmatpush.bf16.msra.mxu0 %v663
        %679 = vmatpush.bf16.msra.mxu0 %v662
        %680 = vmatpush.bf16.msra.mxu0 %v661
        %681 = vmatpush.bf16.msra.mxu0 %v660
        %682 = vmatpush.bf16.msra.mxu0 %v659
        %683 = vmatmul.bf16.gmra.mxu0 %v611
        %v684 = vpop.f32.mrf.mxu0
        %v685 = vadd.f32 %v563, %v684
        %v686 = vpop.f32.mrf.mxu0
        %v687 = vadd.f32 %v564, %v686
        %688 = vmatmul.bf16.gmra.mxu0 %v612
        %v689 = vpop.f32.mrf.mxu0
        %v690 = vadd.f32 %v565, %v689
        %v691 = vpop.f32.mrf.mxu0
        %v692 = vadd.f32 %v566, %v691
        %693 = vmatmul.bf16.gmra.mxu0 %v613
        %v694 = vpop.f32.mrf.mxu0
        %v695 = vadd.f32 %v567, %v694
        %v696 = vpop.f32.mrf.mxu0
        %v697 = vadd.f32 %v568, %v696
        %698 = vmatmul.bf16.gmra.mxu0 %v614
        %v699 = vpop.f32.mrf.mxu0
        %v700 = vadd.f32 %v569, %v699
        %v701 = vpop.f32.mrf.mxu0
        %v702 = vadd.f32 %v570, %v701
        %703 = vmatmul.bf16.gmra.mxu0 %v615
        %v704 = vpop.f32.mrf.mxu0
        %v705 = vadd.f32 %v571, %v704
        %v706 = vpop.f32.mrf.mxu0
        %v707 = vadd.f32 %v572, %v706
        %708 = vmatmul.bf16.gmra.mxu0 %v616
        %v709 = vpop.f32.mrf.mxu0
        %v710 = vadd.f32 %v573, %v709
        %v711 = vpop.f32.mrf.mxu0
        %v712 = vadd.f32 %v574, %v711
        %713 = vmatmul.bf16.gmra.mxu0 %v617
        %v714 = vpop.f32.mrf.mxu0
        %v715 = vadd.f32 %v575, %v714
        %v716 = vpop.f32.mrf.mxu0
        %v717 = vadd.f32 %v576, %v716
        %718 = vmatmul.bf16.gmra.mxu0 %v618
        %v719 = vpop.f32.mrf.mxu0
        %v720 = vadd.f32 %v577, %v719
        %v721 = vpop.f32.mrf.mxu0
        %v722 = vadd.f32 %v578, %v721
        %723 = vdwg.mxu0
        %v725 = vperm.slane %v501, 0
        %727 = vmatpush.msra.mxu0 %v500
        %728 = vmatpush.msra.mxu0 %v499
        %729 = vmatpush.msra.mxu0 %v498
        %730 = vmatpush.msra.mxu0 %v497
        %731 = vmatpush.msra.mxu0 %v496
        %732 = vmatpush.msra.mxu0 %v495
        %733 = vmatpush.msra.mxu0 %v494
        %734 = vmatpush.msra.mxu0 %v493
        %735 = vmatpush.msra.mxu0 %v492
        %736 = vmatpush.msra.mxu0 %v491
        %737 = vmatpush.msra.mxu0 %v490
        %738 = vmatpush.msra.mxu0 %v489
        %739 = vmatpush.msra.mxu0 %v488
        %740 = vmatpush.msra.mxu0 %v487
        %741 = vmatpush.msra.mxu0 %v486
        %742 = vmatpush.msra.mxu0 %v485
        %743 = vmatmul.f32.gmra.mxu0 %v685
        %v744 = vpop.f32.mrf.mxu0
        %v745 = vadd.f32 %v725, %v744
        %746 = vmatmul.f32.gmra.mxu0 %v687
        %v747 = vpop.f32.mrf.mxu0
        %v748 = vadd.f32 %v725, %v747
        %749 = vmatmul.f32.gmra.mxu0 %v690
        %v750 = vpop.f32.mrf.mxu0
        %v751 = vadd.f32 %v725, %v750
        %752 = vmatmul.f32.gmra.mxu0 %v692
        %v753 = vpop.f32.mrf.mxu0
        %v754 = vadd.f32 %v725, %v753
        %755 = vmatmul.f32.gmra.mxu0 %v695
        %v756 = vpop.f32.mrf.mxu0
        %v757 = vadd.f32 %v725, %v756
        %758 = vmatmul.f32.gmra.mxu0 %v697
        %v759 = vpop.f32.mrf.mxu0
        %v760 = vadd.f32 %v725, %v759
        %761 = vmatmul.f32.gmra.mxu0 %v700
        %v762 = vpop.f32.mrf.mxu0
        %v763 = vadd.f32 %v725, %v762
        %764 = vmatmul.f32.gmra.mxu0 %v702
        %v765 = vpop.f32.mrf.mxu0
        %v766 = vadd.f32 %v725, %v765
        %767 = vmatmul.f32.gmra.mxu0 %v705
        %v768 = vpop.f32.mrf.mxu0
        %v769 = vadd.f32 %v725, %v768
        %770 = vmatmul.f32.gmra.mxu0 %v707
        %v771 = vpop.f32.mrf.mxu0
        %v772 = vadd.f32 %v725, %v771
        %773 = vmatmul.f32.gmra.mxu0 %v710
        %v774 = vpop.f32.mrf.mxu0
        %v775 = vadd.f32 %v725, %v774
        %776 = vmatmul.f32.gmra.mxu0 %v712
        %v777 = vpop.f32.mrf.mxu0
        %v778 = vadd.f32 %v725, %v777
        %779 = vmatmul.f32.gmra.mxu0 %v715
        %v780 = vpop.f32.mrf.mxu0
        %v781 = vadd.f32 %v725, %v780
        %782 = vmatmul.f32.gmra.mxu0 %v717
        %v783 = vpop.f32.mrf.mxu0
        %v784 = vadd.f32 %v725, %v783
        %785 = vmatmul.f32.gmra.mxu0 %v720
        %v786 = vpop.f32.mrf.mxu0
        %v787 = vadd.f32 %v725, %v786
        %788 = vmatmul.f32.gmra.mxu0 %v722
        %v789 = vpop.f32.mrf.mxu0
        %v790 = vadd.f32 %v725, %v789
        %791 = vdwg.mxu0
        %v792 = vmax.f32 %v745, 0.0
        %v793 = vmax.f32 %v748, 0.0
        %v794 = vmax.f32 %v751, 0.0
        %v795 = vmax.f32 %v754, 0.0
        %v796 = vmax.f32 %v757, 0.0
        %v797 = vmax.f32 %v760, 0.0
        %v798 = vmax.f32 %v763, 0.0
        %v799 = vmax.f32 %v766, 0.0
        %v800 = vmax.f32 %v769, 0.0
        %v801 = vmax.f32 %v772, 0.0
        %v802 = vmax.f32 %v775, 0.0
        %v803 = vmax.f32 %v778, 0.0
        %v804 = vmax.f32 %v781, 0.0
        %v805 = vmax.f32 %v784, 0.0
        %v806 = vmax.f32 %v787, 0.0
        %v807 = vmax.f32 %v790, 0.0
        %v808 = vpack.c.bf16 %v793, %v792
        %v809 = vpack.c.bf16 %v795, %v794
        %v810 = vpack.c.bf16 %v797, %v796
        %v811 = vpack.c.bf16 %v799, %v798
        %v812 = vpack.c.bf16 %v801, %v800
        %v813 = vpack.c.bf16 %v803, %v802
        %v814 = vpack.c.bf16 %v805, %v804
        %v815 = vpack.c.bf16 %v807, %v806
        %816 = vmatpush.bf16.msra.mxu0 %v815
        %817 = vmatpush.bf16.msra.mxu0 %v814
        %818 = vmatpush.bf16.msra.mxu0 %v813
        %819 = vmatpush.bf16.msra.mxu0 %v812
        %820 = vmatpush.bf16.msra.mxu0 %v811
        %821 = vmatpush.bf16.msra.mxu0 %v810
        %822 = vmatpush.bf16.msra.mxu0 %v809
        %823 = vmatpush.bf16.msra.mxu0 %v808
        %824 = vmatmul.bf16.gmra.mxu0 %v611
        %v825 = vpop.f32.mrf.mxu0
        %v826 = vadd.f32 %v792, %v825
        %v827 = vpop.f32.mrf.mxu0
        %v828 = vadd.f32 %v793, %v827
        %829 = vmatmul.bf16.gmra.mxu0 %v612
        %v830 = vpop.f32.mrf.mxu0
        %v831 = vadd.f32 %v794, %v830
        %v832 = vpop.f32.mrf.mxu0
        %v833 = vadd.f32 %v795, %v832
        %834 = vmatmul.bf16.gmra.mxu0 %v613
        %v835 = vpop.f32.mrf.mxu0
        %v836 = vadd.f32 %v796, %v835
        %v837 = vpop.f32.mrf.mxu0
        %v838 = vadd.f32 %v797, %v837
        %839 = vmatmul.bf16.gmra.mxu0 %v614
        %v840 = vpop.f32.mrf.mxu0
        %v841 = vadd.f32 %v798, %v840
        %v842 = vpop.f32.mrf.mxu0
        %v843 = vadd.f32 %v799, %v842
        %844 = vmatmul.bf16.gmra.mxu0 %v615
        %v845 = vpop.f32.mrf.mxu0
        %v846 = vadd.f32 %v800, %v845
        %v847 = vpop.f32.mrf.mxu0
        %v848 = vadd.f32 %v801, %v847
        %849 = vmatmul.bf16.gmra.mxu0 %v616
        %v850 = vpop.f32.mrf.mxu0
        %v851 = vadd.f32 %v802, %v850
        %v852 = vpop.f32.mrf.mxu0
        %v853 = vadd.f32 %v803, %v852
        %854 = vmatmul.bf16.gmra.mxu0 %v617
        %v855 = vpop.f32.mrf.mxu0
        %v856 = vadd.f32 %v804, %v855
        %v857 = vpop.f32.mrf.mxu0
        %v858 = vadd.f32 %v805, %v857
        %859 = vmatmul.bf16.gmra.mxu0 %v618
        %v860 = vpop.f32.mrf.mxu0
        %v861 = vadd.f32 %v806, %v860
        %v862 = vpop.f32.mrf.mxu0
        %v863 = vadd.f32 %v807, %v862
        %864 = vdwg.mxu0
        %v866 = vperm.slane %v506, 0
        %vm868 = vcmask 261120
        %v870 = vsel %vm868, %v826, 0
        %v873 = vsel %vm868, %v828, 0
        %v876 = vsel %vm868, %v831, 0
        %v879 = vsel %vm868, %v833, 0
        %v882 = vsel %vm868, %v836, 0
        %v885 = vsel %vm868, %v838, 0
        %v888 = vsel %vm868, %v841, 0
        %v891 = vsel %vm868, %v843, 0
        %v894 = vsel %vm868, %v846, 0
        %v897 = vsel %vm868, %v848, 0
        %v900 = vsel %vm868, %v851, 0
        %v903 = vsel %vm868, %v853, 0
        %v906 = vsel %vm868, %v856, 0
        %v909 = vsel %vm868, %v858, 0
        %v912 = vsel %vm868, %v861, 0
        %v915 = vsel %vm868, %v863, 0
        %917 = vmatpush.msra.mxu0 0.0
        %918 = vmatpush.msra.mxu0 0.0
        %919 = vmatpush.msra.mxu0 0.0
        %920 = vmatpush.msra.mxu0 0.0
        %921 = vmatpush.msra.mxu0 0.0
        %922 = vmatpush.msra.mxu0 0.0
        %923 = vmatpush.msra.mxu0 0.0
        %924 = vmatpush.msra.mxu0 0.0
        %925 = vmatpush.msra.mxu0 0.0
        %926 = vmatpush.msra.mxu0 0.0
        %927 = vmatpush.msra.mxu0 0.0
        %928 = vmatpush.msra.mxu0 0.0
        %929 = vmatpush.msra.mxu0 %v505
        %930 = vmatpush.msra.mxu0 %v504
        %931 = vmatpush.msra.mxu0 %v503
        %932 = vmatpush.msra.mxu0 %v502
        %933 = vmatmul.f32.gmra.mxu0 %v870
        %v934 = vpop.f32.mrf.mxu0
        %v935 = vadd.f32 %v866, %v934
        %936 = vmatmul.f32.gmra.mxu0 %v873
        %v937 = vpop.f32.mrf.mxu0
        %v938 = vadd.f32 %v866, %v937
        %939 = vmatmul.f32.gmra.mxu0 %v876
        %v940 = vpop.f32.mrf.mxu0
        %v941 = vadd.f32 %v866, %v940
        %942 = vmatmul.f32.gmra.mxu0 %v879
        %v943 = vpop.f32.mrf.mxu0
        %v944 = vadd.f32 %v866, %v943
        %945 = vmatmul.f32.gmra.mxu0 %v882
        %v946 = vpop.f32.mrf.mxu0
        %v947 = vadd.f32 %v866, %v946
        %948 = vmatmul.f32.gmra.mxu0 %v885
        %v949 = vpop.f32.mrf.mxu0
        %v950 = vadd.f32 %v866, %v949
        %951 = vmatmul.f32.gmra.mxu0 %v888
        %v952 = vpop.f32.mrf.mxu0
        %v953 = vadd.f32 %v866, %v952
        %954 = vmatmul.f32.gmra.mxu0 %v891
        %v955 = vpop.f32.mrf.mxu0
        %v956 = vadd.f32 %v866, %v955
        %957 = vmatmul.f32.gmra.mxu0 %v894
        %v958 = vpop.f32.mrf.mxu0
        %v959 = vadd.f32 %v866, %v958
        %960 = vmatmul.f32.gmra.mxu0 %v897
        %v961 = vpop.f32.mrf.mxu0
        %v962 = vadd.f32 %v866, %v961
        %963 = vmatmul.f32.gmra.mxu0 %v900
        %v964 = vpop.f32.mrf.mxu0
        %v965 = vadd.f32 %v866, %v964
        %966 = vmatmul.f32.gmra.mxu0 %v903
        %v967 = vpop.f32.mrf.mxu0
        %v968 = vadd.f32 %v866, %v967
        %969 = vmatmul.f32.gmra.mxu0 %v906
        %v970 = vpop.f32.mrf.mxu0
        %v971 = vadd.f32 %v866, %v970
        %972 = vmatmul.f32.gmra.mxu0 %v909
        %v973 = vpop.f32.mrf.mxu0
        %v974 = vadd.f32 %v866, %v973
        %975 = vmatmul.f32.gmra.mxu0 %v912
        %v976 = vpop.f32.mrf.mxu0
        %v977 = vadd.f32 %v866, %v976
        %978 = vmatmul.f32.gmra.mxu0 %v915
        %v979 = vpop.f32.mrf.mxu0
        %v980 = vadd.f32 %v866, %v979
        %981 = vdwg.mxu0
        %v983 = vperm.slane %v511, 0
        %v986 = vsel %vm868, %v935, 0
        %v989 = vsel %vm868, %v938, 0
        %v992 = vsel %vm868, %v941, 0
        %v995 = vsel %vm868, %v944, 0
        %v998 = vsel %vm868, %v947, 0
        %v1001 = vsel %vm868, %v950, 0
        %v1004 = vsel %vm868, %v953, 0
        %v1007 = vsel %vm868, %v956, 0
        %v1010 = vsel %vm868, %v959, 0
        %v1013 = vsel %vm868, %v962, 0
        %v1016 = vsel %vm868, %v965, 0
        %v1019 = vsel %vm868, %v968, 0
        %v1022 = vsel %vm868, %v971, 0
        %v1025 = vsel %vm868, %v974, 0
        %v1028 = vsel %vm868, %v977, 0
        %v1031 = vsel %vm868, %v980, 0
        %1033 = vmatpush.msra.mxu0 0.0
        %1034 = vmatpush.msra.mxu0 0.0
        %1035 = vmatpush.msra.mxu0 0.0
        %1036 = vmatpush.msra.mxu0 0.0
        %1037 = vmatpush.msra.mxu0 0.0
        %1038 = vmatpush.msra.mxu0 0.0
        %1039 = vmatpush.msra.mxu0 0.0
        %1040 = vmatpush.msra.mxu0 0.0
        %1041 = vmatpush.msra.mxu0 0.0
        %1042 = vmatpush.msra.mxu0 0.0
        %1043 = vmatpush.msra.mxu0 0.0
        %1044 = vmatpush.msra.mxu0 0.0
        %1045 = vmatpush.msra.mxu0 %v510
        %1046 = vmatpush.msra.mxu0 %v509
        %1047 = vmatpush.msra.mxu0 %v508
        %1048 = vmatpush.msra.mxu0 %v507
        %1049 = vmatmul.f32.gmra.mxu0 %v986
        %v1050 = vpop.f32.mrf.mxu0
        %v1051 = vadd.f32 %v983, %v1050
        %1052 = vmatmul.f32.gmra.mxu0 %v989
        %v1053 = vpop.f32.mrf.mxu0
        %v1054 = vadd.f32 %v983, %v1053
        %1055 = vmatmul.f32.gmra.mxu0 %v992
        %v1056 = vpop.f32.mrf.mxu0
        %v1057 = vadd.f32 %v983, %v1056
        %1058 = vmatmul.f32.gmra.mxu0 %v995
        %v1059 = vpop.f32.mrf.mxu0
        %v1060 = vadd.f32 %v983, %v1059
        %1061 = vmatmul.f32.gmra.mxu0 %v998
        %v1062 = vpop.f32.mrf.mxu0
        %v1063 = vadd.f32 %v983, %v1062
        %1064 = vmatmul.f32.gmra.mxu0 %v1001
        %v1065 = vpop.f32.mrf.mxu0
        %v1066 = vadd.f32 %v983, %v1065
        %1067 = vmatmul.f32.gmra.mxu0 %v1004
        %v1068 = vpop.f32.mrf.mxu0
        %v1069 = vadd.f32 %v983, %v1068
        %1070 = vmatmul.f32.gmra.mxu0 %v1007
        %v1071 = vpop.f32.mrf.mxu0
        %v1072 = vadd.f32 %v983, %v1071
        %1073 = vmatmul.f32.gmra.mxu0 %v1010
        %v1074 = vpop.f32.mrf.mxu0
        %v1075 = vadd.f32 %v983, %v1074
        %1076 = vmatmul.f32.gmra.mxu0 %v1013
        %v1077 = vpop.f32.mrf.mxu0
        %v1078 = vadd.f32 %v983, %v1077
        %1079 = vmatmul.f32.gmra.mxu0 %v1016
        %v1080 = vpop.f32.mrf.mxu0
        %v1081 = vadd.f32 %v983, %v1080
        %1082 = vmatmul.f32.gmra.mxu0 %v1019
        %v1083 = vpop.f32.mrf.mxu0
        %v1084 = vadd.f32 %v983, %v1083
        %1085 = vmatmul.f32.gmra.mxu0 %v1022
        %v1086 = vpop.f32.mrf.mxu0
        %v1087 = vadd.f32 %v983, %v1086
        %1088 = vmatmul.f32.gmra.mxu0 %v1025
        %v1089 = vpop.f32.mrf.mxu0
        %v1090 = vadd.f32 %v983, %v1089
        %1091 = vmatmul.f32.gmra.mxu0 %v1028
        %v1092 = vpop.f32.mrf.mxu0
        %v1093 = vadd.f32 %v983, %v1092
        %1094 = vmatmul.f32.gmra.mxu0 %v1031
        %v1095 = vpop.f32.mrf.mxu0
        %v1096 = vadd.f32 %v983, %v1095
        %1097 = vdwg.mxu0
        %v1098 = vsel %vm868, %v1051, -inf
        %1099 = vmax.xlane.f32.xlu0 %v1098
        %v1100 = vpop.xlane.xlu0 %1099
        %v1101 = vsel %vm868, %v1054, -inf
        %1102 = vmax.xlane.f32.xlu0 %v1101
        %v1103 = vpop.xlane.xlu0 %1102
        %v1104 = vsel %vm868, %v1057, -inf
        %1105 = vmax.xlane.f32.xlu0 %v1104
        %v1106 = vpop.xlane.xlu0 %1105
        %v1107 = vsel %vm868, %v1060, -inf
        %1108 = vmax.xlane.f32.xlu0 %v1107
        %v1109 = vpop.xlane.xlu0 %1108
        %v1110 = vsel %vm868, %v1063, -inf
        %1111 = vmax.xlane.f32.xlu0 %v1110
        %v1112 = vpop.xlane.xlu0 %1111
        %v1113 = vsel %vm868, %v1066, -inf
        %1114 = vmax.xlane.f32.xlu0 %v1113
        %v1115 = vpop.xlane.xlu0 %1114
        %v1116 = vsel %vm868, %v1069, -inf
        %1117 = vmax.xlane.f32.xlu0 %v1116
        %v1118 = vpop.xlane.xlu0 %1117
        %v1119 = vsel %vm868, %v1072, -inf
        %1120 = vmax.xlane.f32.xlu0 %v1119
        %v1121 = vpop.xlane.xlu0 %1120
        %v1122 = vsel %vm868, %v1075, -inf
        %1123 = vmax.xlane.f32.xlu0 %v1122
        %v1124 = vpop.xlane.xlu0 %1123
        %v1125 = vsel %vm868, %v1078, -inf
        %1126 = vmax.xlane.f32.xlu0 %v1125
        %v1127 = vpop.xlane.xlu0 %1126
        %v1128 = vsel %vm868, %v1081, -inf
        %1129 = vmax.xlane.f32.xlu0 %v1128
        %v1130 = vpop.xlane.xlu0 %1129
        %v1131 = vsel %vm868, %v1084, -inf
        %1132 = vmax.xlane.f32.xlu0 %v1131
        %v1133 = vpop.xlane.xlu0 %1132
        %v1134 = vsel %vm868, %v1087, -inf
        %1135 = vmax.xlane.f32.xlu0 %v1134
        %v1136 = vpop.xlane.xlu0 %1135
        %v1137 = vsel %vm868, %v1090, -inf
        %1138 = vmax.xlane.f32.xlu0 %v1137
        %v1139 = vpop.xlane.xlu0 %1138
        %v1140 = vsel %vm868, %v1093, -inf
        %1141 = vmax.xlane.f32.xlu0 %v1140
        %v1142 = vpop.xlane.xlu0 %1141
        %v1143 = vsel %vm868, %v1096, -inf
        %1144 = vmax.xlane.f32.xlu0 %v1143
        %v1145 = vpop.xlane.xlu0 %1144
        %v1146 = vsub.f32 %v1051, %v1100
        %v1147 = vsub.f32 %v1054, %v1103
        %v1148 = vsub.f32 %v1057, %v1106
        %v1149 = vsub.f32 %v1060, %v1109
        %v1150 = vsub.f32 %v1063, %v1112
        %v1151 = vsub.f32 %v1066, %v1115
        %v1152 = vsub.f32 %v1069, %v1118
        %v1153 = vsub.f32 %v1072, %v1121
        %v1154 = vsub.f32 %v1075, %v1124
        %v1155 = vsub.f32 %v1078, %v1127
        %v1156 = vsub.f32 %v1081, %v1130
        %v1157 = vsub.f32 %v1084, %v1133
        %v1158 = vsub.f32 %v1087, %v1136
        %v1159 = vsub.f32 %v1090, %v1139
        %v1160 = vsub.f32 %v1093, %v1142
        %v1161 = vsub.f32 %v1096, %v1145
        %v1162 = vmul.f32 %v1146, 1.442695
        %v1163 = vpow.pop %v1162
        %v1164 = vmul.f32 %v1147, 1.442695
        %v1165 = vpow.pop %v1164
        %v1166 = vmul.f32 %v1148, 1.442695
        %v1167 = vpow.pop %v1166
        %v1168 = vmul.f32 %v1149, 1.442695
        %v1169 = vpow.pop %v1168
        %v1170 = vmul.f32 %v1150, 1.442695
        %v1171 = vpow.pop %v1170
        %v1172 = vmul.f32 %v1151, 1.442695
        %v1173 = vpow.pop %v1172
        %v1174 = vmul.f32 %v1152, 1.442695
        %v1175 = vpow.pop %v1174
        %v1176 = vmul.f32 %v1153, 1.442695
        %v1177 = vpow.pop %v1176
        %v1178 = vmul.f32 %v1154, 1.442695
        %v1179 = vpow.pop %v1178
        %v1180 = vmul.f32 %v1155, 1.442695
        %v1181 = vpow.pop %v1180
        %v1182 = vmul.f32 %v1156, 1.442695
        %v1183 = vpow.pop %v1182
        %v1184 = vmul.f32 %v1157, 1.442695
        %v1185 = vpow.pop %v1184
        %v1186 = vmul.f32 %v1158, 1.442695
        %v1187 = vpow.pop %v1186
        %v1188 = vmul.f32 %v1159, 1.442695
        %v1189 = vpow.pop %v1188
        %v1190 = vmul.f32 %v1160, 1.442695
        %v1191 = vpow.pop %v1190
        %v1192 = vmul.f32 %v1161, 1.442695
        %v1193 = vpow.pop %v1192
        %v1194 = vsel %vm868, %v1163, 0.0
        %1195 = vadd.xlane.f32.xlu0 %v1194
        %v1196 = vpop.xlane.xlu0 %1195
        %v1197 = vsel %vm868, %v1165, 0.0
        %1198 = vadd.xlane.f32.xlu0 %v1197
        %v1199 = vpop.xlane.xlu0 %1198
        %v1200 = vsel %vm868, %v1167, 0.0
        %1201 = vadd.xlane.f32.xlu0 %v1200
        %v1202 = vpop.xlane.xlu0 %1201
        %v1203 = vsel %vm868, %v1169, 0.0
        %1204 = vadd.xlane.f32.xlu0 %v1203
        %v1205 = vpop.xlane.xlu0 %1204
        %v1206 = vsel %vm868, %v1171, 0.0
        %1207 = vadd.xlane.f32.xlu0 %v1206
        %v1208 = vpop.xlane.xlu0 %1207
        %v1209 = vsel %vm868, %v1173, 0.0
        %1210 = vadd.xlane.f32.xlu0 %v1209
        %v1211 = vpop.xlane.xlu0 %1210
        %v1212 = vsel %vm868, %v1175, 0.0
        %1213 = vadd.xlane.f32.xlu0 %v1212
        %v1214 = vpop.xlane.xlu0 %1213
        %v1215 = vsel %vm868, %v1177, 0.0
        %1216 = vadd.xlane.f32.xlu0 %v1215
        %v1217 = vpop.xlane.xlu0 %1216
        %v1218 = vsel %vm868, %v1179, 0.0
        %1219 = vadd.xlane.f32.xlu0 %v1218
        %v1220 = vpop.xlane.xlu0 %1219
        %v1221 = vsel %vm868, %v1181, 0.0
        %1222 = vadd.xlane.f32.xlu0 %v1221
        %v1223 = vpop.xlane.xlu0 %1222
        %v1224 = vsel %vm868, %v1183, 0.0
        %1225 = vadd.xlane.f32.xlu0 %v1224
        %v1226 = vpop.xlane.xlu0 %1225
        %v1227 = vsel %vm868, %v1185, 0.0
        %1228 = vadd.xlane.f32.xlu0 %v1227
        %v1229 = vpop.xlane.xlu0 %1228
        %v1230 = vsel %vm868, %v1187, 0.0
        %1231 = vadd.xlane.f32.xlu0 %v1230
        %v1232 = vpop.xlane.xlu0 %1231
        %v1233 = vsel %vm868, %v1189, 0.0
        %1234 = vadd.xlane.f32.xlu0 %v1233
        %v1235 = vpop.xlane.xlu0 %1234
        %v1236 = vsel %vm868, %v1191, 0.0
        %1237 = vadd.xlane.f32.xlu0 %v1236
        %v1238 = vpop.xlane.xlu0 %1237
        %v1239 = vsel %vm868, %v1193, 0.0
        %1240 = vadd.xlane.f32.xlu0 %v1239
        %v1241 = vpop.xlane.xlu0 %1240
        %v1242 = vrcp.pop %v1196
        %v1243 = vrcp.pop %v1199
        %v1244 = vrcp.pop %v1202
        %v1245 = vrcp.pop %v1205
        %v1246 = vrcp.pop %v1208
        %v1247 = vrcp.pop %v1211
        %v1248 = vrcp.pop %v1214
        %v1249 = vrcp.pop %v1217
        %v1250 = vrcp.pop %v1220
        %v1251 = vrcp.pop %v1223
        %v1252 = vrcp.pop %v1226
        %v1253 = vrcp.pop %v1229
        %v1254 = vrcp.pop %v1232
        %v1255 = vrcp.pop %v1235
        %v1256 = vrcp.pop %v1238
        %v1257 = vrcp.pop %v1241
        %v1258 = vmul.f32 %v1163, %v1242
        %v1259 = vmul.f32 %v1165, %v1243
        %v1260 = vmul.f32 %v1167, %v1244
        %v1261 = vmul.f32 %v1169, %v1245
        %v1262 = vmul.f32 %v1171, %v1246
        %v1263 = vmul.f32 %v1173, %v1247
        %v1264 = vmul.f32 %v1175, %v1248
        %v1265 = vmul.f32 %v1177, %v1249
        %v1266 = vmul.f32 %v1179, %v1250
        %v1267 = vmul.f32 %v1181, %v1251
        %v1268 = vmul.f32 %v1183, %v1252
        %v1269 = vmul.f32 %v1185, %v1253
        %v1270 = vmul.f32 %v1187, %v1254
        %v1271 = vmul.f32 %v1189, %v1255
        %v1272 = vmul.f32 %v1191, %v1256
        %v1273 = vmul.f32 %v1193, %v1257
        %v1274 = vlog2.pop %v1196
        %v1275 = vmul.f32 %v1274, 0.6931472
        %v1276 = vlog2.pop %v1199
        %v1277 = vmul.f32 %v1276, 0.6931472
        %v1278 = vlog2.pop %v1202
        %v1279 = vmul.f32 %v1278, 0.6931472
        %v1280 = vlog2.pop %v1205
        %v1281 = vmul.f32 %v1280, 0.6931472
        %v1282 = vlog2.pop %v1208
        %v1283 = vmul.f32 %v1282, 0.6931472
        %v1284 = vlog2.pop %v1211
        %v1285 = vmul.f32 %v1284, 0.6931472
        %v1286 = vlog2.pop %v1214
        %v1287 = vmul.f32 %v1286, 0.6931472
        %v1288 = vlog2.pop %v1217
        %v1289 = vmul.f32 %v1288, 0.6931472
        %v1290 = vlog2.pop %v1220
        %v1291 = vmul.f32 %v1290, 0.6931472
        %v1292 = vlog2.pop %v1223
        %v1293 = vmul.f32 %v1292, 0.6931472
        %v1294 = vlog2.pop %v1226
        %v1295 = vmul.f32 %v1294, 0.6931472
        %v1296 = vlog2.pop %v1229
        %v1297 = vmul.f32 %v1296, 0.6931472
        %v1298 = vlog2.pop %v1232
        %v1299 = vmul.f32 %v1298, 0.6931472
        %v1300 = vlog2.pop %v1235
        %v1301 = vmul.f32 %v1300, 0.6931472
        %v1302 = vlog2.pop %v1238
        %v1303 = vmul.f32 %v1302, 0.6931472
        %v1304 = vlog2.pop %v1241
        %v1305 = vmul.f32 %v1304, 0.6931472
        %v1306 = vsub.f32 %v1146, %v1275
        %v1307 = vsub.f32 %v1147, %v1277
        %v1308 = vsub.f32 %v1148, %v1279
        %v1309 = vsub.f32 %v1149, %v1281
        %v1310 = vsub.f32 %v1150, %v1283
        %v1311 = vsub.f32 %v1151, %v1285
        %v1312 = vsub.f32 %v1152, %v1287
        %v1313 = vsub.f32 %v1153, %v1289
        %v1314 = vsub.f32 %v1154, %v1291
        %v1315 = vsub.f32 %v1155, %v1293
        %v1316 = vsub.f32 %v1156, %v1295
        %v1317 = vsub.f32 %v1157, %v1297
        %v1318 = vsub.f32 %v1158, %v1299
        %v1319 = vsub.f32 %v1159, %v1301
        %v1320 = vsub.f32 %v1160, %v1303
        %v1321 = vsub.f32 %v1161, %v1305
        %v1322 = vpack.c.bf16 %v1259, %v1258
        %v1323 = vpack.c.bf16 %v1261, %v1260
        %v1324 = vpack.c.bf16 %v1263, %v1262
        %v1325 = vpack.c.bf16 %v1265, %v1264
        %v1326 = vpack.c.bf16 %v1267, %v1266
        %v1327 = vpack.c.bf16 %v1269, %v1268
        %v1328 = vpack.c.bf16 %v1271, %v1270
        %v1329 = vpack.c.bf16 %v1273, %v1272
        %1330 = vxpose.xlu0.c.b16.start [1/8] %v1322, 128
        %1331 = vxpose.xlu0.c.b16.cont [2/8] %v1323, 128
        %1332 = vxpose.xlu0.c.b16.cont [3/8] %v1324, 128
        %1333 = vxpose.xlu0.c.b16.cont [4/8] %v1325, 128
        %1334 = vxpose.xlu0.c.b16.cont [5/8] %v1326, 128
        %1335 = vxpose.xlu0.c.b16.cont [6/8] %v1327, 128
        %1336 = vxpose.xlu0.c.b16.cont [7/8] %v1328, 128
        %1337 = vxpose.xlu0.c.b16.end [8/8] %v1329, 128
        %v1338 = vpop.trf.xlu0
        %v1339 = vpop.trf.xlu0
        %v1340 = vpop.trf.xlu0
        %v1341 = vpop.trf.xlu0
        %v1342 = vpop.trf.xlu0
        %v1343 = vpop.trf.xlu0
        %v1344 = vpop.trf.xlu0
        %v1345 = vpop.trf.xlu0
        %1346 = vmatpush.bf16.msra.mxu0 %v666
        %1347 = vmatpush.bf16.msra.mxu0 %v665
        %1348 = vmatpush.bf16.msra.mxu0 %v664
        %1349 = vmatpush.bf16.msra.mxu0 %v663
        %1350 = vmatpush.bf16.msra.mxu0 %v662
        %1351 = vmatpush.bf16.msra.mxu0 %v661
        %1352 = vmatpush.bf16.msra.mxu0 %v660
        %1353 = vmatpush.bf16.msra.mxu0 %v659
        %1354 = vmatmul.bf16.gmra.mxu0 %v1338
        %v1355 = vpop.f32.mrf.mxu0
        %v1356 = vadd.f32 0.0, %v1355
        %v1357 = vpop.f32.mrf.mxu0
        %v1358 = vadd.f32 0.0, %v1357
        %1359 = vmatmul.bf16.gmra.mxu0 %v1339
        %v1360 = vpop.f32.mrf.mxu0
        %v1361 = vadd.f32 0.0, %v1360
        %v1362 = vpop.f32.mrf.mxu0
        %v1363 = vadd.f32 0.0, %v1362
        %1364 = vdwg.mxu0
        %1365 = vst [vmem:[%s457] sm:$0xff] %v1356
        %1366 = vst [vmem:[%s457 + $0x8] sm:$0xff] %v1358
        %1367 = vst [vmem:[%s457 + $0x10] sm:$0xff] %v1361
        %1368 = vst [vmem:[%s457 + $0x18] sm:$0xff] %v1363
        %1369 = vmatpush.bf16.msra.mxu0 %v618
        %1370 = vmatpush.bf16.msra.mxu0 %v617
        %1371 = vmatpush.bf16.msra.mxu0 %v616
        %1372 = vmatpush.bf16.msra.mxu0 %v615
        %1373 = vmatpush.bf16.msra.mxu0 %v614
        %1374 = vmatpush.bf16.msra.mxu0 %v613
        %1375 = vmatpush.bf16.msra.mxu0 %v612
        %1376 = vmatpush.bf16.msra.mxu0 %v611
        %1377 = vmatmul.bf16.gmra.mxu0 %v1338
        %v1378 = vpop.f32.mrf.mxu0
        %v1379 = vadd.f32 0.0, %v1378
        %v1380 = vpop.f32.mrf.mxu0
        %v1381 = vadd.f32 0.0, %v1380
        %1382 = vmatmul.bf16.gmra.mxu0 %v1339
        %v1383 = vpop.f32.mrf.mxu0
        %v1384 = vadd.f32 0.0, %v1383
        %v1385 = vpop.f32.mrf.mxu0
        %v1386 = vadd.f32 0.0, %v1385
        %1387 = vdwg.mxu0
        %1388 = vmatpush.msra.mxu0 %v1273
        %1389 = vmatpush.msra.mxu0 %v1272
        %1390 = vmatpush.msra.mxu0 %v1271
        %1391 = vmatpush.msra.mxu0 %v1270
        %1392 = vmatpush.msra.mxu0 %v1269
        %1393 = vmatpush.msra.mxu0 %v1268
        %1394 = vmatpush.msra.mxu0 %v1267
        %1395 = vmatpush.msra.mxu0 %v1266
        %1396 = vmatpush.msra.mxu0 %v1265
        %1397 = vmatpush.msra.mxu0 %v1264
        %1398 = vmatpush.msra.mxu0 %v1263
        %1399 = vmatpush.msra.mxu0 %v1262
        %1400 = vmatpush.msra.mxu0 %v1261
        %1401 = vmatpush.msra.mxu0 %v1260
        %1402 = vmatpush.msra.mxu0 %v1259
        %1403 = vmatpush.msra.mxu0 %v1258
        %1404 = vmatmul.f32.gmra.mxu0 %v1379
        %v1405 = vpop.f32.mrf.mxu0
        %v1406 = vadd.f32 0.0, %v1405
        %1407 = vmatmul.f32.gmra.mxu0 %v1381
        %v1408 = vpop.f32.mrf.mxu0
        %v1409 = vadd.f32 0.0, %v1408
        %1410 = vmatmul.f32.gmra.mxu0 %v1384
        %v1411 = vpop.f32.mrf.mxu0
        %v1412 = vadd.f32 0.0, %v1411
        %1413 = vmatmul.f32.gmra.mxu0 %v1386
        %v1414 = vpop.f32.mrf.mxu0
        %v1415 = vadd.f32 0.0, %v1414
        %1416 = vdwg.mxu0
        %1417 = vst.msk [vmem:[%s464] sm:$0xff] %vm868, %v1406
        %1418 = vst.msk [vmem:[%s464 + $0x8] sm:$0xff] %vm868, %v1409
        %1419 = vst.msk [vmem:[%s464 + $0x10] sm:$0xff] %vm868, %v1412
        %1420 = vst.msk [vmem:[%s464 + $0x18] sm:$0xff] %vm868, %v1415
        %v1421 = vunpack.c.l.bf16 %v547
        %v1422 = vunpack.c.l.bf16 %v548
        %v1423 = vunpack.c.l.bf16 %v549
        %v1424 = vunpack.c.l.bf16 %v550
        %v1425 = vunpack.c.l.bf16 %v551
        %v1426 = vunpack.c.l.bf16 %v552
        %v1427 = vunpack.c.l.bf16 %v553
        %v1428 = vunpack.c.l.bf16 %v554
        %v1429 = vunpack.c.l.bf16 %v555
        %v1430 = vunpack.c.l.bf16 %v556
        %v1431 = vunpack.c.l.bf16 %v557
        %v1432 = vunpack.c.l.bf16 %v558
        %v1433 = vunpack.c.l.bf16 %v559
        %v1434 = vunpack.c.l.bf16 %v560
        %v1435 = vunpack.c.l.bf16 %v561
        %v1436 = vunpack.c.l.bf16 %v562
        %v1437 = vmul.f32 %v1421, %v1421
        %v1438 = vmul.f32 %v1422, %v1422
        %v1439 = vmul.f32 %v1423, %v1423
        %v1440 = vmul.f32 %v1424, %v1424
        %v1441 = vmul.f32 %v1425, %v1425
        %v1442 = vmul.f32 %v1426, %v1426
        %v1443 = vmul.f32 %v1427, %v1427
        %v1444 = vmul.f32 %v1428, %v1428
        %v1445 = vmul.f32 %v1429, %v1429
        %v1446 = vmul.f32 %v1430, %v1430
        %v1447 = vmul.f32 %v1431, %v1431
        %v1448 = vmul.f32 %v1432, %v1432
        %v1449 = vmul.f32 %v1433, %v1433
        %v1450 = vmul.f32 %v1434, %v1434
        %v1451 = vmul.f32 %v1435, %v1435
        %v1452 = vmul.f32 %v1436, %v1436
        %1453 = vadd.xlane.f32.xlu0 %v1437
        %v1454 = vpop.xlane.xlu0 %1453
        %1455 = vadd.xlane.f32.xlu0 %v1438
        %v1456 = vpop.xlane.xlu0 %1455
        %1457 = vadd.xlane.f32.xlu0 %v1439
        %v1458 = vpop.xlane.xlu0 %1457
        %1459 = vadd.xlane.f32.xlu0 %v1440
        %v1460 = vpop.xlane.xlu0 %1459
        %1461 = vadd.xlane.f32.xlu0 %v1441
        %v1462 = vpop.xlane.xlu0 %1461
        %1463 = vadd.xlane.f32.xlu0 %v1442
        %v1464 = vpop.xlane.xlu0 %1463
        %1465 = vadd.xlane.f32.xlu0 %v1443
        %v1466 = vpop.xlane.xlu0 %1465
        %1467 = vadd.xlane.f32.xlu0 %v1444
        %v1468 = vpop.xlane.xlu0 %1467
        %1469 = vadd.xlane.f32.xlu0 %v1445
        %v1470 = vpop.xlane.xlu0 %1469
        %1471 = vadd.xlane.f32.xlu0 %v1446
        %v1472 = vpop.xlane.xlu0 %1471
        %1473 = vadd.xlane.f32.xlu0 %v1447
        %v1474 = vpop.xlane.xlu0 %1473
        %1475 = vadd.xlane.f32.xlu0 %v1448
        %v1476 = vpop.xlane.xlu0 %1475
        %1477 = vadd.xlane.f32.xlu0 %v1449
        %v1478 = vpop.xlane.xlu0 %1477
        %1479 = vadd.xlane.f32.xlu0 %v1450
        %v1480 = vpop.xlane.xlu0 %1479
        %1481 = vadd.xlane.f32.xlu0 %v1451
        %v1482 = vpop.xlane.xlu0 %1481
        %1483 = vadd.xlane.f32.xlu0 %v1452
        %v1484 = vpop.xlane.xlu0 %1483
        %v1485 = vadd.f32 %v1454, %v1456
        %v1486 = vadd.f32 %v1485, %v1458
        %v1487 = vadd.f32 %v1486, %v1460
        %v1488 = vadd.f32 %v1487, %v1462
        %v1489 = vadd.f32 %v1488, %v1464
        %v1490 = vadd.f32 %v1489, %v1466
        %v1491 = vadd.f32 %v1490, %v1468
        %v1492 = vadd.f32 %v1491, %v1470
        %v1493 = vadd.f32 %v1492, %v1472
        %v1494 = vadd.f32 %v1493, %v1474
        %v1495 = vadd.f32 %v1494, %v1476
        %v1496 = vadd.f32 %v1495, %v1478
        %v1497 = vadd.f32 %v1496, %v1480
        %v1498 = vadd.f32 %v1497, %v1482
        %v1499 = vadd.f32 %v1498, %v1484
        %v1500 = vrot.slane %v1499, 4
        %v1501 = vadd.f32 %v1499, %v1500
        %v1502 = vrot.slane %v1501, 2
        %v1503 = vadd.f32 %v1501, %v1502
        %v1504 = vrot.slane %v1503, 1
        %v1505 = vadd.f32 %v1503, %v1504
        %v1506 = vmul.f32 %v1406, %v527
        %v1507 = vmul.f32 %v1409, %v528
        %v1508 = vmul.f32 %v1412, %v529
        %v1509 = vmul.f32 %v1415, %v530
        %v1510 = vsel %vm868, %v1506, 0.0
        %1511 = vadd.xlane.f32.xlu0 %v1510
        %v1512 = vpop.xlane.xlu0 %1511
        %v1513 = vsel %vm868, %v1507, 0.0
        %1514 = vadd.xlane.f32.xlu0 %v1513
        %v1515 = vpop.xlane.xlu0 %1514
        %v1516 = vsel %vm868, %v1508, 0.0
        %1517 = vadd.xlane.f32.xlu0 %v1516
        %v1518 = vpop.xlane.xlu0 %1517
        %v1519 = vsel %vm868, %v1509, 0.0
        %1520 = vadd.xlane.f32.xlu0 %v1519
        %v1521 = vpop.xlane.xlu0 %1520
        %v1522 = vadd.f32 %v1512, %v1515
        %v1523 = vadd.f32 %v1522, %v1518
        %v1524 = vadd.f32 %v1523, %v1521
        %v1525 = vrot.slane %v1524, 4
        %v1526 = vadd.f32 %v1524, %v1525
        %v1527 = vrot.slane %v1526, 2
        %v1528 = vadd.f32 %v1526, %v1527
        %v1529 = vrot.slane %v1528, 1
        %v1530 = vadd.f32 %v1528, %v1529
        %1531 = vmatpush.bf16.msra.mxu0 %v1329
        %1532 = vmatpush.bf16.msra.mxu0 %v1328
        %1533 = vmatpush.bf16.msra.mxu0 %v1327
        %1534 = vmatpush.bf16.msra.mxu0 %v1326
        %1535 = vmatpush.bf16.msra.mxu0 %v1325
        %1536 = vmatpush.bf16.msra.mxu0 %v1324
        %1537 = vmatpush.bf16.msra.mxu0 %v1323
        %1538 = vmatpush.bf16.msra.mxu0 %v1322
        %1539 = vmatmul.bf16.gmra.mxu0 %v1338
        %v1540 = vpop.f32.mrf.mxu0
        %v1541 = vadd.f32 0.0, %v1540
        %v1542 = vpop.f32.mrf.mxu0
        %v1543 = vadd.f32 0.0, %v1542
        %1544 = vmatmul.bf16.gmra.mxu0 %v1339
        %v1545 = vpop.f32.mrf.mxu0
        %v1546 = vadd.f32 0.0, %v1545
        %v1547 = vpop.f32.mrf.mxu0
        %v1548 = vadd.f32 0.0, %v1547
        %1549 = vdwg.mxu0
        %v1550 = vmul.f32 %v1530, 2.0
        %v1551 = vsub.f32 %v1505, %v1550
        %v1552 = vmul.f32 %v1541, %v1541
        %v1553 = vmul.f32 %v1543, %v1543
        %v1554 = vmul.f32 %v1546, %v1546
        %v1555 = vmul.f32 %v1548, %v1548
        %v1556 = vsel %vm868, %v1552, 0.0
        %1557 = vadd.xlane.f32.xlu0 %v1556
        %v1558 = vpop.xlane.xlu0 %1557
        %v1559 = vsel %vm868, %v1553, 0.0
        %1560 = vadd.xlane.f32.xlu0 %v1559
        %v1561 = vpop.xlane.xlu0 %1560
        %v1562 = vsel %vm868, %v1554, 0.0
        %1563 = vadd.xlane.f32.xlu0 %v1562
        %v1564 = vpop.xlane.xlu0 %1563
        %v1565 = vsel %vm868, %v1555, 0.0
        %1566 = vadd.xlane.f32.xlu0 %v1565
        %v1567 = vpop.xlane.xlu0 %1566
        %v1568 = vadd.f32 %v1558, %v1561
        %v1569 = vadd.f32 %v1568, %v1564
        %v1570 = vadd.f32 %v1569, %v1567
        %v1571 = vrot.slane %v1570, 4
        %v1572 = vadd.f32 %v1570, %v1571
        %v1573 = vrot.slane %v1572, 2
        %v1574 = vadd.f32 %v1572, %v1573
        %v1575 = vrot.slane %v1574, 1
        %v1576 = vadd.f32 %v1574, %v1575
        %v1577 = vadd.f32 %v1551, %v1576
        %v1578 = vmul.f32 %v1258, %v1306
        %v1579 = vmul.f32 %v1259, %v1307
        %v1580 = vmul.f32 %v1260, %v1308
        %v1581 = vmul.f32 %v1261, %v1309
        %v1582 = vmul.f32 %v1262, %v1310
        %v1583 = vmul.f32 %v1263, %v1311
        %v1584 = vmul.f32 %v1264, %v1312
        %v1585 = vmul.f32 %v1265, %v1313
        %v1586 = vmul.f32 %v1266, %v1314
        %v1587 = vmul.f32 %v1267, %v1315
        %v1588 = vmul.f32 %v1268, %v1316
        %v1589 = vmul.f32 %v1269, %v1317
        %v1590 = vmul.f32 %v1270, %v1318
        %v1591 = vmul.f32 %v1271, %v1319
        %v1592 = vmul.f32 %v1272, %v1320
        %v1593 = vmul.f32 %v1273, %v1321
        %v1594 = vsel %vm868, %v1578, 0.0
        %1595 = vadd.xlane.f32.xlu0 %v1594
        %v1596 = vpop.xlane.xlu0 %1595
        %v1597 = vsel %vm868, %v1579, 0.0
        %1598 = vadd.xlane.f32.xlu0 %v1597
        %v1599 = vpop.xlane.xlu0 %1598
        %v1600 = vsel %vm868, %v1580, 0.0
        %1601 = vadd.xlane.f32.xlu0 %v1600
        %v1602 = vpop.xlane.xlu0 %1601
        %v1603 = vsel %vm868, %v1581, 0.0
        %1604 = vadd.xlane.f32.xlu0 %v1603
        %v1605 = vpop.xlane.xlu0 %1604
        %v1606 = vsel %vm868, %v1582, 0.0
        %1607 = vadd.xlane.f32.xlu0 %v1606
        %v1608 = vpop.xlane.xlu0 %1607
        %v1609 = vsel %vm868, %v1583, 0.0
        %1610 = vadd.xlane.f32.xlu0 %v1609
        %v1611 = vpop.xlane.xlu0 %1610
        %v1612 = vsel %vm868, %v1584, 0.0
        %1613 = vadd.xlane.f32.xlu0 %v1612
        %v1614 = vpop.xlane.xlu0 %1613
        %v1615 = vsel %vm868, %v1585, 0.0
        %1616 = vadd.xlane.f32.xlu0 %v1615
        %v1617 = vpop.xlane.xlu0 %1616
        %v1618 = vsel %vm868, %v1586, 0.0
        %1619 = vadd.xlane.f32.xlu0 %v1618
        %v1620 = vpop.xlane.xlu0 %1619
        %v1621 = vsel %vm868, %v1587, 0.0
        %1622 = vadd.xlane.f32.xlu0 %v1621
        %v1623 = vpop.xlane.xlu0 %1622
        %v1624 = vsel %vm868, %v1588, 0.0
        %1625 = vadd.xlane.f32.xlu0 %v1624
        %v1626 = vpop.xlane.xlu0 %1625
        %v1627 = vsel %vm868, %v1589, 0.0
        %1628 = vadd.xlane.f32.xlu0 %v1627
        %v1629 = vpop.xlane.xlu0 %1628
        %v1630 = vsel %vm868, %v1590, 0.0
        %1631 = vadd.xlane.f32.xlu0 %v1630
        %v1632 = vpop.xlane.xlu0 %1631
        %v1633 = vsel %vm868, %v1591, 0.0
        %1634 = vadd.xlane.f32.xlu0 %v1633
        %v1635 = vpop.xlane.xlu0 %1634
        %v1636 = vsel %vm868, %v1592, 0.0
        %1637 = vadd.xlane.f32.xlu0 %v1636
        %v1638 = vpop.xlane.xlu0 %1637
        %v1639 = vsel %vm868, %v1593, 0.0
        %1640 = vadd.xlane.f32.xlu0 %v1639
        %v1641 = vpop.xlane.xlu0 %1640
        %v1642 = vadd.f32 %v1596, %v1599
        %v1643 = vadd.f32 %v1642, %v1602
        %v1644 = vadd.f32 %v1643, %v1605
        %v1645 = vadd.f32 %v1644, %v1608
        %v1646 = vadd.f32 %v1645, %v1611
        %v1647 = vadd.f32 %v1646, %v1614
        %v1648 = vadd.f32 %v1647, %v1617
        %v1649 = vadd.f32 %v1648, %v1620
        %v1650 = vadd.f32 %v1649, %v1623
        %v1651 = vadd.f32 %v1650, %v1626
        %v1652 = vadd.f32 %v1651, %v1629
        %v1653 = vadd.f32 %v1652, %v1632
        %v1654 = vadd.f32 %v1653, %v1635
        %v1655 = vadd.f32 %v1654, %v1638
        %v1656 = vadd.f32 %v1655, %v1641
        %v1657 = vrot.slane %v1656, 4
        %v1658 = vadd.f32 %v1656, %v1657
        %v1659 = vrot.slane %v1658, 2
        %v1660 = vadd.f32 %v1658, %v1659
        %v1661 = vrot.slane %v1660, 1
        %v1662 = vadd.f32 %v1660, %v1661
        %v1663 = vsub.f32 0.0, %v1662
        %1664 = vst [vmem:[%s471] sm:$0x1] %v1577
        %1665 = vst [vmem:[%s478] sm:$0x1] %v1663
        %s1666 = scalar_lea.vmem %s409, 64 [#allocation2]
        %v1667 = vld [vmem:[%s1666] sm:$0xf]
        %v1668 = vld [vmem:[%s1666 + $0x4] sm:$0xf]
        %v1669 = vld [vmem:[%s1666 + $0x8] sm:$0xf]
        %v1670 = vld [vmem:[%s1666 + $0xc] sm:$0xf]
        %v1671 = vld [vmem:[%s1666 + $0x10] sm:$0xf]
        %v1672 = vld [vmem:[%s1666 + $0x14] sm:$0xf]
        %v1673 = vld [vmem:[%s1666 + $0x18] sm:$0xf]
        %v1674 = vld [vmem:[%s1666 + $0x1c] sm:$0xf]
        %v1675 = vld [vmem:[%s1666 + $0x20] sm:$0xf]
        %v1676 = vld [vmem:[%s1666 + $0x24] sm:$0xf]
        %v1677 = vld [vmem:[%s1666 + $0x28] sm:$0xf]
        %v1678 = vld [vmem:[%s1666 + $0x2c] sm:$0xf]
        %v1679 = vld [vmem:[%s1666 + $0x30] sm:$0xf]
        %v1680 = vld [vmem:[%s1666 + $0x34] sm:$0xf]
        %v1681 = vld [vmem:[%s1666 + $0x38] sm:$0xf]
        %v1682 = vld [vmem:[%s1666 + $0x3c] sm:$0xf]
        %s1683 = scalar_lea.vmem %s419, 64 [#allocation5]
        %v1684 = vld [vmem:[%s1683] sm:$0xf]
        %v1685 = vld [vmem:[%s1683 + $0x4] sm:$0xf]
        %v1686 = vld [vmem:[%s1683 + $0x8] sm:$0xf]
        %v1687 = vld [vmem:[%s1683 + $0xc] sm:$0xf]
        %v1688 = vld [vmem:[%s1683 + $0x10] sm:$0xf]
        %v1689 = vld [vmem:[%s1683 + $0x14] sm:$0xf]
        %v1690 = vld [vmem:[%s1683 + $0x18] sm:$0xf]
        %v1691 = vld [vmem:[%s1683 + $0x1c] sm:$0xf]
        %v1692 = vld [vmem:[%s1683 + $0x20] sm:$0xf]
        %v1693 = vld [vmem:[%s1683 + $0x24] sm:$0xf]
        %v1694 = vld [vmem:[%s1683 + $0x28] sm:$0xf]
        %v1695 = vld [vmem:[%s1683 + $0x2c] sm:$0xf]
        %v1696 = vld [vmem:[%s1683 + $0x30] sm:$0xf]
        %v1697 = vld [vmem:[%s1683 + $0x34] sm:$0xf]
        %v1698 = vld [vmem:[%s1683 + $0x38] sm:$0xf]
        %v1699 = vld [vmem:[%s1683 + $0x3c] sm:$0xf]
        %v1700 = vunpack.c.l.bf16 %v1667
        %v1701 = vunpack.c.l.bf16 %v1668
        %v1702 = vunpack.c.l.bf16 %v1669
        %v1703 = vunpack.c.l.bf16 %v1670
        %v1704 = vunpack.c.l.bf16 %v1671
        %v1705 = vunpack.c.l.bf16 %v1672
        %v1706 = vunpack.c.l.bf16 %v1673
        %v1707 = vunpack.c.l.bf16 %v1674
        %v1708 = vunpack.c.l.bf16 %v1675
        %v1709 = vunpack.c.l.bf16 %v1676
        %v1710 = vunpack.c.l.bf16 %v1677
        %v1711 = vunpack.c.l.bf16 %v1678
        %v1712 = vunpack.c.l.bf16 %v1679
        %v1713 = vunpack.c.l.bf16 %v1680
        %v1714 = vunpack.c.l.bf16 %v1681
        %v1715 = vunpack.c.l.bf16 %v1682
        %v1732 = vunpack.c.l.b16 %v1684
        %v1733 = vunpack.c.l.b16 %v1685
        %v1734 = vunpack.c.l.b16 %v1686
        %v1735 = vunpack.c.l.b16 %v1687
        %v1736 = vunpack.c.l.b16 %v1688
        %v1737 = vunpack.c.l.b16 %v1689
        %v1738 = vunpack.c.l.b16 %v1690
        %v1739 = vunpack.c.l.b16 %v1691
        %v1740 = vunpack.c.l.b16 %v1692
        %v1741 = vunpack.c.l.b16 %v1693
        %v1742 = vunpack.c.l.b16 %v1694
        %v1743 = vunpack.c.l.b16 %v1695
        %v1744 = vunpack.c.l.b16 %v1696
        %v1745 = vunpack.c.l.b16 %v1697
        %v1746 = vunpack.c.l.b16 %v1698
        %v1747 = vunpack.c.l.b16 %v1699
        %v1748 = vpack.c.b16 %v1733, %v1732
        %v1749 = vpack.c.b16 %v1735, %v1734
        %v1750 = vpack.c.b16 %v1737, %v1736
        %v1751 = vpack.c.b16 %v1739, %v1738
        %v1752 = vpack.c.b16 %v1741, %v1740
        %v1753 = vpack.c.b16 %v1743, %v1742
        %v1754 = vpack.c.b16 %v1745, %v1744
        %v1755 = vpack.c.b16 %v1747, %v1746
        %v1780 = vunpack.c.l.b16 %v1667
        %v1781 = vunpack.c.l.b16 %v1668
        %v1782 = vunpack.c.l.b16 %v1669
        %v1783 = vunpack.c.l.b16 %v1670
        %v1784 = vunpack.c.l.b16 %v1671
        %v1785 = vunpack.c.l.b16 %v1672
        %v1786 = vunpack.c.l.b16 %v1673
        %v1787 = vunpack.c.l.b16 %v1674
        %v1788 = vunpack.c.l.b16 %v1675
        %v1789 = vunpack.c.l.b16 %v1676
        %v1790 = vunpack.c.l.b16 %v1677
        %v1791 = vunpack.c.l.b16 %v1678
        %v1792 = vunpack.c.l.b16 %v1679
        %v1793 = vunpack.c.l.b16 %v1680
        %v1794 = vunpack.c.l.b16 %v1681
        %v1795 = vunpack.c.l.b16 %v1682
        %v1796 = vpack.c.b16 %v1781, %v1780
        %v1797 = vpack.c.b16 %v1783, %v1782
        %v1798 = vpack.c.b16 %v1785, %v1784
        %v1799 = vpack.c.b16 %v1787, %v1786
        %v1800 = vpack.c.b16 %v1789, %v1788
        %v1801 = vpack.c.b16 %v1791, %v1790
        %v1802 = vpack.c.b16 %v1793, %v1792
        %v1803 = vpack.c.b16 %v1795, %v1794
        %1812 = vmatpush.bf16.msra.mxu0 %v1803
        %1813 = vmatpush.bf16.msra.mxu0 %v1802
        %1814 = vmatpush.bf16.msra.mxu0 %v1801
        %1815 = vmatpush.bf16.msra.mxu0 %v1800
        %1816 = vmatpush.bf16.msra.mxu0 %v1799
        %1817 = vmatpush.bf16.msra.mxu0 %v1798
        %1818 = vmatpush.bf16.msra.mxu0 %v1797
        %1819 = vmatpush.bf16.msra.mxu0 %v1796
        %1820 = vmatmul.bf16.gmra.mxu0 %v1748
        %v1821 = vpop.f32.mrf.mxu0
        %v1822 = vadd.f32 %v1700, %v1821
        %v1823 = vpop.f32.mrf.mxu0
        %v1824 = vadd.f32 %v1701, %v1823
        %1825 = vmatmul.bf16.gmra.mxu0 %v1749
        %v1826 = vpop.f32.mrf.mxu0
        %v1827 = vadd.f32 %v1702, %v1826
        %v1828 = vpop.f32.mrf.mxu0
        %v1829 = vadd.f32 %v1703, %v1828
        %1830 = vmatmul.bf16.gmra.mxu0 %v1750
        %v1831 = vpop.f32.mrf.mxu0
        %v1832 = vadd.f32 %v1704, %v1831
        %v1833 = vpop.f32.mrf.mxu0
        %v1834 = vadd.f32 %v1705, %v1833
        %1835 = vmatmul.bf16.gmra.mxu0 %v1751
        %v1836 = vpop.f32.mrf.mxu0
        %v1837 = vadd.f32 %v1706, %v1836
        %v1838 = vpop.f32.mrf.mxu0
        %v1839 = vadd.f32 %v1707, %v1838
        %1840 = vmatmul.bf16.gmra.mxu0 %v1752
        %v1841 = vpop.f32.mrf.mxu0
        %v1842 = vadd.f32 %v1708, %v1841
        %v1843 = vpop.f32.mrf.mxu0
        %v1844 = vadd.f32 %v1709, %v1843
        %1845 = vmatmul.bf16.gmra.mxu0 %v1753
        %v1846 = vpop.f32.mrf.mxu0
        %v1847 = vadd.f32 %v1710, %v1846
        %v1848 = vpop.f32.mrf.mxu0
        %v1849 = vadd.f32 %v1711, %v1848
        %1850 = vmatmul.bf16.gmra.mxu0 %v1754
        %v1851 = vpop.f32.mrf.mxu0
        %v1852 = vadd.f32 %v1712, %v1851
        %v1853 = vpop.f32.mrf.mxu0
        %v1854 = vadd.f32 %v1713, %v1853
        %1855 = vmatmul.bf16.gmra.mxu0 %v1755
        %v1856 = vpop.f32.mrf.mxu0
        %v1857 = vadd.f32 %v1714, %v1856
        %v1858 = vpop.f32.mrf.mxu0
        %v1859 = vadd.f32 %v1715, %v1858
        %1860 = vdwg.mxu0
        %1861 = vmatpush.msra.mxu0 %v500
        %1862 = vmatpush.msra.mxu0 %v499
        %1863 = vmatpush.msra.mxu0 %v498
        %1864 = vmatpush.msra.mxu0 %v497
        %1865 = vmatpush.msra.mxu0 %v496
        %1866 = vmatpush.msra.mxu0 %v495
        %1867 = vmatpush.msra.mxu0 %v494
        %1868 = vmatpush.msra.mxu0 %v493
        %1869 = vmatpush.msra.mxu0 %v492
        %1870 = vmatpush.msra.mxu0 %v491
        %1871 = vmatpush.msra.mxu0 %v490
        %1872 = vmatpush.msra.mxu0 %v489
        %1873 = vmatpush.msra.mxu0 %v488
        %1874 = vmatpush.msra.mxu0 %v487
        %1875 = vmatpush.msra.mxu0 %v486
        %1876 = vmatpush.msra.mxu0 %v485
        %1877 = vmatmul.f32.gmra.mxu0 %v1822
        %v1878 = vpop.f32.mrf.mxu0
        %v1879 = vadd.f32 %v725, %v1878
        %1880 = vmatmul.f32.gmra.mxu0 %v1824
        %v1881 = vpop.f32.mrf.mxu0
        %v1882 = vadd.f32 %v725, %v1881
        %1883 = vmatmul.f32.gmra.mxu0 %v1827
        %v1884 = vpop.f32.mrf.mxu0
        %v1885 = vadd.f32 %v725, %v1884
        %1886 = vmatmul.f32.gmra.mxu0 %v1829
        %v1887 = vpop.f32.mrf.mxu0
        %v1888 = vadd.f32 %v725, %v1887
        %1889 = vmatmul.f32.gmra.mxu0 %v1832
        %v1890 = vpop.f32.mrf.mxu0
        %v1891 = vadd.f32 %v725, %v1890
        %1892 = vmatmul.f32.gmra.mxu0 %v1834
        %v1893 = vpop.f32.mrf.mxu0
        %v1894 = vadd.f32 %v725, %v1893
        %1895 = vmatmul.f32.gmra.mxu0 %v1837
        %v1896 = vpop.f32.mrf.mxu0
        %v1897 = vadd.f32 %v725, %v1896
        %1898 = vmatmul.f32.gmra.mxu0 %v1839
        %v1899 = vpop.f32.mrf.mxu0
        %v1900 = vadd.f32 %v725, %v1899
        %1901 = vmatmul.f32.gmra.mxu0 %v1842
        %v1902 = vpop.f32.mrf.mxu0
        %v1903 = vadd.f32 %v725, %v1902
        %1904 = vmatmul.f32.gmra.mxu0 %v1844
        %v1905 = vpop.f32.mrf.mxu0
        %v1906 = vadd.f32 %v725, %v1905
        %1907 = vmatmul.f32.gmra.mxu0 %v1847
        %v1908 = vpop.f32.mrf.mxu0
        %v1909 = vadd.f32 %v725, %v1908
        %1910 = vmatmul.f32.gmra.mxu0 %v1849
        %v1911 = vpop.f32.mrf.mxu0
        %v1912 = vadd.f32 %v725, %v1911
        %1913 = vmatmul.f32.gmra.mxu0 %v1852
        %v1914 = vpop.f32.mrf.mxu0
        %v1915 = vadd.f32 %v725, %v1914
        %1916 = vmatmul.f32.gmra.mxu0 %v1854
        %v1917 = vpop.f32.mrf.mxu0
        %v1918 = vadd.f32 %v725, %v1917
        %1919 = vmatmul.f32.gmra.mxu0 %v1857
        %v1920 = vpop.f32.mrf.mxu0
        %v1921 = vadd.f32 %v725, %v1920
        %1922 = vmatmul.f32.gmra.mxu0 %v1859
        %v1923 = vpop.f32.mrf.mxu0
        %v1924 = vadd.f32 %v725, %v1923
        %1925 = vdwg.mxu0
        %v1926 = vmax.f32 %v1879, 0.0
        %v1927 = vmax.f32 %v1882, 0.0
        %v1928 = vmax.f32 %v1885, 0.0
        %v1929 = vmax.f32 %v1888, 0.0
        %v1930 = vmax.f32 %v1891, 0.0
        %v1931 = vmax.f32 %v1894, 0.0
        %v1932 = vmax.f32 %v1897, 0.0
        %v1933 = vmax.f32 %v1900, 0.0
        %v1934 = vmax.f32 %v1903, 0.0
        %v1935 = vmax.f32 %v1906, 0.0
        %v1936 = vmax.f32 %v1909, 0.0
        %v1937 = vmax.f32 %v1912, 0.0
        %v1938 = vmax.f32 %v1915, 0.0
        %v1939 = vmax.f32 %v1918, 0.0
        %v1940 = vmax.f32 %v1921, 0.0
        %v1941 = vmax.f32 %v1924, 0.0
        %v1942 = vpack.c.bf16 %v1927, %v1926
        %v1943 = vpack.c.bf16 %v1929, %v1928
        %v1944 = vpack.c.bf16 %v1931, %v1930
        %v1945 = vpack.c.bf16 %v1933, %v1932
        %v1946 = vpack.c.bf16 %v1935, %v1934
        %v1947 = vpack.c.bf16 %v1937, %v1936
        %v1948 = vpack.c.bf16 %v1939, %v1938
        %v1949 = vpack.c.bf16 %v1941, %v1940
        %1950 = vmatpush.bf16.msra.mxu0 %v1949
        %1951 = vmatpush.bf16.msra.mxu0 %v1948
        %1952 = vmatpush.bf16.msra.mxu0 %v1947
        %1953 = vmatpush.bf16.msra.mxu0 %v1946
        %1954 = vmatpush.bf16.msra.mxu0 %v1945
        %1955 = vmatpush.bf16.msra.mxu0 %v1944
        %1956 = vmatpush.bf16.msra.mxu0 %v1943
        %1957 = vmatpush.bf16.msra.mxu0 %v1942
        %1958 = vmatmul.bf16.gmra.mxu0 %v1748
        %v1959 = vpop.f32.mrf.mxu0
        %v1960 = vadd.f32 %v1926, %v1959
        %v1961 = vpop.f32.mrf.mxu0
        %v1962 = vadd.f32 %v1927, %v1961
        %1963 = vmatmul.bf16.gmra.mxu0 %v1749
        %v1964 = vpop.f32.mrf.mxu0
        %v1965 = vadd.f32 %v1928, %v1964
        %v1966 = vpop.f32.mrf.mxu0
        %v1967 = vadd.f32 %v1929, %v1966
        %1968 = vmatmul.bf16.gmra.mxu0 %v1750
        %v1969 = vpop.f32.mrf.mxu0
        %v1970 = vadd.f32 %v1930, %v1969
        %v1971 = vpop.f32.mrf.mxu0
        %v1972 = vadd.f32 %v1931, %v1971
        %1973 = vmatmul.bf16.gmra.mxu0 %v1751
        %v1974 = vpop.f32.mrf.mxu0
        %v1975 = vadd.f32 %v1932, %v1974
        %v1976 = vpop.f32.mrf.mxu0
        %v1977 = vadd.f32 %v1933, %v1976
        %1978 = vmatmul.bf16.gmra.mxu0 %v1752
        %v1979 = vpop.f32.mrf.mxu0
        %v1980 = vadd.f32 %v1934, %v1979
        %v1981 = vpop.f32.mrf.mxu0
        %v1982 = vadd.f32 %v1935, %v1981
        %1983 = vmatmul.bf16.gmra.mxu0 %v1753
        %v1984 = vpop.f32.mrf.mxu0
        %v1985 = vadd.f32 %v1936, %v1984
        %v1986 = vpop.f32.mrf.mxu0
        %v1987 = vadd.f32 %v1937, %v1986
        %1988 = vmatmul.bf16.gmra.mxu0 %v1754
        %v1989 = vpop.f32.mrf.mxu0
        %v1990 = vadd.f32 %v1938, %v1989
        %v1991 = vpop.f32.mrf.mxu0
        %v1992 = vadd.f32 %v1939, %v1991
        %1993 = vmatmul.bf16.gmra.mxu0 %v1755
        %v1994 = vpop.f32.mrf.mxu0
        %v1995 = vadd.f32 %v1940, %v1994
        %v1996 = vpop.f32.mrf.mxu0
        %v1997 = vadd.f32 %v1941, %v1996
        %1998 = vdwg.mxu0
        %v2000 = vsel %vm868, %v1960, 0
        %v2003 = vsel %vm868, %v1962, 0
        %v2006 = vsel %vm868, %v1965, 0
        %v2009 = vsel %vm868, %v1967, 0
        %v2012 = vsel %vm868, %v1970, 0
        %v2015 = vsel %vm868, %v1972, 0
        %v2018 = vsel %vm868, %v1975, 0
        %v2021 = vsel %vm868, %v1977, 0
        %v2024 = vsel %vm868, %v1980, 0
        %v2027 = vsel %vm868, %v1982, 0
        %v2030 = vsel %vm868, %v1985, 0
        %v2033 = vsel %vm868, %v1987, 0
        %v2036 = vsel %vm868, %v1990, 0
        %v2039 = vsel %vm868, %v1992, 0
        %v2042 = vsel %vm868, %v1995, 0
        %v2045 = vsel %vm868, %v1997, 0
        %2047 = vmatpush.msra.mxu0 0.0
        %2048 = vmatpush.msra.mxu0 0.0
        %2049 = vmatpush.msra.mxu0 0.0
        %2050 = vmatpush.msra.mxu0 0.0
        %2051 = vmatpush.msra.mxu0 0.0
        %2052 = vmatpush.msra.mxu0 0.0
        %2053 = vmatpush.msra.mxu0 0.0
        %2054 = vmatpush.msra.mxu0 0.0
        %2055 = vmatpush.msra.mxu0 0.0
        %2056 = vmatpush.msra.mxu0 0.0
        %2057 = vmatpush.msra.mxu0 0.0
        %2058 = vmatpush.msra.mxu0 0.0
        %2059 = vmatpush.msra.mxu0 %v505
        %2060 = vmatpush.msra.mxu0 %v504
        %2061 = vmatpush.msra.mxu0 %v503
        %2062 = vmatpush.msra.mxu0 %v502
        %2063 = vmatmul.f32.gmra.mxu0 %v2000
        %v2064 = vpop.f32.mrf.mxu0
        %v2065 = vadd.f32 %v866, %v2064
        %2066 = vmatmul.f32.gmra.mxu0 %v2003
        %v2067 = vpop.f32.mrf.mxu0
        %v2068 = vadd.f32 %v866, %v2067
        %2069 = vmatmul.f32.gmra.mxu0 %v2006
        %v2070 = vpop.f32.mrf.mxu0
        %v2071 = vadd.f32 %v866, %v2070
        %2072 = vmatmul.f32.gmra.mxu0 %v2009
        %v2073 = vpop.f32.mrf.mxu0
        %v2074 = vadd.f32 %v866, %v2073
        %2075 = vmatmul.f32.gmra.mxu0 %v2012
        %v2076 = vpop.f32.mrf.mxu0
        %v2077 = vadd.f32 %v866, %v2076
        %2078 = vmatmul.f32.gmra.mxu0 %v2015
        %v2079 = vpop.f32.mrf.mxu0
        %v2080 = vadd.f32 %v866, %v2079
        %2081 = vmatmul.f32.gmra.mxu0 %v2018
        %v2082 = vpop.f32.mrf.mxu0
        %v2083 = vadd.f32 %v866, %v2082
        %2084 = vmatmul.f32.gmra.mxu0 %v2021
        %v2085 = vpop.f32.mrf.mxu0
        %v2086 = vadd.f32 %v866, %v2085
        %2087 = vmatmul.f32.gmra.mxu0 %v2024
        %v2088 = vpop.f32.mrf.mxu0
        %v2089 = vadd.f32 %v866, %v2088
        %2090 = vmatmul.f32.gmra.mxu0 %v2027
        %v2091 = vpop.f32.mrf.mxu0
        %v2092 = vadd.f32 %v866, %v2091
        %2093 = vmatmul.f32.gmra.mxu0 %v2030
        %v2094 = vpop.f32.mrf.mxu0
        %v2095 = vadd.f32 %v866, %v2094
        %2096 = vmatmul.f32.gmra.mxu0 %v2033
        %v2097 = vpop.f32.mrf.mxu0
        %v2098 = vadd.f32 %v866, %v2097
        %2099 = vmatmul.f32.gmra.mxu0 %v2036
        %v2100 = vpop.f32.mrf.mxu0
        %v2101 = vadd.f32 %v866, %v2100
        %2102 = vmatmul.f32.gmra.mxu0 %v2039
        %v2103 = vpop.f32.mrf.mxu0
        %v2104 = vadd.f32 %v866, %v2103
        %2105 = vmatmul.f32.gmra.mxu0 %v2042
        %v2106 = vpop.f32.mrf.mxu0
        %v2107 = vadd.f32 %v866, %v2106
        %2108 = vmatmul.f32.gmra.mxu0 %v2045
        %v2109 = vpop.f32.mrf.mxu0
        %v2110 = vadd.f32 %v866, %v2109
        %2111 = vdwg.mxu0
        %v2113 = vsel %vm868, %v2065, 0
        %v2116 = vsel %vm868, %v2068, 0
        %v2119 = vsel %vm868, %v2071, 0
        %v2122 = vsel %vm868, %v2074, 0
        %v2125 = vsel %vm868, %v2077, 0
        %v2128 = vsel %vm868, %v2080, 0
        %v2131 = vsel %vm868, %v2083, 0
        %v2134 = vsel %vm868, %v2086, 0
        %v2137 = vsel %vm868, %v2089, 0
        %v2140 = vsel %vm868, %v2092, 0
        %v2143 = vsel %vm868, %v2095, 0
        %v2146 = vsel %vm868, %v2098, 0
        %v2149 = vsel %vm868, %v2101, 0
        %v2152 = vsel %vm868, %v2104, 0
        %v2155 = vsel %vm868, %v2107, 0
        %v2158 = vsel %vm868, %v2110, 0
        %2160 = vmatpush.msra.mxu0 0.0
        %2161 = vmatpush.msra.mxu0 0.0
        %2162 = vmatpush.msra.mxu0 0.0
        %2163 = vmatpush.msra.mxu0 0.0
        %2164 = vmatpush.msra.mxu0 0.0
        %2165 = vmatpush.msra.mxu0 0.0
        %2166 = vmatpush.msra.mxu0 0.0
        %2167 = vmatpush.msra.mxu0 0.0
        %2168 = vmatpush.msra.mxu0 0.0
        %2169 = vmatpush.msra.mxu0 0.0
        %2170 = vmatpush.msra.mxu0 0.0
        %2171 = vmatpush.msra.mxu0 0.0
        %2172 = vmatpush.msra.mxu0 %v510
        %2173 = vmatpush.msra.mxu0 %v509
        %2174 = vmatpush.msra.mxu0 %v508
        %2175 = vmatpush.msra.mxu0 %v507
        %2176 = vmatmul.f32.gmra.mxu0 %v2113
        %v2177 = vpop.f32.mrf.mxu0
        %v2178 = vadd.f32 %v983, %v2177
        %2179 = vmatmul.f32.gmra.mxu0 %v2116
        %v2180 = vpop.f32.mrf.mxu0
        %v2181 = vadd.f32 %v983, %v2180
        %2182 = vmatmul.f32.gmra.mxu0 %v2119
        %v2183 = vpop.f32.mrf.mxu0
        %v2184 = vadd.f32 %v983, %v2183
        %2185 = vmatmul.f32.gmra.mxu0 %v2122
        %v2186 = vpop.f32.mrf.mxu0
        %v2187 = vadd.f32 %v983, %v2186
        %2188 = vmatmul.f32.gmra.mxu0 %v2125
        %v2189 = vpop.f32.mrf.mxu0
        %v2190 = vadd.f32 %v983, %v2189
        %2191 = vmatmul.f32.gmra.mxu0 %v2128
        %v2192 = vpop.f32.mrf.mxu0
        %v2193 = vadd.f32 %v983, %v2192
        %2194 = vmatmul.f32.gmra.mxu0 %v2131
        %v2195 = vpop.f32.mrf.mxu0
        %v2196 = vadd.f32 %v983, %v2195
        %2197 = vmatmul.f32.gmra.mxu0 %v2134
        %v2198 = vpop.f32.mrf.mxu0
        %v2199 = vadd.f32 %v983, %v2198
        %2200 = vmatmul.f32.gmra.mxu0 %v2137
        %v2201 = vpop.f32.mrf.mxu0
        %v2202 = vadd.f32 %v983, %v2201
        %2203 = vmatmul.f32.gmra.mxu0 %v2140
        %v2204 = vpop.f32.mrf.mxu0
        %v2205 = vadd.f32 %v983, %v2204
        %2206 = vmatmul.f32.gmra.mxu0 %v2143
        %v2207 = vpop.f32.mrf.mxu0
        %v2208 = vadd.f32 %v983, %v2207
        %2209 = vmatmul.f32.gmra.mxu0 %v2146
        %v2210 = vpop.f32.mrf.mxu0
        %v2211 = vadd.f32 %v983, %v2210
        %2212 = vmatmul.f32.gmra.mxu0 %v2149
        %v2213 = vpop.f32.mrf.mxu0
        %v2214 = vadd.f32 %v983, %v2213
        %2215 = vmatmul.f32.gmra.mxu0 %v2152
        %v2216 = vpop.f32.mrf.mxu0
        %v2217 = vadd.f32 %v983, %v2216
        %2218 = vmatmul.f32.gmra.mxu0 %v2155
        %v2219 = vpop.f32.mrf.mxu0
        %v2220 = vadd.f32 %v983, %v2219
        %2221 = vmatmul.f32.gmra.mxu0 %v2158
        %v2222 = vpop.f32.mrf.mxu0
        %v2223 = vadd.f32 %v983, %v2222
        %2224 = vdwg.mxu0
        %v2225 = vsel %vm868, %v2178, -inf
        %2226 = vmax.xlane.f32.xlu0 %v2225
        %v2227 = vpop.xlane.xlu0 %2226
        %v2228 = vsel %vm868, %v2181, -inf
        %2229 = vmax.xlane.f32.xlu0 %v2228
        %v2230 = vpop.xlane.xlu0 %2229
        %v2231 = vsel %vm868, %v2184, -inf
        %2232 = vmax.xlane.f32.xlu0 %v2231
        %v2233 = vpop.xlane.xlu0 %2232
        %v2234 = vsel %vm868, %v2187, -inf
        %2235 = vmax.xlane.f32.xlu0 %v2234
        %v2236 = vpop.xlane.xlu0 %2235
        %v2237 = vsel %vm868, %v2190, -inf
        %2238 = vmax.xlane.f32.xlu0 %v2237
        %v2239 = vpop.xlane.xlu0 %2238
        %v2240 = vsel %vm868, %v2193, -inf
        %2241 = vmax.xlane.f32.xlu0 %v2240
        %v2242 = vpop.xlane.xlu0 %2241
        %v2243 = vsel %vm868, %v2196, -inf
        %2244 = vmax.xlane.f32.xlu0 %v2243
        %v2245 = vpop.xlane.xlu0 %2244
        %v2246 = vsel %vm868, %v2199, -inf
        %2247 = vmax.xlane.f32.xlu0 %v2246
        %v2248 = vpop.xlane.xlu0 %2247
        %v2249 = vsel %vm868, %v2202, -inf
        %2250 = vmax.xlane.f32.xlu0 %v2249
        %v2251 = vpop.xlane.xlu0 %2250
        %v2252 = vsel %vm868, %v2205, -inf
        %2253 = vmax.xlane.f32.xlu0 %v2252
        %v2254 = vpop.xlane.xlu0 %2253
        %v2255 = vsel %vm868, %v2208, -inf
        %2256 = vmax.xlane.f32.xlu0 %v2255
        %v2257 = vpop.xlane.xlu0 %2256
        %v2258 = vsel %vm868, %v2211, -inf
        %2259 = vmax.xlane.f32.xlu0 %v2258
        %v2260 = vpop.xlane.xlu0 %2259
        %v2261 = vsel %vm868, %v2214, -inf
        %2262 = vmax.xlane.f32.xlu0 %v2261
        %v2263 = vpop.xlane.xlu0 %2262
        %v2264 = vsel %vm868, %v2217, -inf
        %2265 = vmax.xlane.f32.xlu0 %v2264
        %v2266 = vpop.xlane.xlu0 %2265
        %v2267 = vsel %vm868, %v2220, -inf
        %2268 = vmax.xlane.f32.xlu0 %v2267
        %v2269 = vpop.xlane.xlu0 %2268
        %v2270 = vsel %vm868, %v2223, -inf
        %2271 = vmax.xlane.f32.xlu0 %v2270
        %v2272 = vpop.xlane.xlu0 %2271
        %v2273 = vsub.f32 %v2178, %v2227
        %v2274 = vsub.f32 %v2181, %v2230
        %v2275 = vsub.f32 %v2184, %v2233
        %v2276 = vsub.f32 %v2187, %v2236
        %v2277 = vsub.f32 %v2190, %v2239
        %v2278 = vsub.f32 %v2193, %v2242
        %v2279 = vsub.f32 %v2196, %v2245
        %v2280 = vsub.f32 %v2199, %v2248
        %v2281 = vsub.f32 %v2202, %v2251
        %v2282 = vsub.f32 %v2205, %v2254
        %v2283 = vsub.f32 %v2208, %v2257
        %v2284 = vsub.f32 %v2211, %v2260
        %v2285 = vsub.f32 %v2214, %v2263
        %v2286 = vsub.f32 %v2217, %v2266
        %v2287 = vsub.f32 %v2220, %v2269
        %v2288 = vsub.f32 %v2223, %v2272
        %v2289 = vmul.f32 %v2273, 1.442695
        %v2290 = vpow.pop %v2289
        %v2291 = vmul.f32 %v2274, 1.442695
        %v2292 = vpow.pop %v2291
        %v2293 = vmul.f32 %v2275, 1.442695
        %v2294 = vpow.pop %v2293
        %v2295 = vmul.f32 %v2276, 1.442695
        %v2296 = vpow.pop %v2295
        %v2297 = vmul.f32 %v2277, 1.442695
        %v2298 = vpow.pop %v2297
        %v2299 = vmul.f32 %v2278, 1.442695
        %v2300 = vpow.pop %v2299
        %v2301 = vmul.f32 %v2279, 1.442695
        %v2302 = vpow.pop %v2301
        %v2303 = vmul.f32 %v2280, 1.442695
        %v2304 = vpow.pop %v2303
        %v2305 = vmul.f32 %v2281, 1.442695
        %v2306 = vpow.pop %v2305
        %v2307 = vmul.f32 %v2282, 1.442695
        %v2308 = vpow.pop %v2307
        %v2309 = vmul.f32 %v2283, 1.442695
        %v2310 = vpow.pop %v2309
        %v2311 = vmul.f32 %v2284, 1.442695
        %v2312 = vpow.pop %v2311
        %v2313 = vmul.f32 %v2285, 1.442695
        %v2314 = vpow.pop %v2313
        %v2315 = vmul.f32 %v2286, 1.442695
        %v2316 = vpow.pop %v2315
        %v2317 = vmul.f32 %v2287, 1.442695
        %v2318 = vpow.pop %v2317
        %v2319 = vmul.f32 %v2288, 1.442695
        %v2320 = vpow.pop %v2319
        %v2321 = vsel %vm868, %v2290, 0.0
        %2322 = vadd.xlane.f32.xlu0 %v2321
        %v2323 = vpop.xlane.xlu0 %2322
        %v2324 = vsel %vm868, %v2292, 0.0
        %2325 = vadd.xlane.f32.xlu0 %v2324
        %v2326 = vpop.xlane.xlu0 %2325
        %v2327 = vsel %vm868, %v2294, 0.0
        %2328 = vadd.xlane.f32.xlu0 %v2327
        %v2329 = vpop.xlane.xlu0 %2328
        %v2330 = vsel %vm868, %v2296, 0.0
        %2331 = vadd.xlane.f32.xlu0 %v2330
        %v2332 = vpop.xlane.xlu0 %2331
        %v2333 = vsel %vm868, %v2298, 0.0
        %2334 = vadd.xlane.f32.xlu0 %v2333
        %v2335 = vpop.xlane.xlu0 %2334
        %v2336 = vsel %vm868, %v2300, 0.0
        %2337 = vadd.xlane.f32.xlu0 %v2336
        %v2338 = vpop.xlane.xlu0 %2337
        %v2339 = vsel %vm868, %v2302, 0.0
        %2340 = vadd.xlane.f32.xlu0 %v2339
        %v2341 = vpop.xlane.xlu0 %2340
        %v2342 = vsel %vm868, %v2304, 0.0
        %2343 = vadd.xlane.f32.xlu0 %v2342
        %v2344 = vpop.xlane.xlu0 %2343
        %v2345 = vsel %vm868, %v2306, 0.0
        %2346 = vadd.xlane.f32.xlu0 %v2345
        %v2347 = vpop.xlane.xlu0 %2346
        %v2348 = vsel %vm868, %v2308, 0.0
        %2349 = vadd.xlane.f32.xlu0 %v2348
        %v2350 = vpop.xlane.xlu0 %2349
        %v2351 = vsel %vm868, %v2310, 0.0
        %2352 = vadd.xlane.f32.xlu0 %v2351
        %v2353 = vpop.xlane.xlu0 %2352
        %v2354 = vsel %vm868, %v2312, 0.0
        %2355 = vadd.xlane.f32.xlu0 %v2354
        %v2356 = vpop.xlane.xlu0 %2355
        %v2357 = vsel %vm868, %v2314, 0.0
        %2358 = vadd.xlane.f32.xlu0 %v2357
        %v2359 = vpop.xlane.xlu0 %2358
        %v2360 = vsel %vm868, %v2316, 0.0
        %2361 = vadd.xlane.f32.xlu0 %v2360
        %v2362 = vpop.xlane.xlu0 %2361
        %v2363 = vsel %vm868, %v2318, 0.0
        %2364 = vadd.xlane.f32.xlu0 %v2363
        %v2365 = vpop.xlane.xlu0 %2364
        %v2366 = vsel %vm868, %v2320, 0.0
        %2367 = vadd.xlane.f32.xlu0 %v2366
        %v2368 = vpop.xlane.xlu0 %2367
        %v2369 = vrcp.pop %v2323
        %v2370 = vrcp.pop %v2326
        %v2371 = vrcp.pop %v2329
        %v2372 = vrcp.pop %v2332
        %v2373 = vrcp.pop %v2335
        %v2374 = vrcp.pop %v2338
        %v2375 = vrcp.pop %v2341
        %v2376 = vrcp.pop %v2344
        %v2377 = vrcp.pop %v2347
        %v2378 = vrcp.pop %v2350
        %v2379 = vrcp.pop %v2353
        %v2380 = vrcp.pop %v2356
        %v2381 = vrcp.pop %v2359
        %v2382 = vrcp.pop %v2362
        %v2383 = vrcp.pop %v2365
        %v2384 = vrcp.pop %v2368
        %v2385 = vmul.f32 %v2290, %v2369
        %v2386 = vmul.f32 %v2292, %v2370
        %v2387 = vmul.f32 %v2294, %v2371
        %v2388 = vmul.f32 %v2296, %v2372
        %v2389 = vmul.f32 %v2298, %v2373
        %v2390 = vmul.f32 %v2300, %v2374
        %v2391 = vmul.f32 %v2302, %v2375
        %v2392 = vmul.f32 %v2304, %v2376
        %v2393 = vmul.f32 %v2306, %v2377
        %v2394 = vmul.f32 %v2308, %v2378
        %v2395 = vmul.f32 %v2310, %v2379
        %v2396 = vmul.f32 %v2312, %v2380
        %v2397 = vmul.f32 %v2314, %v2381
        %v2398 = vmul.f32 %v2316, %v2382
        %v2399 = vmul.f32 %v2318, %v2383
        %v2400 = vmul.f32 %v2320, %v2384
        %v2401 = vlog2.pop %v2323
        %v2402 = vmul.f32 %v2401, 0.6931472
        %v2403 = vlog2.pop %v2326
        %v2404 = vmul.f32 %v2403, 0.6931472
        %v2405 = vlog2.pop %v2329
        %v2406 = vmul.f32 %v2405, 0.6931472
        %v2407 = vlog2.pop %v2332
        %v2408 = vmul.f32 %v2407, 0.6931472
        %v2409 = vlog2.pop %v2335
        %v2410 = vmul.f32 %v2409, 0.6931472
        %v2411 = vlog2.pop %v2338
        %v2412 = vmul.f32 %v2411, 0.6931472
        %v2413 = vlog2.pop %v2341
        %v2414 = vmul.f32 %v2413, 0.6931472
        %v2415 = vlog2.pop %v2344
        %v2416 = vmul.f32 %v2415, 0.6931472
        %v2417 = vlog2.pop %v2347
        %v2418 = vmul.f32 %v2417, 0.6931472
        %v2419 = vlog2.pop %v2350
        %v2420 = vmul.f32 %v2419, 0.6931472
        %v2421 = vlog2.pop %v2353
        %v2422 = vmul.f32 %v2421, 0.6931472
        %v2423 = vlog2.pop %v2356
        %v2424 = vmul.f32 %v2423, 0.6931472
        %v2425 = vlog2.pop %v2359
        %v2426 = vmul.f32 %v2425, 0.6931472
        %v2427 = vlog2.pop %v2362
        %v2428 = vmul.f32 %v2427, 0.6931472
        %v2429 = vlog2.pop %v2365
        %v2430 = vmul.f32 %v2429, 0.6931472
        %v2431 = vlog2.pop %v2368
        %v2432 = vmul.f32 %v2431, 0.6931472
        %v2433 = vsub.f32 %v2273, %v2402
        %v2434 = vsub.f32 %v2274, %v2404
        %v2435 = vsub.f32 %v2275, %v2406
        %v2436 = vsub.f32 %v2276, %v2408
        %v2437 = vsub.f32 %v2277, %v2410
        %v2438 = vsub.f32 %v2278, %v2412
        %v2439 = vsub.f32 %v2279, %v2414
        %v2440 = vsub.f32 %v2280, %v2416
        %v2441 = vsub.f32 %v2281, %v2418
        %v2442 = vsub.f32 %v2282, %v2420
        %v2443 = vsub.f32 %v2283, %v2422
        %v2444 = vsub.f32 %v2284, %v2424
        %v2445 = vsub.f32 %v2285, %v2426
        %v2446 = vsub.f32 %v2286, %v2428
        %v2447 = vsub.f32 %v2287, %v2430
        %v2448 = vsub.f32 %v2288, %v2432
        %v2449 = vpack.c.bf16 %v2386, %v2385
        %v2450 = vpack.c.bf16 %v2388, %v2387
        %v2451 = vpack.c.bf16 %v2390, %v2389
        %v2452 = vpack.c.bf16 %v2392, %v2391
        %v2453 = vpack.c.bf16 %v2394, %v2393
        %v2454 = vpack.c.bf16 %v2396, %v2395
        %v2455 = vpack.c.bf16 %v2398, %v2397
        %v2456 = vpack.c.bf16 %v2400, %v2399
        %2457 = vxpose.xlu0.c.b16.start [1/8] %v2449, 128
        %2458 = vxpose.xlu0.c.b16.cont [2/8] %v2450, 128
        %2459 = vxpose.xlu0.c.b16.cont [3/8] %v2451, 128
        %2460 = vxpose.xlu0.c.b16.cont [4/8] %v2452, 128
        %2461 = vxpose.xlu0.c.b16.cont [5/8] %v2453, 128
        %2462 = vxpose.xlu0.c.b16.cont [6/8] %v2454, 128
        %2463 = vxpose.xlu0.c.b16.cont [7/8] %v2455, 128
        %2464 = vxpose.xlu0.c.b16.end [8/8] %v2456, 128
        %v2465 = vpop.trf.xlu0
        %v2466 = vpop.trf.xlu0
        %v2467 = vpop.trf.xlu0
        %v2468 = vpop.trf.xlu0
        %v2469 = vpop.trf.xlu0
        %v2470 = vpop.trf.xlu0
        %v2471 = vpop.trf.xlu0
        %v2472 = vpop.trf.xlu0
        %2473 = vmatpush.bf16.msra.mxu0 %v1803
        %2474 = vmatpush.bf16.msra.mxu0 %v1802
        %2475 = vmatpush.bf16.msra.mxu0 %v1801
        %2476 = vmatpush.bf16.msra.mxu0 %v1800
        %2477 = vmatpush.bf16.msra.mxu0 %v1799
        %2478 = vmatpush.bf16.msra.mxu0 %v1798
        %2479 = vmatpush.bf16.msra.mxu0 %v1797
        %2480 = vmatpush.bf16.msra.mxu0 %v1796
        %2481 = vmatmul.bf16.gmra.mxu0 %v2465
        %v2482 = vpop.f32.mrf.mxu0
        %v2483 = vadd.f32 0.0, %v2482
        %v2484 = vpop.f32.mrf.mxu0
        %v2485 = vadd.f32 0.0, %v2484
        %2486 = vmatmul.bf16.gmra.mxu0 %v2466
        %v2487 = vpop.f32.mrf.mxu0
        %v2488 = vadd.f32 0.0, %v2487
        %v2489 = vpop.f32.mrf.mxu0
        %v2490 = vadd.f32 0.0, %v2489
        %2491 = vdwg.mxu0
        %s2492 = scalar_lea.vmem %s457, 32 [#allocation7]
        %2493 = vst [vmem:[%s2492] sm:$0xff] %v2483
        %2494 = vst [vmem:[%s2492 + $0x8] sm:$0xff] %v2485
        %2495 = vst [vmem:[%s2492 + $0x10] sm:$0xff] %v2488
        %2496 = vst [vmem:[%s2492 + $0x18] sm:$0xff] %v2490
        %2497 = vmatpush.bf16.msra.mxu0 %v1755
        %2498 = vmatpush.bf16.msra.mxu0 %v1754
        %2499 = vmatpush.bf16.msra.mxu0 %v1753
        %2500 = vmatpush.bf16.msra.mxu0 %v1752
        %2501 = vmatpush.bf16.msra.mxu0 %v1751
        %2502 = vmatpush.bf16.msra.mxu0 %v1750
        %2503 = vmatpush.bf16.msra.mxu0 %v1749
        %2504 = vmatpush.bf16.msra.mxu0 %v1748
        %2505 = vmatmul.bf16.gmra.mxu0 %v2465
        %v2506 = vpop.f32.mrf.mxu0
        %v2507 = vadd.f32 0.0, %v2506
        %v2508 = vpop.f32.mrf.mxu0
        %v2509 = vadd.f32 0.0, %v2508
        %2510 = vmatmul.bf16.gmra.mxu0 %v2466
        %v2511 = vpop.f32.mrf.mxu0
        %v2512 = vadd.f32 0.0, %v2511
        %v2513 = vpop.f32.mrf.mxu0
        %v2514 = vadd.f32 0.0, %v2513
        %2515 = vdwg.mxu0
        %2516 = vmatpush.msra.mxu0 %v2400
        %2517 = vmatpush.msra.mxu0 %v2399
        %2518 = vmatpush.msra.mxu0 %v2398
        %2519 = vmatpush.msra.mxu0 %v2397
        %2520 = vmatpush.msra.mxu0 %v2396
        %2521 = vmatpush.msra.mxu0 %v2395
        %2522 = vmatpush.msra.mxu0 %v2394
        %2523 = vmatpush.msra.mxu0 %v2393
        %2524 = vmatpush.msra.mxu0 %v2392
        %2525 = vmatpush.msra.mxu0 %v2391
        %2526 = vmatpush.msra.mxu0 %v2390
        %2527 = vmatpush.msra.mxu0 %v2389
        %2528 = vmatpush.msra.mxu0 %v2388
        %2529 = vmatpush.msra.mxu0 %v2387
        %2530 = vmatpush.msra.mxu0 %v2386
        %2531 = vmatpush.msra.mxu0 %v2385
        %2532 = vmatmul.f32.gmra.mxu0 %v2507
        %v2533 = vpop.f32.mrf.mxu0
        %v2534 = vadd.f32 0.0, %v2533
        %2535 = vmatmul.f32.gmra.mxu0 %v2509
        %v2536 = vpop.f32.mrf.mxu0
        %v2537 = vadd.f32 0.0, %v2536
        %2538 = vmatmul.f32.gmra.mxu0 %v2512
        %v2539 = vpop.f32.mrf.mxu0
        %v2540 = vadd.f32 0.0, %v2539
        %2541 = vmatmul.f32.gmra.mxu0 %v2514
        %v2542 = vpop.f32.mrf.mxu0
        %v2543 = vadd.f32 0.0, %v2542
        %2544 = vdwg.mxu0
        %s2545 = scalar_lea.vmem %s464, 32 [#allocation8]
        %2546 = vst.msk [vmem:[%s2545] sm:$0xff] %vm868, %v2534
        %2547 = vst.msk [vmem:[%s2545 + $0x8] sm:$0xff] %vm868, %v2537
        %2548 = vst.msk [vmem:[%s2545 + $0x10] sm:$0xff] %vm868, %v2540
        %2549 = vst.msk [vmem:[%s2545 + $0x18] sm:$0xff] %vm868, %v2543
        %v2550 = vunpack.c.l.bf16 %v1684
        %v2551 = vunpack.c.l.bf16 %v1685
        %v2552 = vunpack.c.l.bf16 %v1686
        %v2553 = vunpack.c.l.bf16 %v1687
        %v2554 = vunpack.c.l.bf16 %v1688
        %v2555 = vunpack.c.l.bf16 %v1689
        %v2556 = vunpack.c.l.bf16 %v1690
        %v2557 = vunpack.c.l.bf16 %v1691
        %v2558 = vunpack.c.l.bf16 %v1692
        %v2559 = vunpack.c.l.bf16 %v1693
        %v2560 = vunpack.c.l.bf16 %v1694
        %v2561 = vunpack.c.l.bf16 %v1695
        %v2562 = vunpack.c.l.bf16 %v1696
        %v2563 = vunpack.c.l.bf16 %v1697
        %v2564 = vunpack.c.l.bf16 %v1698
        %v2565 = vunpack.c.l.bf16 %v1699
        %v2566 = vmul.f32 %v2550, %v2550
        %v2567 = vmul.f32 %v2551, %v2551
        %v2568 = vmul.f32 %v2552, %v2552
        %v2569 = vmul.f32 %v2553, %v2553
        %v2570 = vmul.f32 %v2554, %v2554
        %v2571 = vmul.f32 %v2555, %v2555
        %v2572 = vmul.f32 %v2556, %v2556
        %v2573 = vmul.f32 %v2557, %v2557
        %v2574 = vmul.f32 %v2558, %v2558
        %v2575 = vmul.f32 %v2559, %v2559
        %v2576 = vmul.f32 %v2560, %v2560
        %v2577 = vmul.f32 %v2561, %v2561
        %v2578 = vmul.f32 %v2562, %v2562
        %v2579 = vmul.f32 %v2563, %v2563
        %v2580 = vmul.f32 %v2564, %v2564
        %v2581 = vmul.f32 %v2565, %v2565
        %2582 = vadd.xlane.f32.xlu0 %v2566
        %v2583 = vpop.xlane.xlu0 %2582
        %2584 = vadd.xlane.f32.xlu0 %v2567
        %v2585 = vpop.xlane.xlu0 %2584
        %2586 = vadd.xlane.f32.xlu0 %v2568
        %v2587 = vpop.xlane.xlu0 %2586
        %2588 = vadd.xlane.f32.xlu0 %v2569
        %v2589 = vpop.xlane.xlu0 %2588
        %2590 = vadd.xlane.f32.xlu0 %v2570
        %v2591 = vpop.xlane.xlu0 %2590
        %2592 = vadd.xlane.f32.xlu0 %v2571
        %v2593 = vpop.xlane.xlu0 %2592
        %2594 = vadd.xlane.f32.xlu0 %v2572
        %v2595 = vpop.xlane.xlu0 %2594
        %2596 = vadd.xlane.f32.xlu0 %v2573
        %v2597 = vpop.xlane.xlu0 %2596
        %2598 = vadd.xlane.f32.xlu0 %v2574
        %v2599 = vpop.xlane.xlu0 %2598
        %2600 = vadd.xlane.f32.xlu0 %v2575
        %v2601 = vpop.xlane.xlu0 %2600
        %2602 = vadd.xlane.f32.xlu0 %v2576
        %v2603 = vpop.xlane.xlu0 %2602
        %2604 = vadd.xlane.f32.xlu0 %v2577
        %v2605 = vpop.xlane.xlu0 %2604
        %2606 = vadd.xlane.f32.xlu0 %v2578
        %v2607 = vpop.xlane.xlu0 %2606
        %2608 = vadd.xlane.f32.xlu0 %v2579
        %v2609 = vpop.xlane.xlu0 %2608
        %2610 = vadd.xlane.f32.xlu0 %v2580
        %v2611 = vpop.xlane.xlu0 %2610
        %2612 = vadd.xlane.f32.xlu0 %v2581
        %v2613 = vpop.xlane.xlu0 %2612
        %v2614 = vadd.f32 %v2583, %v2585
        %v2615 = vadd.f32 %v2614, %v2587
        %v2616 = vadd.f32 %v2615, %v2589
        %v2617 = vadd.f32 %v2616, %v2591
        %v2618 = vadd.f32 %v2617, %v2593
        %v2619 = vadd.f32 %v2618, %v2595
        %v2620 = vadd.f32 %v2619, %v2597
        %v2621 = vadd.f32 %v2620, %v2599
        %v2622 = vadd.f32 %v2621, %v2601
        %v2623 = vadd.f32 %v2622, %v2603
        %v2624 = vadd.f32 %v2623, %v2605
        %v2625 = vadd.f32 %v2624, %v2607
        %v2626 = vadd.f32 %v2625, %v2609
        %v2627 = vadd.f32 %v2626, %v2611
        %v2628 = vadd.f32 %v2627, %v2613
        %v2629 = vrot.slane %v2628, 4
        %v2630 = vadd.f32 %v2628, %v2629
        %v2631 = vrot.slane %v2630, 2
        %v2632 = vadd.f32 %v2630, %v2631
        %v2633 = vrot.slane %v2632, 1
        %v2634 = vadd.f32 %v2632, %v2633
        %v2635 = vmul.f32 %v2534, %v527
        %v2636 = vmul.f32 %v2537, %v528
        %v2637 = vmul.f32 %v2540, %v529
        %v2638 = vmul.f32 %v2543, %v530
        %v2639 = vsel %vm868, %v2635, 0.0
        %2640 = vadd.xlane.f32.xlu0 %v2639
        %v2641 = vpop.xlane.xlu0 %2640
        %v2642 = vsel %vm868, %v2636, 0.0
        %2643 = vadd.xlane.f32.xlu0 %v2642
        %v2644 = vpop.xlane.xlu0 %2643
        %v2645 = vsel %vm868, %v2637, 0.0
        %2646 = vadd.xlane.f32.xlu0 %v2645
        %v2647 = vpop.xlane.xlu0 %2646
        %v2648 = vsel %vm868, %v2638, 0.0
        %2649 = vadd.xlane.f32.xlu0 %v2648
        %v2650 = vpop.xlane.xlu0 %2649
        %v2651 = vadd.f32 %v2641, %v2644
        %v2652 = vadd.f32 %v2651, %v2647
        %v2653 = vadd.f32 %v2652, %v2650
        %v2654 = vrot.slane %v2653, 4
        %v2655 = vadd.f32 %v2653, %v2654
        %v2656 = vrot.slane %v2655, 2
        %v2657 = vadd.f32 %v2655, %v2656
        %v2658 = vrot.slane %v2657, 1
        %v2659 = vadd.f32 %v2657, %v2658
        %2660 = vmatpush.bf16.msra.mxu0 %v2456
        %2661 = vmatpush.bf16.msra.mxu0 %v2455
        %2662 = vmatpush.bf16.msra.mxu0 %v2454
        %2663 = vmatpush.bf16.msra.mxu0 %v2453
        %2664 = vmatpush.bf16.msra.mxu0 %v2452
        %2665 = vmatpush.bf16.msra.mxu0 %v2451
        %2666 = vmatpush.bf16.msra.mxu0 %v2450
        %2667 = vmatpush.bf16.msra.mxu0 %v2449
        %2668 = vmatmul.bf16.gmra.mxu0 %v2465
        %v2669 = vpop.f32.mrf.mxu0
        %v2670 = vadd.f32 0.0, %v2669
        %v2671 = vpop.f32.mrf.mxu0
        %v2672 = vadd.f32 0.0, %v2671
        %2673 = vmatmul.bf16.gmra.mxu0 %v2466
        %v2674 = vpop.f32.mrf.mxu0
        %v2675 = vadd.f32 0.0, %v2674
        %v2676 = vpop.f32.mrf.mxu0
        %v2677 = vadd.f32 0.0, %v2676
        %2678 = vdwg.mxu0
        %v2679 = vmul.f32 %v2659, 2.0
        %v2680 = vsub.f32 %v2634, %v2679
        %v2681 = vmul.f32 %v2670, %v2670
        %v2682 = vmul.f32 %v2672, %v2672
        %v2683 = vmul.f32 %v2675, %v2675
        %v2684 = vmul.f32 %v2677, %v2677
        %v2685 = vsel %vm868, %v2681, 0.0
        %2686 = vadd.xlane.f32.xlu0 %v2685
        %v2687 = vpop.xlane.xlu0 %2686
        %v2688 = vsel %vm868, %v2682, 0.0
        %2689 = vadd.xlane.f32.xlu0 %v2688
        %v2690 = vpop.xlane.xlu0 %2689
        %v2691 = vsel %vm868, %v2683, 0.0
        %2692 = vadd.xlane.f32.xlu0 %v2691
        %v2693 = vpop.xlane.xlu0 %2692
        %v2694 = vsel %vm868, %v2684, 0.0
        %2695 = vadd.xlane.f32.xlu0 %v2694
        %v2696 = vpop.xlane.xlu0 %2695
        %v2697 = vadd.f32 %v2687, %v2690
        %v2698 = vadd.f32 %v2697, %v2693
        %v2699 = vadd.f32 %v2698, %v2696
        %v2700 = vrot.slane %v2699, 4
        %v2701 = vadd.f32 %v2699, %v2700
        %v2702 = vrot.slane %v2701, 2
        %v2703 = vadd.f32 %v2701, %v2702
        %v2704 = vrot.slane %v2703, 1
        %v2705 = vadd.f32 %v2703, %v2704
        %v2706 = vadd.f32 %v2680, %v2705
        %v2707 = vmul.f32 %v2385, %v2433
        %v2708 = vmul.f32 %v2386, %v2434
        %v2709 = vmul.f32 %v2387, %v2435
        %v2710 = vmul.f32 %v2388, %v2436
        %v2711 = vmul.f32 %v2389, %v2437
        %v2712 = vmul.f32 %v2390, %v2438
        %v2713 = vmul.f32 %v2391, %v2439
        %v2714 = vmul.f32 %v2392, %v2440
        %v2715 = vmul.f32 %v2393, %v2441
        %v2716 = vmul.f32 %v2394, %v2442
        %v2717 = vmul.f32 %v2395, %v2443
        %v2718 = vmul.f32 %v2396, %v2444
        %v2719 = vmul.f32 %v2397, %v2445
        %v2720 = vmul.f32 %v2398, %v2446
        %v2721 = vmul.f32 %v2399, %v2447
        %v2722 = vmul.f32 %v2400, %v2448
        %v2723 = vsel %vm868, %v2707, 0.0
        %2724 = vadd.xlane.f32.xlu0 %v2723
        %v2725 = vpop.xlane.xlu0 %2724
        %v2726 = vsel %vm868, %v2708, 0.0
        %2727 = vadd.xlane.f32.xlu0 %v2726
        %v2728 = vpop.xlane.xlu0 %2727
        %v2729 = vsel %vm868, %v2709, 0.0
        %2730 = vadd.xlane.f32.xlu0 %v2729
        %v2731 = vpop.xlane.xlu0 %2730
        %v2732 = vsel %vm868, %v2710, 0.0
        %2733 = vadd.xlane.f32.xlu0 %v2732
        %v2734 = vpop.xlane.xlu0 %2733
        %v2735 = vsel %vm868, %v2711, 0.0
        %2736 = vadd.xlane.f32.xlu0 %v2735
        %v2737 = vpop.xlane.xlu0 %2736
        %v2738 = vsel %vm868, %v2712, 0.0
        %2739 = vadd.xlane.f32.xlu0 %v2738
        %v2740 = vpop.xlane.xlu0 %2739
        %v2741 = vsel %vm868, %v2713, 0.0
        %2742 = vadd.xlane.f32.xlu0 %v2741
        %v2743 = vpop.xlane.xlu0 %2742
        %v2744 = vsel %vm868, %v2714, 0.0
        %2745 = vadd.xlane.f32.xlu0 %v2744
        %v2746 = vpop.xlane.xlu0 %2745
        %v2747 = vsel %vm868, %v2715, 0.0
        %2748 = vadd.xlane.f32.xlu0 %v2747
        %v2749 = vpop.xlane.xlu0 %2748
        %v2750 = vsel %vm868, %v2716, 0.0
        %2751 = vadd.xlane.f32.xlu0 %v2750
        %v2752 = vpop.xlane.xlu0 %2751
        %v2753 = vsel %vm868, %v2717, 0.0
        %2754 = vadd.xlane.f32.xlu0 %v2753
        %v2755 = vpop.xlane.xlu0 %2754
        %v2756 = vsel %vm868, %v2718, 0.0
        %2757 = vadd.xlane.f32.xlu0 %v2756
        %v2758 = vpop.xlane.xlu0 %2757
        %v2759 = vsel %vm868, %v2719, 0.0
        %2760 = vadd.xlane.f32.xlu0 %v2759
        %v2761 = vpop.xlane.xlu0 %2760
        %v2762 = vsel %vm868, %v2720, 0.0
        %2763 = vadd.xlane.f32.xlu0 %v2762
        %v2764 = vpop.xlane.xlu0 %2763
        %v2765 = vsel %vm868, %v2721, 0.0
        %2766 = vadd.xlane.f32.xlu0 %v2765
        %v2767 = vpop.xlane.xlu0 %2766
        %v2768 = vsel %vm868, %v2722, 0.0
        %2769 = vadd.xlane.f32.xlu0 %v2768
        %v2770 = vpop.xlane.xlu0 %2769
        %v2771 = vadd.f32 %v2725, %v2728
        %v2772 = vadd.f32 %v2771, %v2731
        %v2773 = vadd.f32 %v2772, %v2734
        %v2774 = vadd.f32 %v2773, %v2737
        %v2775 = vadd.f32 %v2774, %v2740
        %v2776 = vadd.f32 %v2775, %v2743
        %v2777 = vadd.f32 %v2776, %v2746
        %v2778 = vadd.f32 %v2777, %v2749
        %v2779 = vadd.f32 %v2778, %v2752
        %v2780 = vadd.f32 %v2779, %v2755
        %v2781 = vadd.f32 %v2780, %v2758
        %v2782 = vadd.f32 %v2781, %v2761
        %v2783 = vadd.f32 %v2782, %v2764
        %v2784 = vadd.f32 %v2783, %v2767
        %v2785 = vadd.f32 %v2784, %v2770
        %v2786 = vrot.slane %v2785, 4
        %v2787 = vadd.f32 %v2785, %v2786
        %v2788 = vrot.slane %v2787, 2
        %v2789 = vadd.f32 %v2787, %v2788
        %v2790 = vrot.slane %v2789, 1
        %v2791 = vadd.f32 %v2789, %v2790
        %v2792 = vsub.f32 0.0, %v2791
        %s2793 = scalar_lea.vmem %s471, 1 [#allocation10]
        %2794 = vst [vmem:[%s2793] sm:$0x1] %v2706
        %s2795 = scalar_lea.vmem %s478, 1 [#allocation11]
        %2796 = vst [vmem:[%s2795] sm:$0x1] %v2792
        %s2797 = scalar_lea.vmem %s409, 128 [#allocation2]
        %v2798 = vld [vmem:[%s2797] sm:$0xf]
        %v2799 = vld [vmem:[%s2797 + $0x4] sm:$0xf]
        %v2800 = vld [vmem:[%s2797 + $0x8] sm:$0xf]
        %v2801 = vld [vmem:[%s2797 + $0xc] sm:$0xf]
        %v2802 = vld [vmem:[%s2797 + $0x10] sm:$0xf]
        %v2803 = vld [vmem:[%s2797 + $0x14] sm:$0xf]
        %v2804 = vld [vmem:[%s2797 + $0x18] sm:$0xf]
        %v2805 = vld [vmem:[%s2797 + $0x1c] sm:$0xf]
        %v2806 = vld [vmem:[%s2797 + $0x20] sm:$0xf]
        %v2807 = vld [vmem:[%s2797 + $0x24] sm:$0xf]
        %v2808 = vld [vmem:[%s2797 + $0x28] sm:$0xf]
        %v2809 = vld [vmem:[%s2797 + $0x2c] sm:$0xf]
        %v2810 = vld [vmem:[%s2797 + $0x30] sm:$0xf]
        %v2811 = vld [vmem:[%s2797 + $0x34] sm:$0xf]
        %v2812 = vld [vmem:[%s2797 + $0x38] sm:$0xf]
        %v2813 = vld [vmem:[%s2797 + $0x3c] sm:$0xf]
        %s2814 = scalar_lea.vmem %s419, 128 [#allocation5]
        %v2815 = vld [vmem:[%s2814] sm:$0xf]
        %v2816 = vld [vmem:[%s2814 + $0x4] sm:$0xf]
        %v2817 = vld [vmem:[%s2814 + $0x8] sm:$0xf]
        %v2818 = vld [vmem:[%s2814 + $0xc] sm:$0xf]
        %v2819 = vld [vmem:[%s2814 + $0x10] sm:$0xf]
        %v2820 = vld [vmem:[%s2814 + $0x14] sm:$0xf]
        %v2821 = vld [vmem:[%s2814 + $0x18] sm:$0xf]
        %v2822 = vld [vmem:[%s2814 + $0x1c] sm:$0xf]
        %v2823 = vld [vmem:[%s2814 + $0x20] sm:$0xf]
        %v2824 = vld [vmem:[%s2814 + $0x24] sm:$0xf]
        %v2825 = vld [vmem:[%s2814 + $0x28] sm:$0xf]
        %v2826 = vld [vmem:[%s2814 + $0x2c] sm:$0xf]
        %v2827 = vld [vmem:[%s2814 + $0x30] sm:$0xf]
        %v2828 = vld [vmem:[%s2814 + $0x34] sm:$0xf]
        %v2829 = vld [vmem:[%s2814 + $0x38] sm:$0xf]
        %v2830 = vld [vmem:[%s2814 + $0x3c] sm:$0xf]
        %v2831 = vunpack.c.l.bf16 %v2798
        %v2832 = vunpack.c.l.bf16 %v2799
        %v2833 = vunpack.c.l.bf16 %v2800
        %v2834 = vunpack.c.l.bf16 %v2801
        %v2835 = vunpack.c.l.bf16 %v2802
        %v2836 = vunpack.c.l.bf16 %v2803
        %v2837 = vunpack.c.l.bf16 %v2804
        %v2838 = vunpack.c.l.bf16 %v2805
        %v2839 = vunpack.c.l.bf16 %v2806
        %v2840 = vunpack.c.l.bf16 %v2807
        %v2841 = vunpack.c.l.bf16 %v2808
        %v2842 = vunpack.c.l.bf16 %v2809
        %v2843 = vunpack.c.l.bf16 %v2810
        %v2844 = vunpack.c.l.bf16 %v2811
        %v2845 = vunpack.c.l.bf16 %v2812
        %v2846 = vunpack.c.l.bf16 %v2813
        %v2863 = vunpack.c.l.b16 %v2815
        %v2864 = vunpack.c.l.b16 %v2816
        %v2865 = vunpack.c.l.b16 %v2817
        %v2866 = vunpack.c.l.b16 %v2818
        %v2867 = vunpack.c.l.b16 %v2819
        %v2868 = vunpack.c.l.b16 %v2820
        %v2869 = vunpack.c.l.b16 %v2821
        %v2870 = vunpack.c.l.b16 %v2822
        %v2871 = vunpack.c.l.b16 %v2823
        %v2872 = vunpack.c.l.b16 %v2824
        %v2873 = vunpack.c.l.b16 %v2825
        %v2874 = vunpack.c.l.b16 %v2826
        %v2875 = vunpack.c.l.b16 %v2827
        %v2876 = vunpack.c.l.b16 %v2828
        %v2877 = vunpack.c.l.b16 %v2829
        %v2878 = vunpack.c.l.b16 %v2830
        %v2879 = vpack.c.b16 %v2864, %v2863
        %v2880 = vpack.c.b16 %v2866, %v2865
        %v2881 = vpack.c.b16 %v2868, %v2867
        %v2882 = vpack.c.b16 %v2870, %v2869
        %v2883 = vpack.c.b16 %v2872, %v2871
        %v2884 = vpack.c.b16 %v2874, %v2873
        %v2885 = vpack.c.b16 %v2876, %v2875
        %v2886 = vpack.c.b16 %v2878, %v2877
        %v2911 = vunpack.c.l.b16 %v2798
        %v2912 = vunpack.c.l.b16 %v2799
        %v2913 = vunpack.c.l.b16 %v2800
        %v2914 = vunpack.c.l.b16 %v2801
        %v2915 = vunpack.c.l.b16 %v2802
        %v2916 = vunpack.c.l.b16 %v2803
        %v2917 = vunpack.c.l.b16 %v2804
        %v2918 = vunpack.c.l.b16 %v2805
        %v2919 = vunpack.c.l.b16 %v2806
        %v2920 = vunpack.c.l.b16 %v2807
        %v2921 = vunpack.c.l.b16 %v2808
        %v2922 = vunpack.c.l.b16 %v2809
        %v2923 = vunpack.c.l.b16 %v2810
        %v2924 = vunpack.c.l.b16 %v2811
        %v2925 = vunpack.c.l.b16 %v2812
        %v2926 = vunpack.c.l.b16 %v2813
        %v2927 = vpack.c.b16 %v2912, %v2911
        %v2928 = vpack.c.b16 %v2914, %v2913
        %v2929 = vpack.c.b16 %v2916, %v2915
        %v2930 = vpack.c.b16 %v2918, %v2917
        %v2931 = vpack.c.b16 %v2920, %v2919
        %v2932 = vpack.c.b16 %v2922, %v2921
        %v2933 = vpack.c.b16 %v2924, %v2923
        %v2934 = vpack.c.b16 %v2926, %v2925
        %2943 = vmatpush.bf16.msra.mxu0 %v2934
        %2944 = vmatpush.bf16.msra.mxu0 %v2933
        %2945 = vmatpush.bf16.msra.mxu0 %v2932
        %2946 = vmatpush.bf16.msra.mxu0 %v2931
        %2947 = vmatpush.bf16.msra.mxu0 %v2930
        %2948 = vmatpush.bf16.msra.mxu0 %v2929
        %2949 = vmatpush.bf16.msra.mxu0 %v2928
        %2950 = vmatpush.bf16.msra.mxu0 %v2927
        %2951 = vmatmul.bf16.gmra.mxu0 %v2879
        %v2952 = vpop.f32.mrf.mxu0
        %v2953 = vadd.f32 %v2831, %v2952
        %v2954 = vpop.f32.mrf.mxu0
        %v2955 = vadd.f32 %v2832, %v2954
        %2956 = vmatmul.bf16.gmra.mxu0 %v2880
        %v2957 = vpop.f32.mrf.mxu0
        %v2958 = vadd.f32 %v2833, %v2957
        %v2959 = vpop.f32.mrf.mxu0
        %v2960 = vadd.f32 %v2834, %v2959
        %2961 = vmatmul.bf16.gmra.mxu0 %v2881
        %v2962 = vpop.f32.mrf.mxu0
        %v2963 = vadd.f32 %v2835, %v2962
        %v2964 = vpop.f32.mrf.mxu0
        %v2965 = vadd.f32 %v2836, %v2964
        %2966 = vmatmul.bf16.gmra.mxu0 %v2882
        %v2967 = vpop.f32.mrf.mxu0
        %v2968 = vadd.f32 %v2837, %v2967
        %v2969 = vpop.f32.mrf.mxu0
        %v2970 = vadd.f32 %v2838, %v2969
        %2971 = vmatmul.bf16.gmra.mxu0 %v2883
        %v2972 = vpop.f32.mrf.mxu0
        %v2973 = vadd.f32 %v2839, %v2972
        %v2974 = vpop.f32.mrf.mxu0
        %v2975 = vadd.f32 %v2840, %v2974
        %2976 = vmatmul.bf16.gmra.mxu0 %v2884
        %v2977 = vpop.f32.mrf.mxu0
        %v2978 = vadd.f32 %v2841, %v2977
        %v2979 = vpop.f32.mrf.mxu0
        %v2980 = vadd.f32 %v2842, %v2979
        %2981 = vmatmul.bf16.gmra.mxu0 %v2885
        %v2982 = vpop.f32.mrf.mxu0
        %v2983 = vadd.f32 %v2843, %v2982
        %v2984 = vpop.f32.mrf.mxu0
        %v2985 = vadd.f32 %v2844, %v2984
        %2986 = vmatmul.bf16.gmra.mxu0 %v2886
        %v2987 = vpop.f32.mrf.mxu0
        %v2988 = vadd.f32 %v2845, %v2987
        %v2989 = vpop.f32.mrf.mxu0
        %v2990 = vadd.f32 %v2846, %v2989
        %2991 = vdwg.mxu0
        %2992 = vmatpush.msra.mxu0 %v500
        %2993 = vmatpush.msra.mxu0 %v499
        %2994 = vmatpush.msra.mxu0 %v498
        %2995 = vmatpush.msra.mxu0 %v497
        %2996 = vmatpush.msra.mxu0 %v496
        %2997 = vmatpush.msra.mxu0 %v495
        %2998 = vmatpush.msra.mxu0 %v494
        %2999 = vmatpush.msra.mxu0 %v493
        %3000 = vmatpush.msra.mxu0 %v492
        %3001 = vmatpush.msra.mxu0 %v491
        %3002 = vmatpush.msra.mxu0 %v490
        %3003 = vmatpush.msra.mxu0 %v489
        %3004 = vmatpush.msra.mxu0 %v488
        %3005 = vmatpush.msra.mxu0 %v487
        %3006 = vmatpush.msra.mxu0 %v486
        %3007 = vmatpush.msra.mxu0 %v485
        %3008 = vmatmul.f32.gmra.mxu0 %v2953
        %v3009 = vpop.f32.mrf.mxu0
        %v3010 = vadd.f32 %v725, %v3009
        %3011 = vmatmul.f32.gmra.mxu0 %v2955
        %v3012 = vpop.f32.mrf.mxu0
        %v3013 = vadd.f32 %v725, %v3012
        %3014 = vmatmul.f32.gmra.mxu0 %v2958
        %v3015 = vpop.f32.mrf.mxu0
        %v3016 = vadd.f32 %v725, %v3015
        %3017 = vmatmul.f32.gmra.mxu0 %v2960
        %v3018 = vpop.f32.mrf.mxu0
        %v3019 = vadd.f32 %v725, %v3018
        %3020 = vmatmul.f32.gmra.mxu0 %v2963
        %v3021 = vpop.f32.mrf.mxu0
        %v3022 = vadd.f32 %v725, %v3021
        %3023 = vmatmul.f32.gmra.mxu0 %v2965
        %v3024 = vpop.f32.mrf.mxu0
        %v3025 = vadd.f32 %v725, %v3024
        %3026 = vmatmul.f32.gmra.mxu0 %v2968
        %v3027 = vpop.f32.mrf.mxu0
        %v3028 = vadd.f32 %v725, %v3027
        %3029 = vmatmul.f32.gmra.mxu0 %v2970
        %v3030 = vpop.f32.mrf.mxu0
        %v3031 = vadd.f32 %v725, %v3030
        %3032 = vmatmul.f32.gmra.mxu0 %v2973
        %v3033 = vpop.f32.mrf.mxu0
        %v3034 = vadd.f32 %v725, %v3033
        %3035 = vmatmul.f32.gmra.mxu0 %v2975
        %v3036 = vpop.f32.mrf.mxu0
        %v3037 = vadd.f32 %v725, %v3036
        %3038 = vmatmul.f32.gmra.mxu0 %v2978
        %v3039 = vpop.f32.mrf.mxu0
        %v3040 = vadd.f32 %v725, %v3039
        %3041 = vmatmul.f32.gmra.mxu0 %v2980
        %v3042 = vpop.f32.mrf.mxu0
        %v3043 = vadd.f32 %v725, %v3042
        %3044 = vmatmul.f32.gmra.mxu0 %v2983
        %v3045 = vpop.f32.mrf.mxu0
        %v3046 = vadd.f32 %v725, %v3045
        %3047 = vmatmul.f32.gmra.mxu0 %v2985
        %v3048 = vpop.f32.mrf.mxu0
        %v3049 = vadd.f32 %v725, %v3048
        %3050 = vmatmul.f32.gmra.mxu0 %v2988
        %v3051 = vpop.f32.mrf.mxu0
        %v3052 = vadd.f32 %v725, %v3051
        %3053 = vmatmul.f32.gmra.mxu0 %v2990
        %v3054 = vpop.f32.mrf.mxu0
        %v3055 = vadd.f32 %v725, %v3054
        %3056 = vdwg.mxu0
        %v3057 = vmax.f32 %v3010, 0.0
        %v3058 = vmax.f32 %v3013, 0.0
        %v3059 = vmax.f32 %v3016, 0.0
        %v3060 = vmax.f32 %v3019, 0.0
        %v3061 = vmax.f32 %v3022, 0.0
        %v3062 = vmax.f32 %v3025, 0.0
        %v3063 = vmax.f32 %v3028, 0.0
        %v3064 = vmax.f32 %v3031, 0.0
        %v3065 = vmax.f32 %v3034, 0.0
        %v3066 = vmax.f32 %v3037, 0.0
        %v3067 = vmax.f32 %v3040, 0.0
        %v3068 = vmax.f32 %v3043, 0.0
        %v3069 = vmax.f32 %v3046, 0.0
        %v3070 = vmax.f32 %v3049, 0.0
        %v3071 = vmax.f32 %v3052, 0.0
        %v3072 = vmax.f32 %v3055, 0.0
        %v3073 = vpack.c.bf16 %v3058, %v3057
        %v3074 = vpack.c.bf16 %v3060, %v3059
        %v3075 = vpack.c.bf16 %v3062, %v3061
        %v3076 = vpack.c.bf16 %v3064, %v3063
        %v3077 = vpack.c.bf16 %v3066, %v3065
        %v3078 = vpack.c.bf16 %v3068, %v3067
        %v3079 = vpack.c.bf16 %v3070, %v3069
        %v3080 = vpack.c.bf16 %v3072, %v3071
        %3081 = vmatpush.bf16.msra.mxu0 %v3080
        %3082 = vmatpush.bf16.msra.mxu0 %v3079
        %3083 = vmatpush.bf16.msra.mxu0 %v3078
        %3084 = vmatpush.bf16.msra.mxu0 %v3077
        %3085 = vmatpush.bf16.msra.mxu0 %v3076
        %3086 = vmatpush.bf16.msra.mxu0 %v3075
        %3087 = vmatpush.bf16.msra.mxu0 %v3074
        %3088 = vmatpush.bf16.msra.mxu0 %v3073
        %3089 = vmatmul.bf16.gmra.mxu0 %v2879
        %v3090 = vpop.f32.mrf.mxu0
        %v3091 = vadd.f32 %v3057, %v3090
        %v3092 = vpop.f32.mrf.mxu0
        %v3093 = vadd.f32 %v3058, %v3092
        %3094 = vmatmul.bf16.gmra.mxu0 %v2880
        %v3095 = vpop.f32.mrf.mxu0
        %v3096 = vadd.f32 %v3059, %v3095
        %v3097 = vpop.f32.mrf.mxu0
        %v3098 = vadd.f32 %v3060, %v3097
        %3099 = vmatmul.bf16.gmra.mxu0 %v2881
        %v3100 = vpop.f32.mrf.mxu0
        %v3101 = vadd.f32 %v3061, %v3100
        %v3102 = vpop.f32.mrf.mxu0
        %v3103 = vadd.f32 %v3062, %v3102
        %3104 = vmatmul.bf16.gmra.mxu0 %v2882
        %v3105 = vpop.f32.mrf.mxu0
        %v3106 = vadd.f32 %v3063, %v3105
        %v3107 = vpop.f32.mrf.mxu0
        %v3108 = vadd.f32 %v3064, %v3107
        %3109 = vmatmul.bf16.gmra.mxu0 %v2883
        %v3110 = vpop.f32.mrf.mxu0
        %v3111 = vadd.f32 %v3065, %v3110
        %v3112 = vpop.f32.mrf.mxu0
        %v3113 = vadd.f32 %v3066, %v3112
        %3114 = vmatmul.bf16.gmra.mxu0 %v2884
        %v3115 = vpop.f32.mrf.mxu0
        %v3116 = vadd.f32 %v3067, %v3115
        %v3117 = vpop.f32.mrf.mxu0
        %v3118 = vadd.f32 %v3068, %v3117
        %3119 = vmatmul.bf16.gmra.mxu0 %v2885
        %v3120 = vpop.f32.mrf.mxu0
        %v3121 = vadd.f32 %v3069, %v3120
        %v3122 = vpop.f32.mrf.mxu0
        %v3123 = vadd.f32 %v3070, %v3122
        %3124 = vmatmul.bf16.gmra.mxu0 %v2886
        %v3125 = vpop.f32.mrf.mxu0
        %v3126 = vadd.f32 %v3071, %v3125
        %v3127 = vpop.f32.mrf.mxu0
        %v3128 = vadd.f32 %v3072, %v3127
        %3129 = vdwg.mxu0
        %v3131 = vsel %vm868, %v3091, 0
        %v3134 = vsel %vm868, %v3093, 0
        %v3137 = vsel %vm868, %v3096, 0
        %v3140 = vsel %vm868, %v3098, 0
        %v3143 = vsel %vm868, %v3101, 0
        %v3146 = vsel %vm868, %v3103, 0
        %v3149 = vsel %vm868, %v3106, 0
        %v3152 = vsel %vm868, %v3108, 0
        %v3155 = vsel %vm868, %v3111, 0
        %v3158 = vsel %vm868, %v3113, 0
        %v3161 = vsel %vm868, %v3116, 0
        %v3164 = vsel %vm868, %v3118, 0
        %v3167 = vsel %vm868, %v3121, 0
        %v3170 = vsel %vm868, %v3123, 0
        %v3173 = vsel %vm868, %v3126, 0
        %v3176 = vsel %vm868, %v3128, 0
        %3178 = vmatpush.msra.mxu0 0.0
        %3179 = vmatpush.msra.mxu0 0.0
        %3180 = vmatpush.msra.mxu0 0.0
        %3181 = vmatpush.msra.mxu0 0.0
        %3182 = vmatpush.msra.mxu0 0.0
        %3183 = vmatpush.msra.mxu0 0.0
        %3184 = vmatpush.msra.mxu0 0.0
        %3185 = vmatpush.msra.mxu0 0.0
        %3186 = vmatpush.msra.mxu0 0.0
        %3187 = vmatpush.msra.mxu0 0.0
        %3188 = vmatpush.msra.mxu0 0.0
        %3189 = vmatpush.msra.mxu0 0.0
        %3190 = vmatpush.msra.mxu0 %v505
        %3191 = vmatpush.msra.mxu0 %v504
        %3192 = vmatpush.msra.mxu0 %v503
        %3193 = vmatpush.msra.mxu0 %v502
        %3194 = vmatmul.f32.gmra.mxu0 %v3131
        %v3195 = vpop.f32.mrf.mxu0
        %v3196 = vadd.f32 %v866, %v3195
        %3197 = vmatmul.f32.gmra.mxu0 %v3134
        %v3198 = vpop.f32.mrf.mxu0
        %v3199 = vadd.f32 %v866, %v3198
        %3200 = vmatmul.f32.gmra.mxu0 %v3137
        %v3201 = vpop.f32.mrf.mxu0
        %v3202 = vadd.f32 %v866, %v3201
        %3203 = vmatmul.f32.gmra.mxu0 %v3140
        %v3204 = vpop.f32.mrf.mxu0
        %v3205 = vadd.f32 %v866, %v3204
        %3206 = vmatmul.f32.gmra.mxu0 %v3143
        %v3207 = vpop.f32.mrf.mxu0
        %v3208 = vadd.f32 %v866, %v3207
        %3209 = vmatmul.f32.gmra.mxu0 %v3146
        %v3210 = vpop.f32.mrf.mxu0
        %v3211 = vadd.f32 %v866, %v3210
        %3212 = vmatmul.f32.gmra.mxu0 %v3149
        %v3213 = vpop.f32.mrf.mxu0
        %v3214 = vadd.f32 %v866, %v3213
        %3215 = vmatmul.f32.gmra.mxu0 %v3152
        %v3216 = vpop.f32.mrf.mxu0
        %v3217 = vadd.f32 %v866, %v3216
        %3218 = vmatmul.f32.gmra.mxu0 %v3155
        %v3219 = vpop.f32.mrf.mxu0
        %v3220 = vadd.f32 %v866, %v3219
        %3221 = vmatmul.f32.gmra.mxu0 %v3158
        %v3222 = vpop.f32.mrf.mxu0
        %v3223 = vadd.f32 %v866, %v3222
        %3224 = vmatmul.f32.gmra.mxu0 %v3161
        %v3225 = vpop.f32.mrf.mxu0
        %v3226 = vadd.f32 %v866, %v3225
        %3227 = vmatmul.f32.gmra.mxu0 %v3164
        %v3228 = vpop.f32.mrf.mxu0
        %v3229 = vadd.f32 %v866, %v3228
        %3230 = vmatmul.f32.gmra.mxu0 %v3167
        %v3231 = vpop.f32.mrf.mxu0
        %v3232 = vadd.f32 %v866, %v3231
        %3233 = vmatmul.f32.gmra.mxu0 %v3170
        %v3234 = vpop.f32.mrf.mxu0
        %v3235 = vadd.f32 %v866, %v3234
        %3236 = vmatmul.f32.gmra.mxu0 %v3173
        %v3237 = vpop.f32.mrf.mxu0
        %v3238 = vadd.f32 %v866, %v3237
        %3239 = vmatmul.f32.gmra.mxu0 %v3176
        %v3240 = vpop.f32.mrf.mxu0
        %v3241 = vadd.f32 %v866, %v3240
        %3242 = vdwg.mxu0
        %v3244 = vsel %vm868, %v3196, 0
        %v3247 = vsel %vm868, %v3199, 0
        %v3250 = vsel %vm868, %v3202, 0
        %v3253 = vsel %vm868, %v3205, 0
        %v3256 = vsel %vm868, %v3208, 0
        %v3259 = vsel %vm868, %v3211, 0
        %v3262 = vsel %vm868, %v3214, 0
        %v3265 = vsel %vm868, %v3217, 0
        %v3268 = vsel %vm868, %v3220, 0
        %v3271 = vsel %vm868, %v3223, 0
        %v3274 = vsel %vm868, %v3226, 0
        %v3277 = vsel %vm868, %v3229, 0
        %v3280 = vsel %vm868, %v3232, 0
        %v3283 = vsel %vm868, %v3235, 0
        %v3286 = vsel %vm868, %v3238, 0
        %v3289 = vsel %vm868, %v3241, 0
        %3291 = vmatpush.msra.mxu0 0.0
        %3292 = vmatpush.msra.mxu0 0.0
        %3293 = vmatpush.msra.mxu0 0.0
        %3294 = vmatpush.msra.mxu0 0.0
        %3295 = vmatpush.msra.mxu0 0.0
        %3296 = vmatpush.msra.mxu0 0.0
        %3297 = vmatpush.msra.mxu0 0.0
        %3298 = vmatpush.msra.mxu0 0.0
        %3299 = vmatpush.msra.mxu0 0.0
        %3300 = vmatpush.msra.mxu0 0.0
        %3301 = vmatpush.msra.mxu0 0.0
        %3302 = vmatpush.msra.mxu0 0.0
        %3303 = vmatpush.msra.mxu0 %v510
        %3304 = vmatpush.msra.mxu0 %v509
        %3305 = vmatpush.msra.mxu0 %v508
        %3306 = vmatpush.msra.mxu0 %v507
        %3307 = vmatmul.f32.gmra.mxu0 %v3244
        %v3308 = vpop.f32.mrf.mxu0
        %v3309 = vadd.f32 %v983, %v3308
        %3310 = vmatmul.f32.gmra.mxu0 %v3247
        %v3311 = vpop.f32.mrf.mxu0
        %v3312 = vadd.f32 %v983, %v3311
        %3313 = vmatmul.f32.gmra.mxu0 %v3250
        %v3314 = vpop.f32.mrf.mxu0
        %v3315 = vadd.f32 %v983, %v3314
        %3316 = vmatmul.f32.gmra.mxu0 %v3253
        %v3317 = vpop.f32.mrf.mxu0
        %v3318 = vadd.f32 %v983, %v3317
        %3319 = vmatmul.f32.gmra.mxu0 %v3256
        %v3320 = vpop.f32.mrf.mxu0
        %v3321 = vadd.f32 %v983, %v3320
        %3322 = vmatmul.f32.gmra.mxu0 %v3259
        %v3323 = vpop.f32.mrf.mxu0
        %v3324 = vadd.f32 %v983, %v3323
        %3325 = vmatmul.f32.gmra.mxu0 %v3262
        %v3326 = vpop.f32.mrf.mxu0
        %v3327 = vadd.f32 %v983, %v3326
        %3328 = vmatmul.f32.gmra.mxu0 %v3265
        %v3329 = vpop.f32.mrf.mxu0
        %v3330 = vadd.f32 %v983, %v3329
        %3331 = vmatmul.f32.gmra.mxu0 %v3268
        %v3332 = vpop.f32.mrf.mxu0
        %v3333 = vadd.f32 %v983, %v3332
        %3334 = vmatmul.f32.gmra.mxu0 %v3271
        %v3335 = vpop.f32.mrf.mxu0
        %v3336 = vadd.f32 %v983, %v3335
        %3337 = vmatmul.f32.gmra.mxu0 %v3274
        %v3338 = vpop.f32.mrf.mxu0
        %v3339 = vadd.f32 %v983, %v3338
        %3340 = vmatmul.f32.gmra.mxu0 %v3277
        %v3341 = vpop.f32.mrf.mxu0
        %v3342 = vadd.f32 %v983, %v3341
        %3343 = vmatmul.f32.gmra.mxu0 %v3280
        %v3344 = vpop.f32.mrf.mxu0
        %v3345 = vadd.f32 %v983, %v3344
        %3346 = vmatmul.f32.gmra.mxu0 %v3283
        %v3347 = vpop.f32.mrf.mxu0
        %v3348 = vadd.f32 %v983, %v3347
        %3349 = vmatmul.f32.gmra.mxu0 %v3286
        %v3350 = vpop.f32.mrf.mxu0
        %v3351 = vadd.f32 %v983, %v3350
        %3352 = vmatmul.f32.gmra.mxu0 %v3289
        %v3353 = vpop.f32.mrf.mxu0
        %v3354 = vadd.f32 %v983, %v3353
        %3355 = vdwg.mxu0
        %v3356 = vsel %vm868, %v3309, -inf
        %3357 = vmax.xlane.f32.xlu0 %v3356
        %v3358 = vpop.xlane.xlu0 %3357
        %v3359 = vsel %vm868, %v3312, -inf
        %3360 = vmax.xlane.f32.xlu0 %v3359
        %v3361 = vpop.xlane.xlu0 %3360
        %v3362 = vsel %vm868, %v3315, -inf
        %3363 = vmax.xlane.f32.xlu0 %v3362
        %v3364 = vpop.xlane.xlu0 %3363
        %v3365 = vsel %vm868, %v3318, -inf
        %3366 = vmax.xlane.f32.xlu0 %v3365
        %v3367 = vpop.xlane.xlu0 %3366
        %v3368 = vsel %vm868, %v3321, -inf
        %3369 = vmax.xlane.f32.xlu0 %v3368
        %v3370 = vpop.xlane.xlu0 %3369
        %v3371 = vsel %vm868, %v3324, -inf
        %3372 = vmax.xlane.f32.xlu0 %v3371
        %v3373 = vpop.xlane.xlu0 %3372
        %v3374 = vsel %vm868, %v3327, -inf
        %3375 = vmax.xlane.f32.xlu0 %v3374
        %v3376 = vpop.xlane.xlu0 %3375
        %v3377 = vsel %vm868, %v3330, -inf
        %3378 = vmax.xlane.f32.xlu0 %v3377
        %v3379 = vpop.xlane.xlu0 %3378
        %v3380 = vsel %vm868, %v3333, -inf
        %3381 = vmax.xlane.f32.xlu0 %v3380
        %v3382 = vpop.xlane.xlu0 %3381
        %v3383 = vsel %vm868, %v3336, -inf
        %3384 = vmax.xlane.f32.xlu0 %v3383
        %v3385 = vpop.xlane.xlu0 %3384
        %v3386 = vsel %vm868, %v3339, -inf
        %3387 = vmax.xlane.f32.xlu0 %v3386
        %v3388 = vpop.xlane.xlu0 %3387
        %v3389 = vsel %vm868, %v3342, -inf
        %3390 = vmax.xlane.f32.xlu0 %v3389
        %v3391 = vpop.xlane.xlu0 %3390
        %v3392 = vsel %vm868, %v3345, -inf
        %3393 = vmax.xlane.f32.xlu0 %v3392
        %v3394 = vpop.xlane.xlu0 %3393
        %v3395 = vsel %vm868, %v3348, -inf
        %3396 = vmax.xlane.f32.xlu0 %v3395
        %v3397 = vpop.xlane.xlu0 %3396
        %v3398 = vsel %vm868, %v3351, -inf
        %3399 = vmax.xlane.f32.xlu0 %v3398
        %v3400 = vpop.xlane.xlu0 %3399
        %v3401 = vsel %vm868, %v3354, -inf
        %3402 = vmax.xlane.f32.xlu0 %v3401
        %v3403 = vpop.xlane.xlu0 %3402
        %v3404 = vsub.f32 %v3309, %v3358
        %v3405 = vsub.f32 %v3312, %v3361
        %v3406 = vsub.f32 %v3315, %v3364
        %v3407 = vsub.f32 %v3318, %v3367
        %v3408 = vsub.f32 %v3321, %v3370
        %v3409 = vsub.f32 %v3324, %v3373
        %v3410 = vsub.f32 %v3327, %v3376
        %v3411 = vsub.f32 %v3330, %v3379
        %v3412 = vsub.f32 %v3333, %v3382
        %v3413 = vsub.f32 %v3336, %v3385
        %v3414 = vsub.f32 %v3339, %v3388
        %v3415 = vsub.f32 %v3342, %v3391
        %v3416 = vsub.f32 %v3345, %v3394
        %v3417 = vsub.f32 %v3348, %v3397
        %v3418 = vsub.f32 %v3351, %v3400
        %v3419 = vsub.f32 %v3354, %v3403
        %v3420 = vmul.f32 %v3404, 1.442695
        %v3421 = vpow.pop %v3420
        %v3422 = vmul.f32 %v3405, 1.442695
        %v3423 = vpow.pop %v3422
        %v3424 = vmul.f32 %v3406, 1.442695
        %v3425 = vpow.pop %v3424
        %v3426 = vmul.f32 %v3407, 1.442695
        %v3427 = vpow.pop %v3426
        %v3428 = vmul.f32 %v3408, 1.442695
        %v3429 = vpow.pop %v3428
        %v3430 = vmul.f32 %v3409, 1.442695
        %v3431 = vpow.pop %v3430
        %v3432 = vmul.f32 %v3410, 1.442695
        %v3433 = vpow.pop %v3432
        %v3434 = vmul.f32 %v3411, 1.442695
        %v3435 = vpow.pop %v3434
        %v3436 = vmul.f32 %v3412, 1.442695
        %v3437 = vpow.pop %v3436
        %v3438 = vmul.f32 %v3413, 1.442695
        %v3439 = vpow.pop %v3438
        %v3440 = vmul.f32 %v3414, 1.442695
        %v3441 = vpow.pop %v3440
        %v3442 = vmul.f32 %v3415, 1.442695
        %v3443 = vpow.pop %v3442
        %v3444 = vmul.f32 %v3416, 1.442695
        %v3445 = vpow.pop %v3444
        %v3446 = vmul.f32 %v3417, 1.442695
        %v3447 = vpow.pop %v3446
        %v3448 = vmul.f32 %v3418, 1.442695
        %v3449 = vpow.pop %v3448
        %v3450 = vmul.f32 %v3419, 1.442695
        %v3451 = vpow.pop %v3450
        %v3452 = vsel %vm868, %v3421, 0.0
        %3453 = vadd.xlane.f32.xlu0 %v3452
        %v3454 = vpop.xlane.xlu0 %3453
        %v3455 = vsel %vm868, %v3423, 0.0
        %3456 = vadd.xlane.f32.xlu0 %v3455
        %v3457 = vpop.xlane.xlu0 %3456
        %v3458 = vsel %vm868, %v3425, 0.0
        %3459 = vadd.xlane.f32.xlu0 %v3458
        %v3460 = vpop.xlane.xlu0 %3459
        %v3461 = vsel %vm868, %v3427, 0.0
        %3462 = vadd.xlane.f32.xlu0 %v3461
        %v3463 = vpop.xlane.xlu0 %3462
        %v3464 = vsel %vm868, %v3429, 0.0
        %3465 = vadd.xlane.f32.xlu0 %v3464
        %v3466 = vpop.xlane.xlu0 %3465
        %v3467 = vsel %vm868, %v3431, 0.0
        %3468 = vadd.xlane.f32.xlu0 %v3467
        %v3469 = vpop.xlane.xlu0 %3468
        %v3470 = vsel %vm868, %v3433, 0.0
        %3471 = vadd.xlane.f32.xlu0 %v3470
        %v3472 = vpop.xlane.xlu0 %3471
        %v3473 = vsel %vm868, %v3435, 0.0
        %3474 = vadd.xlane.f32.xlu0 %v3473
        %v3475 = vpop.xlane.xlu0 %3474
        %v3476 = vsel %vm868, %v3437, 0.0
        %3477 = vadd.xlane.f32.xlu0 %v3476
        %v3478 = vpop.xlane.xlu0 %3477
        %v3479 = vsel %vm868, %v3439, 0.0
        %3480 = vadd.xlane.f32.xlu0 %v3479
        %v3481 = vpop.xlane.xlu0 %3480
        %v3482 = vsel %vm868, %v3441, 0.0
        %3483 = vadd.xlane.f32.xlu0 %v3482
        %v3484 = vpop.xlane.xlu0 %3483
        %v3485 = vsel %vm868, %v3443, 0.0
        %3486 = vadd.xlane.f32.xlu0 %v3485
        %v3487 = vpop.xlane.xlu0 %3486
        %v3488 = vsel %vm868, %v3445, 0.0
        %3489 = vadd.xlane.f32.xlu0 %v3488
        %v3490 = vpop.xlane.xlu0 %3489
        %v3491 = vsel %vm868, %v3447, 0.0
        %3492 = vadd.xlane.f32.xlu0 %v3491
        %v3493 = vpop.xlane.xlu0 %3492
        %v3494 = vsel %vm868, %v3449, 0.0
        %3495 = vadd.xlane.f32.xlu0 %v3494
        %v3496 = vpop.xlane.xlu0 %3495
        %v3497 = vsel %vm868, %v3451, 0.0
        %3498 = vadd.xlane.f32.xlu0 %v3497
        %v3499 = vpop.xlane.xlu0 %3498
        %v3500 = vrcp.pop %v3454
        %v3501 = vrcp.pop %v3457
        %v3502 = vrcp.pop %v3460
        %v3503 = vrcp.pop %v3463
        %v3504 = vrcp.pop %v3466
        %v3505 = vrcp.pop %v3469
        %v3506 = vrcp.pop %v3472
        %v3507 = vrcp.pop %v3475
        %v3508 = vrcp.pop %v3478
        %v3509 = vrcp.pop %v3481
        %v3510 = vrcp.pop %v3484
        %v3511 = vrcp.pop %v3487
        %v3512 = vrcp.pop %v3490
        %v3513 = vrcp.pop %v3493
        %v3514 = vrcp.pop %v3496
        %v3515 = vrcp.pop %v3499
        %v3516 = vmul.f32 %v3421, %v3500
        %v3517 = vmul.f32 %v3423, %v3501
        %v3518 = vmul.f32 %v3425, %v3502
        %v3519 = vmul.f32 %v3427, %v3503
        %v3520 = vmul.f32 %v3429, %v3504
        %v3521 = vmul.f32 %v3431, %v3505
        %v3522 = vmul.f32 %v3433, %v3506
        %v3523 = vmul.f32 %v3435, %v3507
        %v3524 = vmul.f32 %v3437, %v3508
        %v3525 = vmul.f32 %v3439, %v3509
        %v3526 = vmul.f32 %v3441, %v3510
        %v3527 = vmul.f32 %v3443, %v3511
        %v3528 = vmul.f32 %v3445, %v3512
        %v3529 = vmul.f32 %v3447, %v3513
        %v3530 = vmul.f32 %v3449, %v3514
        %v3531 = vmul.f32 %v3451, %v3515
        %v3532 = vlog2.pop %v3454
        %v3533 = vmul.f32 %v3532, 0.6931472
        %v3534 = vlog2.pop %v3457
        %v3535 = vmul.f32 %v3534, 0.6931472
        %v3536 = vlog2.pop %v3460
        %v3537 = vmul.f32 %v3536, 0.6931472
        %v3538 = vlog2.pop %v3463
        %v3539 = vmul.f32 %v3538, 0.6931472
        %v3540 = vlog2.pop %v3466
        %v3541 = vmul.f32 %v3540, 0.6931472
        %v3542 = vlog2.pop %v3469
        %v3543 = vmul.f32 %v3542, 0.6931472
        %v3544 = vlog2.pop %v3472
        %v3545 = vmul.f32 %v3544, 0.6931472
        %v3546 = vlog2.pop %v3475
        %v3547 = vmul.f32 %v3546, 0.6931472
        %v3548 = vlog2.pop %v3478
        %v3549 = vmul.f32 %v3548, 0.6931472
        %v3550 = vlog2.pop %v3481
        %v3551 = vmul.f32 %v3550, 0.6931472
        %v3552 = vlog2.pop %v3484
        %v3553 = vmul.f32 %v3552, 0.6931472
        %v3554 = vlog2.pop %v3487
        %v3555 = vmul.f32 %v3554, 0.6931472
        %v3556 = vlog2.pop %v3490
        %v3557 = vmul.f32 %v3556, 0.6931472
        %v3558 = vlog2.pop %v3493
        %v3559 = vmul.f32 %v3558, 0.6931472
        %v3560 = vlog2.pop %v3496
        %v3561 = vmul.f32 %v3560, 0.6931472
        %v3562 = vlog2.pop %v3499
        %v3563 = vmul.f32 %v3562, 0.6931472
        %v3564 = vsub.f32 %v3404, %v3533
        %v3565 = vsub.f32 %v3405, %v3535
        %v3566 = vsub.f32 %v3406, %v3537
        %v3567 = vsub.f32 %v3407, %v3539
        %v3568 = vsub.f32 %v3408, %v3541
        %v3569 = vsub.f32 %v3409, %v3543
        %v3570 = vsub.f32 %v3410, %v3545
        %v3571 = vsub.f32 %v3411, %v3547
        %v3572 = vsub.f32 %v3412, %v3549
        %v3573 = vsub.f32 %v3413, %v3551
        %v3574 = vsub.f32 %v3414, %v3553
        %v3575 = vsub.f32 %v3415, %v3555
        %v3576 = vsub.f32 %v3416, %v3557
        %v3577 = vsub.f32 %v3417, %v3559
        %v3578 = vsub.f32 %v3418, %v3561
        %v3579 = vsub.f32 %v3419, %v3563
        %v3580 = vpack.c.bf16 %v3517, %v3516
        %v3581 = vpack.c.bf16 %v3519, %v3518
        %v3582 = vpack.c.bf16 %v3521, %v3520
        %v3583 = vpack.c.bf16 %v3523, %v3522
        %v3584 = vpack.c.bf16 %v3525, %v3524
        %v3585 = vpack.c.bf16 %v3527, %v3526
        %v3586 = vpack.c.bf16 %v3529, %v3528
        %v3587 = vpack.c.bf16 %v3531, %v3530
        %3588 = vxpose.xlu0.c.b16.start [1/8] %v3580, 128
        %3589 = vxpose.xlu0.c.b16.cont [2/8] %v3581, 128
        %3590 = vxpose.xlu0.c.b16.cont [3/8] %v3582, 128
        %3591 = vxpose.xlu0.c.b16.cont [4/8] %v3583, 128
        %3592 = vxpose.xlu0.c.b16.cont [5/8] %v3584, 128
        %3593 = vxpose.xlu0.c.b16.cont [6/8] %v3585, 128
        %3594 = vxpose.xlu0.c.b16.cont [7/8] %v3586, 128
        %3595 = vxpose.xlu0.c.b16.end [8/8] %v3587, 128
        %v3596 = vpop.trf.xlu0
        %v3597 = vpop.trf.xlu0
        %v3598 = vpop.trf.xlu0
        %v3599 = vpop.trf.xlu0
        %v3600 = vpop.trf.xlu0
        %v3601 = vpop.trf.xlu0
        %v3602 = vpop.trf.xlu0
        %v3603 = vpop.trf.xlu0
        %3604 = vmatpush.bf16.msra.mxu0 %v2934
        %3605 = vmatpush.bf16.msra.mxu0 %v2933
        %3606 = vmatpush.bf16.msra.mxu0 %v2932
        %3607 = vmatpush.bf16.msra.mxu0 %v2931
        %3608 = vmatpush.bf16.msra.mxu0 %v2930
        %3609 = vmatpush.bf16.msra.mxu0 %v2929
        %3610 = vmatpush.bf16.msra.mxu0 %v2928
        %3611 = vmatpush.bf16.msra.mxu0 %v2927
        %3612 = vmatmul.bf16.gmra.mxu0 %v3596
        %v3613 = vpop.f32.mrf.mxu0
        %v3614 = vadd.f32 0.0, %v3613
        %v3615 = vpop.f32.mrf.mxu0
        %v3616 = vadd.f32 0.0, %v3615
        %3617 = vmatmul.bf16.gmra.mxu0 %v3597
        %v3618 = vpop.f32.mrf.mxu0
        %v3619 = vadd.f32 0.0, %v3618
        %v3620 = vpop.f32.mrf.mxu0
        %v3621 = vadd.f32 0.0, %v3620
        %3622 = vdwg.mxu0
        %s3623 = scalar_lea.vmem %s457, 64 [#allocation7]
        %3624 = vst [vmem:[%s3623] sm:$0xff] %v3614
        %3625 = vst [vmem:[%s3623 + $0x8] sm:$0xff] %v3616
        %3626 = vst [vmem:[%s3623 + $0x10] sm:$0xff] %v3619
        %3627 = vst [vmem:[%s3623 + $0x18] sm:$0xff] %v3621
        %3628 = vmatpush.bf16.msra.mxu0 %v2886
        %3629 = vmatpush.bf16.msra.mxu0 %v2885
        %3630 = vmatpush.bf16.msra.mxu0 %v2884
        %3631 = vmatpush.bf16.msra.mxu0 %v2883
        %3632 = vmatpush.bf16.msra.mxu0 %v2882
        %3633 = vmatpush.bf16.msra.mxu0 %v2881
        %3634 = vmatpush.bf16.msra.mxu0 %v2880
        %3635 = vmatpush.bf16.msra.mxu0 %v2879
        %3636 = vmatmul.bf16.gmra.mxu0 %v3596
        %v3637 = vpop.f32.mrf.mxu0
        %v3638 = vadd.f32 0.0, %v3637
        %v3639 = vpop.f32.mrf.mxu0
        %v3640 = vadd.f32 0.0, %v3639
        %3641 = vmatmul.bf16.gmra.mxu0 %v3597
        %v3642 = vpop.f32.mrf.mxu0
        %v3643 = vadd.f32 0.0, %v3642
        %v3644 = vpop.f32.mrf.mxu0
        %v3645 = vadd.f32 0.0, %v3644
        %3646 = vdwg.mxu0
        %3647 = vmatpush.msra.mxu0 %v3531
        %3648 = vmatpush.msra.mxu0 %v3530
        %3649 = vmatpush.msra.mxu0 %v3529
        %3650 = vmatpush.msra.mxu0 %v3528
        %3651 = vmatpush.msra.mxu0 %v3527
        %3652 = vmatpush.msra.mxu0 %v3526
        %3653 = vmatpush.msra.mxu0 %v3525
        %3654 = vmatpush.msra.mxu0 %v3524
        %3655 = vmatpush.msra.mxu0 %v3523
        %3656 = vmatpush.msra.mxu0 %v3522
        %3657 = vmatpush.msra.mxu0 %v3521
        %3658 = vmatpush.msra.mxu0 %v3520
        %3659 = vmatpush.msra.mxu0 %v3519
        %3660 = vmatpush.msra.mxu0 %v3518
        %3661 = vmatpush.msra.mxu0 %v3517
        %3662 = vmatpush.msra.mxu0 %v3516
        %3663 = vmatmul.f32.gmra.mxu0 %v3638
        %v3664 = vpop.f32.mrf.mxu0
        %v3665 = vadd.f32 0.0, %v3664
        %3666 = vmatmul.f32.gmra.mxu0 %v3640
        %v3667 = vpop.f32.mrf.mxu0
        %v3668 = vadd.f32 0.0, %v3667
        %3669 = vmatmul.f32.gmra.mxu0 %v3643
        %v3670 = vpop.f32.mrf.mxu0
        %v3671 = vadd.f32 0.0, %v3670
        %3672 = vmatmul.f32.gmra.mxu0 %v3645
        %v3673 = vpop.f32.mrf.mxu0
        %v3674 = vadd.f32 0.0, %v3673
        %3675 = vdwg.mxu0
        %s3676 = scalar_lea.vmem %s464, 64 [#allocation8]
        %3677 = vst.msk [vmem:[%s3676] sm:$0xff] %vm868, %v3665
        %3678 = vst.msk [vmem:[%s3676 + $0x8] sm:$0xff] %vm868, %v3668
        %3679 = vst.msk [vmem:[%s3676 + $0x10] sm:$0xff] %vm868, %v3671
        %3680 = vst.msk [vmem:[%s3676 + $0x18] sm:$0xff] %vm868, %v3674
        %v3681 = vunpack.c.l.bf16 %v2815
        %v3682 = vunpack.c.l.bf16 %v2816
        %v3683 = vunpack.c.l.bf16 %v2817
        %v3684 = vunpack.c.l.bf16 %v2818
        %v3685 = vunpack.c.l.bf16 %v2819
        %v3686 = vunpack.c.l.bf16 %v2820
        %v3687 = vunpack.c.l.bf16 %v2821
        %v3688 = vunpack.c.l.bf16 %v2822
        %v3689 = vunpack.c.l.bf16 %v2823
        %v3690 = vunpack.c.l.bf16 %v2824
        %v3691 = vunpack.c.l.bf16 %v2825
        %v3692 = vunpack.c.l.bf16 %v2826
        %v3693 = vunpack.c.l.bf16 %v2827
        %v3694 = vunpack.c.l.bf16 %v2828
        %v3695 = vunpack.c.l.bf16 %v2829
        %v3696 = vunpack.c.l.bf16 %v2830
        %v3697 = vmul.f32 %v3681, %v3681
        %v3698 = vmul.f32 %v3682, %v3682
        %v3699 = vmul.f32 %v3683, %v3683
        %v3700 = vmul.f32 %v3684, %v3684
        %v3701 = vmul.f32 %v3685, %v3685
        %v3702 = vmul.f32 %v3686, %v3686
        %v3703 = vmul.f32 %v3687, %v3687
        %v3704 = vmul.f32 %v3688, %v3688
        %v3705 = vmul.f32 %v3689, %v3689
        %v3706 = vmul.f32 %v3690, %v3690
        %v3707 = vmul.f32 %v3691, %v3691
        %v3708 = vmul.f32 %v3692, %v3692
        %v3709 = vmul.f32 %v3693, %v3693
        %v3710 = vmul.f32 %v3694, %v3694
        %v3711 = vmul.f32 %v3695, %v3695
        %v3712 = vmul.f32 %v3696, %v3696
        %3713 = vadd.xlane.f32.xlu0 %v3697
        %v3714 = vpop.xlane.xlu0 %3713
        %3715 = vadd.xlane.f32.xlu0 %v3698
        %v3716 = vpop.xlane.xlu0 %3715
        %3717 = vadd.xlane.f32.xlu0 %v3699
        %v3718 = vpop.xlane.xlu0 %3717
        %3719 = vadd.xlane.f32.xlu0 %v3700
        %v3720 = vpop.xlane.xlu0 %3719
        %3721 = vadd.xlane.f32.xlu0 %v3701
        %v3722 = vpop.xlane.xlu0 %3721
        %3723 = vadd.xlane.f32.xlu0 %v3702
        %v3724 = vpop.xlane.xlu0 %3723
        %3725 = vadd.xlane.f32.xlu0 %v3703
        %v3726 = vpop.xlane.xlu0 %3725
        %3727 = vadd.xlane.f32.xlu0 %v3704
        %v3728 = vpop.xlane.xlu0 %3727
        %3729 = vadd.xlane.f32.xlu0 %v3705
        %v3730 = vpop.xlane.xlu0 %3729
        %3731 = vadd.xlane.f32.xlu0 %v3706
        %v3732 = vpop.xlane.xlu0 %3731
        %3733 = vadd.xlane.f32.xlu0 %v3707
        %v3734 = vpop.xlane.xlu0 %3733
        %3735 = vadd.xlane.f32.xlu0 %v3708
        %v3736 = vpop.xlane.xlu0 %3735
        %3737 = vadd.xlane.f32.xlu0 %v3709
        %v3738 = vpop.xlane.xlu0 %3737
        %3739 = vadd.xlane.f32.xlu0 %v3710
        %v3740 = vpop.xlane.xlu0 %3739
        %3741 = vadd.xlane.f32.xlu0 %v3711
        %v3742 = vpop.xlane.xlu0 %3741
        %3743 = vadd.xlane.f32.xlu0 %v3712
        %v3744 = vpop.xlane.xlu0 %3743
        %v3745 = vadd.f32 %v3714, %v3716
        %v3746 = vadd.f32 %v3745, %v3718
        %v3747 = vadd.f32 %v3746, %v3720
        %v3748 = vadd.f32 %v3747, %v3722
        %v3749 = vadd.f32 %v3748, %v3724
        %v3750 = vadd.f32 %v3749, %v3726
        %v3751 = vadd.f32 %v3750, %v3728
        %v3752 = vadd.f32 %v3751, %v3730
        %v3753 = vadd.f32 %v3752, %v3732
        %v3754 = vadd.f32 %v3753, %v3734
        %v3755 = vadd.f32 %v3754, %v3736
        %v3756 = vadd.f32 %v3755, %v3738
        %v3757 = vadd.f32 %v3756, %v3740
        %v3758 = vadd.f32 %v3757, %v3742
        %v3759 = vadd.f32 %v3758, %v3744
        %v3760 = vrot.slane %v3759, 4
        %v3761 = vadd.f32 %v3759, %v3760
        %v3762 = vrot.slane %v3761, 2
        %v3763 = vadd.f32 %v3761, %v3762
        %v3764 = vrot.slane %v3763, 1
        %v3765 = vadd.f32 %v3763, %v3764
        %v3766 = vmul.f32 %v3665, %v527
        %v3767 = vmul.f32 %v3668, %v528
        %v3768 = vmul.f32 %v3671, %v529
        %v3769 = vmul.f32 %v3674, %v530
        %v3770 = vsel %vm868, %v3766, 0.0
        %3771 = vadd.xlane.f32.xlu0 %v3770
        %v3772 = vpop.xlane.xlu0 %3771
        %v3773 = vsel %vm868, %v3767, 0.0
        %3774 = vadd.xlane.f32.xlu0 %v3773
        %v3775 = vpop.xlane.xlu0 %3774
        %v3776 = vsel %vm868, %v3768, 0.0
        %3777 = vadd.xlane.f32.xlu0 %v3776
        %v3778 = vpop.xlane.xlu0 %3777
        %v3779 = vsel %vm868, %v3769, 0.0
        %3780 = vadd.xlane.f32.xlu0 %v3779
        %v3781 = vpop.xlane.xlu0 %3780
        %v3782 = vadd.f32 %v3772, %v3775
        %v3783 = vadd.f32 %v3782, %v3778
        %v3784 = vadd.f32 %v3783, %v3781
        %v3785 = vrot.slane %v3784, 4
        %v3786 = vadd.f32 %v3784, %v3785
        %v3787 = vrot.slane %v3786, 2
        %v3788 = vadd.f32 %v3786, %v3787
        %v3789 = vrot.slane %v3788, 1
        %v3790 = vadd.f32 %v3788, %v3789
        %3791 = vmatpush.bf16.msra.mxu0 %v3587
        %3792 = vmatpush.bf16.msra.mxu0 %v3586
        %3793 = vmatpush.bf16.msra.mxu0 %v3585
        %3794 = vmatpush.bf16.msra.mxu0 %v3584
        %3795 = vmatpush.bf16.msra.mxu0 %v3583
        %3796 = vmatpush.bf16.msra.mxu0 %v3582
        %3797 = vmatpush.bf16.msra.mxu0 %v3581
        %3798 = vmatpush.bf16.msra.mxu0 %v3580
        %3799 = vmatmul.bf16.gmra.mxu0 %v3596
        %v3800 = vpop.f32.mrf.mxu0
        %v3801 = vadd.f32 0.0, %v3800
        %v3802 = vpop.f32.mrf.mxu0
        %v3803 = vadd.f32 0.0, %v3802
        %3804 = vmatmul.bf16.gmra.mxu0 %v3597
        %v3805 = vpop.f32.mrf.mxu0
        %v3806 = vadd.f32 0.0, %v3805
        %v3807 = vpop.f32.mrf.mxu0
        %v3808 = vadd.f32 0.0, %v3807
        %3809 = vdwg.mxu0
        %v3810 = vmul.f32 %v3790, 2.0
        %v3811 = vsub.f32 %v3765, %v3810
        %v3812 = vmul.f32 %v3801, %v3801
        %v3813 = vmul.f32 %v3803, %v3803
        %v3814 = vmul.f32 %v3806, %v3806
        %v3815 = vmul.f32 %v3808, %v3808
        %v3816 = vsel %vm868, %v3812, 0.0
        %3817 = vadd.xlane.f32.xlu0 %v3816
        %v3818 = vpop.xlane.xlu0 %3817
        %v3819 = vsel %vm868, %v3813, 0.0
        %3820 = vadd.xlane.f32.xlu0 %v3819
        %v3821 = vpop.xlane.xlu0 %3820
        %v3822 = vsel %vm868, %v3814, 0.0
        %3823 = vadd.xlane.f32.xlu0 %v3822
        %v3824 = vpop.xlane.xlu0 %3823
        %v3825 = vsel %vm868, %v3815, 0.0
        %3826 = vadd.xlane.f32.xlu0 %v3825
        %v3827 = vpop.xlane.xlu0 %3826
        %v3828 = vadd.f32 %v3818, %v3821
        %v3829 = vadd.f32 %v3828, %v3824
        %v3830 = vadd.f32 %v3829, %v3827
        %v3831 = vrot.slane %v3830, 4
        %v3832 = vadd.f32 %v3830, %v3831
        %v3833 = vrot.slane %v3832, 2
        %v3834 = vadd.f32 %v3832, %v3833
        %v3835 = vrot.slane %v3834, 1
        %v3836 = vadd.f32 %v3834, %v3835
        %v3837 = vadd.f32 %v3811, %v3836
        %v3838 = vmul.f32 %v3516, %v3564
        %v3839 = vmul.f32 %v3517, %v3565
        %v3840 = vmul.f32 %v3518, %v3566
        %v3841 = vmul.f32 %v3519, %v3567
        %v3842 = vmul.f32 %v3520, %v3568
        %v3843 = vmul.f32 %v3521, %v3569
        %v3844 = vmul.f32 %v3522, %v3570
        %v3845 = vmul.f32 %v3523, %v3571
        %v3846 = vmul.f32 %v3524, %v3572
        %v3847 = vmul.f32 %v3525, %v3573
        %v3848 = vmul.f32 %v3526, %v3574
        %v3849 = vmul.f32 %v3527, %v3575
        %v3850 = vmul.f32 %v3528, %v3576
        %v3851 = vmul.f32 %v3529, %v3577
        %v3852 = vmul.f32 %v3530, %v3578
        %v3853 = vmul.f32 %v3531, %v3579
        %v3854 = vsel %vm868, %v3838, 0.0
        %3855 = vadd.xlane.f32.xlu0 %v3854
        %v3856 = vpop.xlane.xlu0 %3855
        %v3857 = vsel %vm868, %v3839, 0.0
        %3858 = vadd.xlane.f32.xlu0 %v3857
        %v3859 = vpop.xlane.xlu0 %3858
        %v3860 = vsel %vm868, %v3840, 0.0
        %3861 = vadd.xlane.f32.xlu0 %v3860
        %v3862 = vpop.xlane.xlu0 %3861
        %v3863 = vsel %vm868, %v3841, 0.0
        %3864 = vadd.xlane.f32.xlu0 %v3863
        %v3865 = vpop.xlane.xlu0 %3864
        %v3866 = vsel %vm868, %v3842, 0.0
        %3867 = vadd.xlane.f32.xlu0 %v3866
        %v3868 = vpop.xlane.xlu0 %3867
        %v3869 = vsel %vm868, %v3843, 0.0
        %3870 = vadd.xlane.f32.xlu0 %v3869
        %v3871 = vpop.xlane.xlu0 %3870
        %v3872 = vsel %vm868, %v3844, 0.0
        %3873 = vadd.xlane.f32.xlu0 %v3872
        %v3874 = vpop.xlane.xlu0 %3873
        %v3875 = vsel %vm868, %v3845, 0.0
        %3876 = vadd.xlane.f32.xlu0 %v3875
        %v3877 = vpop.xlane.xlu0 %3876
        %v3878 = vsel %vm868, %v3846, 0.0
        %3879 = vadd.xlane.f32.xlu0 %v3878
        %v3880 = vpop.xlane.xlu0 %3879
        %v3881 = vsel %vm868, %v3847, 0.0
        %3882 = vadd.xlane.f32.xlu0 %v3881
        %v3883 = vpop.xlane.xlu0 %3882
        %v3884 = vsel %vm868, %v3848, 0.0
        %3885 = vadd.xlane.f32.xlu0 %v3884
        %v3886 = vpop.xlane.xlu0 %3885
        %v3887 = vsel %vm868, %v3849, 0.0
        %3888 = vadd.xlane.f32.xlu0 %v3887
        %v3889 = vpop.xlane.xlu0 %3888
        %v3890 = vsel %vm868, %v3850, 0.0
        %3891 = vadd.xlane.f32.xlu0 %v3890
        %v3892 = vpop.xlane.xlu0 %3891
        %v3893 = vsel %vm868, %v3851, 0.0
        %3894 = vadd.xlane.f32.xlu0 %v3893
        %v3895 = vpop.xlane.xlu0 %3894
        %v3896 = vsel %vm868, %v3852, 0.0
        %3897 = vadd.xlane.f32.xlu0 %v3896
        %v3898 = vpop.xlane.xlu0 %3897
        %v3899 = vsel %vm868, %v3853, 0.0
        %3900 = vadd.xlane.f32.xlu0 %v3899
        %v3901 = vpop.xlane.xlu0 %3900
        %v3902 = vadd.f32 %v3856, %v3859
        %v3903 = vadd.f32 %v3902, %v3862
        %v3904 = vadd.f32 %v3903, %v3865
        %v3905 = vadd.f32 %v3904, %v3868
        %v3906 = vadd.f32 %v3905, %v3871
        %v3907 = vadd.f32 %v3906, %v3874
        %v3908 = vadd.f32 %v3907, %v3877
        %v3909 = vadd.f32 %v3908, %v3880
        %v3910 = vadd.f32 %v3909, %v3883
        %v3911 = vadd.f32 %v3910, %v3886
        %v3912 = vadd.f32 %v3911, %v3889
        %v3913 = vadd.f32 %v3912, %v3892
        %v3914 = vadd.f32 %v3913, %v3895
        %v3915 = vadd.f32 %v3914, %v3898
        %v3916 = vadd.f32 %v3915, %v3901
        %v3917 = vrot.slane %v3916, 4
        %v3918 = vadd.f32 %v3916, %v3917
        %v3919 = vrot.slane %v3918, 2
        %v3920 = vadd.f32 %v3918, %v3919
        %v3921 = vrot.slane %v3920, 1
        %v3922 = vadd.f32 %v3920, %v3921
        %v3923 = vsub.f32 0.0, %v3922
        %s3924 = scalar_lea.vmem %s471, 2 [#allocation10]
        %3925 = vst [vmem:[%s3924] sm:$0x1] %v3837
        %s3926 = scalar_lea.vmem %s478, 2 [#allocation11]
        %3927 = vst [vmem:[%s3926] sm:$0x1] %v3923
        %s3928 = scalar_lea.vmem %s409, 192 [#allocation2]
        %v3929 = vld [vmem:[%s3928] sm:$0xf]
        %v3930 = vld [vmem:[%s3928 + $0x4] sm:$0xf]
        %v3931 = vld [vmem:[%s3928 + $0x8] sm:$0xf]
        %v3932 = vld [vmem:[%s3928 + $0xc] sm:$0xf]
        %v3933 = vld [vmem:[%s3928 + $0x10] sm:$0xf]
        %v3934 = vld [vmem:[%s3928 + $0x14] sm:$0xf]
        %v3935 = vld [vmem:[%s3928 + $0x18] sm:$0xf]
        %v3936 = vld [vmem:[%s3928 + $0x1c] sm:$0xf]
        %v3937 = vld [vmem:[%s3928 + $0x20] sm:$0xf]
        %v3938 = vld [vmem:[%s3928 + $0x24] sm:$0xf]
        %v3939 = vld [vmem:[%s3928 + $0x28] sm:$0xf]
        %v3940 = vld [vmem:[%s3928 + $0x2c] sm:$0xf]
        %v3941 = vld [vmem:[%s3928 + $0x30] sm:$0xf]
        %v3942 = vld [vmem:[%s3928 + $0x34] sm:$0xf]
        %v3943 = vld [vmem:[%s3928 + $0x38] sm:$0xf]
        %v3944 = vld [vmem:[%s3928 + $0x3c] sm:$0xf]
        %s3945 = scalar_lea.vmem %s419, 192 [#allocation5]
        %v3946 = vld [vmem:[%s3945] sm:$0xf]
        %v3947 = vld [vmem:[%s3945 + $0x4] sm:$0xf]
        %v3948 = vld [vmem:[%s3945 + $0x8] sm:$0xf]
        %v3949 = vld [vmem:[%s3945 + $0xc] sm:$0xf]
        %v3950 = vld [vmem:[%s3945 + $0x10] sm:$0xf]
        %v3951 = vld [vmem:[%s3945 + $0x14] sm:$0xf]
        %v3952 = vld [vmem:[%s3945 + $0x18] sm:$0xf]
        %v3953 = vld [vmem:[%s3945 + $0x1c] sm:$0xf]
        %v3954 = vld [vmem:[%s3945 + $0x20] sm:$0xf]
        %v3955 = vld [vmem:[%s3945 + $0x24] sm:$0xf]
        %v3956 = vld [vmem:[%s3945 + $0x28] sm:$0xf]
        %v3957 = vld [vmem:[%s3945 + $0x2c] sm:$0xf]
        %v3958 = vld [vmem:[%s3945 + $0x30] sm:$0xf]
        %v3959 = vld [vmem:[%s3945 + $0x34] sm:$0xf]
        %v3960 = vld [vmem:[%s3945 + $0x38] sm:$0xf]
        %v3961 = vld [vmem:[%s3945 + $0x3c] sm:$0xf]
        %v3962 = vunpack.c.l.bf16 %v3929
        %v3963 = vunpack.c.l.bf16 %v3930
        %v3964 = vunpack.c.l.bf16 %v3931
        %v3965 = vunpack.c.l.bf16 %v3932
        %v3966 = vunpack.c.l.bf16 %v3933
        %v3967 = vunpack.c.l.bf16 %v3934
        %v3968 = vunpack.c.l.bf16 %v3935
        %v3969 = vunpack.c.l.bf16 %v3936
        %v3970 = vunpack.c.l.bf16 %v3937
        %v3971 = vunpack.c.l.bf16 %v3938
        %v3972 = vunpack.c.l.bf16 %v3939
        %v3973 = vunpack.c.l.bf16 %v3940
        %v3974 = vunpack.c.l.bf16 %v3941
        %v3975 = vunpack.c.l.bf16 %v3942
        %v3976 = vunpack.c.l.bf16 %v3943
        %v3977 = vunpack.c.l.bf16 %v3944
        %v3994 = vunpack.c.l.b16 %v3946
        %v3995 = vunpack.c.l.b16 %v3947
        %v3996 = vunpack.c.l.b16 %v3948
        %v3997 = vunpack.c.l.b16 %v3949
        %v3998 = vunpack.c.l.b16 %v3950
        %v3999 = vunpack.c.l.b16 %v3951
        %v4000 = vunpack.c.l.b16 %v3952
        %v4001 = vunpack.c.l.b16 %v3953
        %v4002 = vunpack.c.l.b16 %v3954
        %v4003 = vunpack.c.l.b16 %v3955
        %v4004 = vunpack.c.l.b16 %v3956
        %v4005 = vunpack.c.l.b16 %v3957
        %v4006 = vunpack.c.l.b16 %v3958
        %v4007 = vunpack.c.l.b16 %v3959
        %v4008 = vunpack.c.l.b16 %v3960
        %v4009 = vunpack.c.l.b16 %v3961
        %v4010 = vpack.c.b16 %v3995, %v3994
        %v4011 = vpack.c.b16 %v3997, %v3996
        %v4012 = vpack.c.b16 %v3999, %v3998
        %v4013 = vpack.c.b16 %v4001, %v4000
        %v4014 = vpack.c.b16 %v4003, %v4002
        %v4015 = vpack.c.b16 %v4005, %v4004
        %v4016 = vpack.c.b16 %v4007, %v4006
        %v4017 = vpack.c.b16 %v4009, %v4008
        %v4042 = vunpack.c.l.b16 %v3929
        %v4043 = vunpack.c.l.b16 %v3930
        %v4044 = vunpack.c.l.b16 %v3931
        %v4045 = vunpack.c.l.b16 %v3932
        %v4046 = vunpack.c.l.b16 %v3933
        %v4047 = vunpack.c.l.b16 %v3934
        %v4048 = vunpack.c.l.b16 %v3935
        %v4049 = vunpack.c.l.b16 %v3936
        %v4050 = vunpack.c.l.b16 %v3937
        %v4051 = vunpack.c.l.b16 %v3938
        %v4052 = vunpack.c.l.b16 %v3939
        %v4053 = vunpack.c.l.b16 %v3940
        %v4054 = vunpack.c.l.b16 %v3941
        %v4055 = vunpack.c.l.b16 %v3942
        %v4056 = vunpack.c.l.b16 %v3943
        %v4057 = vunpack.c.l.b16 %v3944
        %v4058 = vpack.c.b16 %v4043, %v4042
        %v4059 = vpack.c.b16 %v4045, %v4044
        %v4060 = vpack.c.b16 %v4047, %v4046
        %v4061 = vpack.c.b16 %v4049, %v4048
        %v4062 = vpack.c.b16 %v4051, %v4050
        %v4063 = vpack.c.b16 %v4053, %v4052
        %v4064 = vpack.c.b16 %v4055, %v4054
        %v4065 = vpack.c.b16 %v4057, %v4056
        %4074 = vmatpush.bf16.msra.mxu0 %v4065
        %4075 = vmatpush.bf16.msra.mxu0 %v4064
        %4076 = vmatpush.bf16.msra.mxu0 %v4063
        %4077 = vmatpush.bf16.msra.mxu0 %v4062
        %4078 = vmatpush.bf16.msra.mxu0 %v4061
        %4079 = vmatpush.bf16.msra.mxu0 %v4060
        %4080 = vmatpush.bf16.msra.mxu0 %v4059
        %4081 = vmatpush.bf16.msra.mxu0 %v4058
        %4082 = vmatmul.bf16.gmra.mxu0 %v4010
        %v4083 = vpop.f32.mrf.mxu0
        %v4084 = vadd.f32 %v3962, %v4083
        %v4085 = vpop.f32.mrf.mxu0
        %v4086 = vadd.f32 %v3963, %v4085
        %4087 = vmatmul.bf16.gmra.mxu0 %v4011
        %v4088 = vpop.f32.mrf.mxu0
        %v4089 = vadd.f32 %v3964, %v4088
        %v4090 = vpop.f32.mrf.mxu0
        %v4091 = vadd.f32 %v3965, %v4090
        %4092 = vmatmul.bf16.gmra.mxu0 %v4012
        %v4093 = vpop.f32.mrf.mxu0
        %v4094 = vadd.f32 %v3966, %v4093
        %v4095 = vpop.f32.mrf.mxu0
        %v4096 = vadd.f32 %v3967, %v4095
        %4097 = vmatmul.bf16.gmra.mxu0 %v4013
        %v4098 = vpop.f32.mrf.mxu0
        %v4099 = vadd.f32 %v3968, %v4098
        %v4100 = vpop.f32.mrf.mxu0
        %v4101 = vadd.f32 %v3969, %v4100
        %4102 = vmatmul.bf16.gmra.mxu0 %v4014
        %v4103 = vpop.f32.mrf.mxu0
        %v4104 = vadd.f32 %v3970, %v4103
        %v4105 = vpop.f32.mrf.mxu0
        %v4106 = vadd.f32 %v3971, %v4105
        %4107 = vmatmul.bf16.gmra.mxu0 %v4015
        %v4108 = vpop.f32.mrf.mxu0
        %v4109 = vadd.f32 %v3972, %v4108
        %v4110 = vpop.f32.mrf.mxu0
        %v4111 = vadd.f32 %v3973, %v4110
        %4112 = vmatmul.bf16.gmra.mxu0 %v4016
        %v4113 = vpop.f32.mrf.mxu0
        %v4114 = vadd.f32 %v3974, %v4113
        %v4115 = vpop.f32.mrf.mxu0
        %v4116 = vadd.f32 %v3975, %v4115
        %4117 = vmatmul.bf16.gmra.mxu0 %v4017
        %v4118 = vpop.f32.mrf.mxu0
        %v4119 = vadd.f32 %v3976, %v4118
        %v4120 = vpop.f32.mrf.mxu0
        %v4121 = vadd.f32 %v3977, %v4120
        %4122 = vdwg.mxu0
        %4123 = vmatpush.msra.mxu0 %v500
        %4124 = vmatpush.msra.mxu0 %v499
        %4125 = vmatpush.msra.mxu0 %v498
        %4126 = vmatpush.msra.mxu0 %v497
        %4127 = vmatpush.msra.mxu0 %v496
        %4128 = vmatpush.msra.mxu0 %v495
        %4129 = vmatpush.msra.mxu0 %v494
        %4130 = vmatpush.msra.mxu0 %v493
        %4131 = vmatpush.msra.mxu0 %v492
        %4132 = vmatpush.msra.mxu0 %v491
        %4133 = vmatpush.msra.mxu0 %v490
        %4134 = vmatpush.msra.mxu0 %v489
        %4135 = vmatpush.msra.mxu0 %v488
        %4136 = vmatpush.msra.mxu0 %v487
        %4137 = vmatpush.msra.mxu0 %v486
        %4138 = vmatpush.msra.mxu0 %v485
        %4139 = vmatmul.f32.gmra.mxu0 %v4084
        %v4140 = vpop.f32.mrf.mxu0
        %v4141 = vadd.f32 %v725, %v4140
        %4142 = vmatmul.f32.gmra.mxu0 %v4086
        %v4143 = vpop.f32.mrf.mxu0
        %v4144 = vadd.f32 %v725, %v4143
        %4145 = vmatmul.f32.gmra.mxu0 %v4089
        %v4146 = vpop.f32.mrf.mxu0
        %v4147 = vadd.f32 %v725, %v4146
        %4148 = vmatmul.f32.gmra.mxu0 %v4091
        %v4149 = vpop.f32.mrf.mxu0
        %v4150 = vadd.f32 %v725, %v4149
        %4151 = vmatmul.f32.gmra.mxu0 %v4094
        %v4152 = vpop.f32.mrf.mxu0
        %v4153 = vadd.f32 %v725, %v4152
        %4154 = vmatmul.f32.gmra.mxu0 %v4096
        %v4155 = vpop.f32.mrf.mxu0
        %v4156 = vadd.f32 %v725, %v4155
        %4157 = vmatmul.f32.gmra.mxu0 %v4099
        %v4158 = vpop.f32.mrf.mxu0
        %v4159 = vadd.f32 %v725, %v4158
        %4160 = vmatmul.f32.gmra.mxu0 %v4101
        %v4161 = vpop.f32.mrf.mxu0
        %v4162 = vadd.f32 %v725, %v4161
        %4163 = vmatmul.f32.gmra.mxu0 %v4104
        %v4164 = vpop.f32.mrf.mxu0
        %v4165 = vadd.f32 %v725, %v4164
        %4166 = vmatmul.f32.gmra.mxu0 %v4106
        %v4167 = vpop.f32.mrf.mxu0
        %v4168 = vadd.f32 %v725, %v4167
        %4169 = vmatmul.f32.gmra.mxu0 %v4109
        %v4170 = vpop.f32.mrf.mxu0
        %v4171 = vadd.f32 %v725, %v4170
        %4172 = vmatmul.f32.gmra.mxu0 %v4111
        %v4173 = vpop.f32.mrf.mxu0
        %v4174 = vadd.f32 %v725, %v4173
        %4175 = vmatmul.f32.gmra.mxu0 %v4114
        %v4176 = vpop.f32.mrf.mxu0
        %v4177 = vadd.f32 %v725, %v4176
        %4178 = vmatmul.f32.gmra.mxu0 %v4116
        %v4179 = vpop.f32.mrf.mxu0
        %v4180 = vadd.f32 %v725, %v4179
        %4181 = vmatmul.f32.gmra.mxu0 %v4119
        %v4182 = vpop.f32.mrf.mxu0
        %v4183 = vadd.f32 %v725, %v4182
        %4184 = vmatmul.f32.gmra.mxu0 %v4121
        %v4185 = vpop.f32.mrf.mxu0
        %v4186 = vadd.f32 %v725, %v4185
        %4187 = vdwg.mxu0
        %v4188 = vmax.f32 %v4141, 0.0
        %v4189 = vmax.f32 %v4144, 0.0
        %v4190 = vmax.f32 %v4147, 0.0
        %v4191 = vmax.f32 %v4150, 0.0
        %v4192 = vmax.f32 %v4153, 0.0
        %v4193 = vmax.f32 %v4156, 0.0
        %v4194 = vmax.f32 %v4159, 0.0
        %v4195 = vmax.f32 %v4162, 0.0
        %v4196 = vmax.f32 %v4165, 0.0
        %v4197 = vmax.f32 %v4168, 0.0
        %v4198 = vmax.f32 %v4171, 0.0
        %v4199 = vmax.f32 %v4174, 0.0
        %v4200 = vmax.f32 %v4177, 0.0
        %v4201 = vmax.f32 %v4180, 0.0
        %v4202 = vmax.f32 %v4183, 0.0
        %v4203 = vmax.f32 %v4186, 0.0
        %v4204 = vpack.c.bf16 %v4189, %v4188
        %v4205 = vpack.c.bf16 %v4191, %v4190
        %v4206 = vpack.c.bf16 %v4193, %v4192
        %v4207 = vpack.c.bf16 %v4195, %v4194
        %v4208 = vpack.c.bf16 %v4197, %v4196
        %v4209 = vpack.c.bf16 %v4199, %v4198
        %v4210 = vpack.c.bf16 %v4201, %v4200
        %v4211 = vpack.c.bf16 %v4203, %v4202
        %4212 = vmatpush.bf16.msra.mxu0 %v4211
        %4213 = vmatpush.bf16.msra.mxu0 %v4210
        %4214 = vmatpush.bf16.msra.mxu0 %v4209
        %4215 = vmatpush.bf16.msra.mxu0 %v4208
        %4216 = vmatpush.bf16.msra.mxu0 %v4207
        %4217 = vmatpush.bf16.msra.mxu0 %v4206
        %4218 = vmatpush.bf16.msra.mxu0 %v4205
        %4219 = vmatpush.bf16.msra.mxu0 %v4204
        %4220 = vmatmul.bf16.gmra.mxu0 %v4010
        %v4221 = vpop.f32.mrf.mxu0
        %v4222 = vadd.f32 %v4188, %v4221
        %v4223 = vpop.f32.mrf.mxu0
        %v4224 = vadd.f32 %v4189, %v4223
        %4225 = vmatmul.bf16.gmra.mxu0 %v4011
        %v4226 = vpop.f32.mrf.mxu0
        %v4227 = vadd.f32 %v4190, %v4226
        %v4228 = vpop.f32.mrf.mxu0
        %v4229 = vadd.f32 %v4191, %v4228
        %4230 = vmatmul.bf16.gmra.mxu0 %v4012
        %v4231 = vpop.f32.mrf.mxu0
        %v4232 = vadd.f32 %v4192, %v4231
        %v4233 = vpop.f32.mrf.mxu0
        %v4234 = vadd.f32 %v4193, %v4233
        %4235 = vmatmul.bf16.gmra.mxu0 %v4013
        %v4236 = vpop.f32.mrf.mxu0
        %v4237 = vadd.f32 %v4194, %v4236
        %v4238 = vpop.f32.mrf.mxu0
        %v4239 = vadd.f32 %v4195, %v4238
        %4240 = vmatmul.bf16.gmra.mxu0 %v4014
        %v4241 = vpop.f32.mrf.mxu0
        %v4242 = vadd.f32 %v4196, %v4241
        %v4243 = vpop.f32.mrf.mxu0
        %v4244 = vadd.f32 %v4197, %v4243
        %4245 = vmatmul.bf16.gmra.mxu0 %v4015
        %v4246 = vpop.f32.mrf.mxu0
        %v4247 = vadd.f32 %v4198, %v4246
        %v4248 = vpop.f32.mrf.mxu0
        %v4249 = vadd.f32 %v4199, %v4248
        %4250 = vmatmul.bf16.gmra.mxu0 %v4016
        %v4251 = vpop.f32.mrf.mxu0
        %v4252 = vadd.f32 %v4200, %v4251
        %v4253 = vpop.f32.mrf.mxu0
        %v4254 = vadd.f32 %v4201, %v4253
        %4255 = vmatmul.bf16.gmra.mxu0 %v4017
        %v4256 = vpop.f32.mrf.mxu0
        %v4257 = vadd.f32 %v4202, %v4256
        %v4258 = vpop.f32.mrf.mxu0
        %v4259 = vadd.f32 %v4203, %v4258
        %4260 = vdwg.mxu0
        %v4262 = vsel %vm868, %v4222, 0
        %v4265 = vsel %vm868, %v4224, 0
        %v4268 = vsel %vm868, %v4227, 0
        %v4271 = vsel %vm868, %v4229, 0
        %v4274 = vsel %vm868, %v4232, 0
        %v4277 = vsel %vm868, %v4234, 0
        %v4280 = vsel %vm868, %v4237, 0
        %v4283 = vsel %vm868, %v4239, 0
        %v4286 = vsel %vm868, %v4242, 0
        %v4289 = vsel %vm868, %v4244, 0
        %v4292 = vsel %vm868, %v4247, 0
        %v4295 = vsel %vm868, %v4249, 0
        %v4298 = vsel %vm868, %v4252, 0
        %v4301 = vsel %vm868, %v4254, 0
        %v4304 = vsel %vm868, %v4257, 0
        %v4307 = vsel %vm868, %v4259, 0
        %4309 = vmatpush.msra.mxu0 0.0
        %4310 = vmatpush.msra.mxu0 0.0
        %4311 = vmatpush.msra.mxu0 0.0
        %4312 = vmatpush.msra.mxu0 0.0
        %4313 = vmatpush.msra.mxu0 0.0
        %4314 = vmatpush.msra.mxu0 0.0
        %4315 = vmatpush.msra.mxu0 0.0
        %4316 = vmatpush.msra.mxu0 0.0
        %4317 = vmatpush.msra.mxu0 0.0
        %4318 = vmatpush.msra.mxu0 0.0
        %4319 = vmatpush.msra.mxu0 0.0
        %4320 = vmatpush.msra.mxu0 0.0
        %4321 = vmatpush.msra.mxu0 %v505
        %4322 = vmatpush.msra.mxu0 %v504
        %4323 = vmatpush.msra.mxu0 %v503
        %4324 = vmatpush.msra.mxu0 %v502
        %4325 = vmatmul.f32.gmra.mxu0 %v4262
        %v4326 = vpop.f32.mrf.mxu0
        %v4327 = vadd.f32 %v866, %v4326
        %4328 = vmatmul.f32.gmra.mxu0 %v4265
        %v4329 = vpop.f32.mrf.mxu0
        %v4330 = vadd.f32 %v866, %v4329
        %4331 = vmatmul.f32.gmra.mxu0 %v4268
        %v4332 = vpop.f32.mrf.mxu0
        %v4333 = vadd.f32 %v866, %v4332
        %4334 = vmatmul.f32.gmra.mxu0 %v4271
        %v4335 = vpop.f32.mrf.mxu0
        %v4336 = vadd.f32 %v866, %v4335
        %4337 = vmatmul.f32.gmra.mxu0 %v4274
        %v4338 = vpop.f32.mrf.mxu0
        %v4339 = vadd.f32 %v866, %v4338
        %4340 = vmatmul.f32.gmra.mxu0 %v4277
        %v4341 = vpop.f32.mrf.mxu0
        %v4342 = vadd.f32 %v866, %v4341
        %4343 = vmatmul.f32.gmra.mxu0 %v4280
        %v4344 = vpop.f32.mrf.mxu0
        %v4345 = vadd.f32 %v866, %v4344
        %4346 = vmatmul.f32.gmra.mxu0 %v4283
        %v4347 = vpop.f32.mrf.mxu0
        %v4348 = vadd.f32 %v866, %v4347
        %4349 = vmatmul.f32.gmra.mxu0 %v4286
        %v4350 = vpop.f32.mrf.mxu0
        %v4351 = vadd.f32 %v866, %v4350
        %4352 = vmatmul.f32.gmra.mxu0 %v4289
        %v4353 = vpop.f32.mrf.mxu0
        %v4354 = vadd.f32 %v866, %v4353
        %4355 = vmatmul.f32.gmra.mxu0 %v4292
        %v4356 = vpop.f32.mrf.mxu0
        %v4357 = vadd.f32 %v866, %v4356
        %4358 = vmatmul.f32.gmra.mxu0 %v4295
        %v4359 = vpop.f32.mrf.mxu0
        %v4360 = vadd.f32 %v866, %v4359
        %4361 = vmatmul.f32.gmra.mxu0 %v4298
        %v4362 = vpop.f32.mrf.mxu0
        %v4363 = vadd.f32 %v866, %v4362
        %4364 = vmatmul.f32.gmra.mxu0 %v4301
        %v4365 = vpop.f32.mrf.mxu0
        %v4366 = vadd.f32 %v866, %v4365
        %4367 = vmatmul.f32.gmra.mxu0 %v4304
        %v4368 = vpop.f32.mrf.mxu0
        %v4369 = vadd.f32 %v866, %v4368
        %4370 = vmatmul.f32.gmra.mxu0 %v4307
        %v4371 = vpop.f32.mrf.mxu0
        %v4372 = vadd.f32 %v866, %v4371
        %4373 = vdwg.mxu0
        %v4375 = vsel %vm868, %v4327, 0
        %v4378 = vsel %vm868, %v4330, 0
        %v4381 = vsel %vm868, %v4333, 0
        %v4384 = vsel %vm868, %v4336, 0
        %v4387 = vsel %vm868, %v4339, 0
        %v4390 = vsel %vm868, %v4342, 0
        %v4393 = vsel %vm868, %v4345, 0
        %v4396 = vsel %vm868, %v4348, 0
        %v4399 = vsel %vm868, %v4351, 0
        %v4402 = vsel %vm868, %v4354, 0
        %v4405 = vsel %vm868, %v4357, 0
        %v4408 = vsel %vm868, %v4360, 0
        %v4411 = vsel %vm868, %v4363, 0
        %v4414 = vsel %vm868, %v4366, 0
        %v4417 = vsel %vm868, %v4369, 0
        %v4420 = vsel %vm868, %v4372, 0
        %4422 = vmatpush.msra.mxu0 0.0
        %4423 = vmatpush.msra.mxu0 0.0
        %4424 = vmatpush.msra.mxu0 0.0
        %4425 = vmatpush.msra.mxu0 0.0
        %4426 = vmatpush.msra.mxu0 0.0
        %4427 = vmatpush.msra.mxu0 0.0
        %4428 = vmatpush.msra.mxu0 0.0
        %4429 = vmatpush.msra.mxu0 0.0
        %4430 = vmatpush.msra.mxu0 0.0
        %4431 = vmatpush.msra.mxu0 0.0
        %4432 = vmatpush.msra.mxu0 0.0
        %4433 = vmatpush.msra.mxu0 0.0
        %4434 = vmatpush.msra.mxu0 %v510
        %4435 = vmatpush.msra.mxu0 %v509
        %4436 = vmatpush.msra.mxu0 %v508
        %4437 = vmatpush.msra.mxu0 %v507
        %4438 = vmatmul.f32.gmra.mxu0 %v4375
        %v4439 = vpop.f32.mrf.mxu0
        %v4440 = vadd.f32 %v983, %v4439
        %4441 = vmatmul.f32.gmra.mxu0 %v4378
        %v4442 = vpop.f32.mrf.mxu0
        %v4443 = vadd.f32 %v983, %v4442
        %4444 = vmatmul.f32.gmra.mxu0 %v4381
        %v4445 = vpop.f32.mrf.mxu0
        %v4446 = vadd.f32 %v983, %v4445
        %4447 = vmatmul.f32.gmra.mxu0 %v4384
        %v4448 = vpop.f32.mrf.mxu0
        %v4449 = vadd.f32 %v983, %v4448
        %4450 = vmatmul.f32.gmra.mxu0 %v4387
        %v4451 = vpop.f32.mrf.mxu0
        %v4452 = vadd.f32 %v983, %v4451
        %4453 = vmatmul.f32.gmra.mxu0 %v4390
        %v4454 = vpop.f32.mrf.mxu0
        %v4455 = vadd.f32 %v983, %v4454
        %4456 = vmatmul.f32.gmra.mxu0 %v4393
        %v4457 = vpop.f32.mrf.mxu0
        %v4458 = vadd.f32 %v983, %v4457
        %4459 = vmatmul.f32.gmra.mxu0 %v4396
        %v4460 = vpop.f32.mrf.mxu0
        %v4461 = vadd.f32 %v983, %v4460
        %4462 = vmatmul.f32.gmra.mxu0 %v4399
        %v4463 = vpop.f32.mrf.mxu0
        %v4464 = vadd.f32 %v983, %v4463
        %4465 = vmatmul.f32.gmra.mxu0 %v4402
        %v4466 = vpop.f32.mrf.mxu0
        %v4467 = vadd.f32 %v983, %v4466
        %4468 = vmatmul.f32.gmra.mxu0 %v4405
        %v4469 = vpop.f32.mrf.mxu0
        %v4470 = vadd.f32 %v983, %v4469
        %4471 = vmatmul.f32.gmra.mxu0 %v4408
        %v4472 = vpop.f32.mrf.mxu0
        %v4473 = vadd.f32 %v983, %v4472
        %4474 = vmatmul.f32.gmra.mxu0 %v4411
        %v4475 = vpop.f32.mrf.mxu0
        %v4476 = vadd.f32 %v983, %v4475
        %4477 = vmatmul.f32.gmra.mxu0 %v4414
        %v4478 = vpop.f32.mrf.mxu0
        %v4479 = vadd.f32 %v983, %v4478
        %4480 = vmatmul.f32.gmra.mxu0 %v4417
        %v4481 = vpop.f32.mrf.mxu0
        %v4482 = vadd.f32 %v983, %v4481
        %4483 = vmatmul.f32.gmra.mxu0 %v4420
        %v4484 = vpop.f32.mrf.mxu0
        %v4485 = vadd.f32 %v983, %v4484
        %4486 = vdwg.mxu0
        %v4487 = vsel %vm868, %v4440, -inf
        %4488 = vmax.xlane.f32.xlu0 %v4487
        %v4489 = vpop.xlane.xlu0 %4488
        %v4490 = vsel %vm868, %v4443, -inf
        %4491 = vmax.xlane.f32.xlu0 %v4490
        %v4492 = vpop.xlane.xlu0 %4491
        %v4493 = vsel %vm868, %v4446, -inf
        %4494 = vmax.xlane.f32.xlu0 %v4493
        %v4495 = vpop.xlane.xlu0 %4494
        %v4496 = vsel %vm868, %v4449, -inf
        %4497 = vmax.xlane.f32.xlu0 %v4496
        %v4498 = vpop.xlane.xlu0 %4497
        %v4499 = vsel %vm868, %v4452, -inf
        %4500 = vmax.xlane.f32.xlu0 %v4499
        %v4501 = vpop.xlane.xlu0 %4500
        %v4502 = vsel %vm868, %v4455, -inf
        %4503 = vmax.xlane.f32.xlu0 %v4502
        %v4504 = vpop.xlane.xlu0 %4503
        %v4505 = vsel %vm868, %v4458, -inf
        %4506 = vmax.xlane.f32.xlu0 %v4505
        %v4507 = vpop.xlane.xlu0 %4506
        %v4508 = vsel %vm868, %v4461, -inf
        %4509 = vmax.xlane.f32.xlu0 %v4508
        %v4510 = vpop.xlane.xlu0 %4509
        %v4511 = vsel %vm868, %v4464, -inf
        %4512 = vmax.xlane.f32.xlu0 %v4511
        %v4513 = vpop.xlane.xlu0 %4512
        %v4514 = vsel %vm868, %v4467, -inf
        %4515 = vmax.xlane.f32.xlu0 %v4514
        %v4516 = vpop.xlane.xlu0 %4515
        %v4517 = vsel %vm868, %v4470, -inf
        %4518 = vmax.xlane.f32.xlu0 %v4517
        %v4519 = vpop.xlane.xlu0 %4518
        %v4520 = vsel %vm868, %v4473, -inf
        %4521 = vmax.xlane.f32.xlu0 %v4520
        %v4522 = vpop.xlane.xlu0 %4521
        %v4523 = vsel %vm868, %v4476, -inf
        %4524 = vmax.xlane.f32.xlu0 %v4523
        %v4525 = vpop.xlane.xlu0 %4524
        %v4526 = vsel %vm868, %v4479, -inf
        %4527 = vmax.xlane.f32.xlu0 %v4526
        %v4528 = vpop.xlane.xlu0 %4527
        %v4529 = vsel %vm868, %v4482, -inf
        %4530 = vmax.xlane.f32.xlu0 %v4529
        %v4531 = vpop.xlane.xlu0 %4530
        %v4532 = vsel %vm868, %v4485, -inf
        %4533 = vmax.xlane.f32.xlu0 %v4532
        %v4534 = vpop.xlane.xlu0 %4533
        %v4535 = vsub.f32 %v4440, %v4489
        %v4536 = vsub.f32 %v4443, %v4492
        %v4537 = vsub.f32 %v4446, %v4495
        %v4538 = vsub.f32 %v4449, %v4498
        %v4539 = vsub.f32 %v4452, %v4501
        %v4540 = vsub.f32 %v4455, %v4504
        %v4541 = vsub.f32 %v4458, %v4507
        %v4542 = vsub.f32 %v4461, %v4510
        %v4543 = vsub.f32 %v4464, %v4513
        %v4544 = vsub.f32 %v4467, %v4516
        %v4545 = vsub.f32 %v4470, %v4519
        %v4546 = vsub.f32 %v4473, %v4522
        %v4547 = vsub.f32 %v4476, %v4525
        %v4548 = vsub.f32 %v4479, %v4528
        %v4549 = vsub.f32 %v4482, %v4531
        %v4550 = vsub.f32 %v4485, %v4534
        %v4551 = vmul.f32 %v4535, 1.442695
        %v4552 = vpow.pop %v4551
        %v4553 = vmul.f32 %v4536, 1.442695
        %v4554 = vpow.pop %v4553
        %v4555 = vmul.f32 %v4537, 1.442695
        %v4556 = vpow.pop %v4555
        %v4557 = vmul.f32 %v4538, 1.442695
        %v4558 = vpow.pop %v4557
        %v4559 = vmul.f32 %v4539, 1.442695
        %v4560 = vpow.pop %v4559
        %v4561 = vmul.f32 %v4540, 1.442695
        %v4562 = vpow.pop %v4561
        %v4563 = vmul.f32 %v4541, 1.442695
        %v4564 = vpow.pop %v4563
        %v4565 = vmul.f32 %v4542, 1.442695
        %v4566 = vpow.pop %v4565
        %v4567 = vmul.f32 %v4543, 1.442695
        %v4568 = vpow.pop %v4567
        %v4569 = vmul.f32 %v4544, 1.442695
        %v4570 = vpow.pop %v4569
        %v4571 = vmul.f32 %v4545, 1.442695
        %v4572 = vpow.pop %v4571
        %v4573 = vmul.f32 %v4546, 1.442695
        %v4574 = vpow.pop %v4573
        %v4575 = vmul.f32 %v4547, 1.442695
        %v4576 = vpow.pop %v4575
        %v4577 = vmul.f32 %v4548, 1.442695
        %v4578 = vpow.pop %v4577
        %v4579 = vmul.f32 %v4549, 1.442695
        %v4580 = vpow.pop %v4579
        %v4581 = vmul.f32 %v4550, 1.442695
        %v4582 = vpow.pop %v4581
        %v4583 = vsel %vm868, %v4552, 0.0
        %4584 = vadd.xlane.f32.xlu0 %v4583
        %v4585 = vpop.xlane.xlu0 %4584
        %v4586 = vsel %vm868, %v4554, 0.0
        %4587 = vadd.xlane.f32.xlu0 %v4586
        %v4588 = vpop.xlane.xlu0 %4587
        %v4589 = vsel %vm868, %v4556, 0.0
        %4590 = vadd.xlane.f32.xlu0 %v4589
        %v4591 = vpop.xlane.xlu0 %4590
        %v4592 = vsel %vm868, %v4558, 0.0
        %4593 = vadd.xlane.f32.xlu0 %v4592
        %v4594 = vpop.xlane.xlu0 %4593
        %v4595 = vsel %vm868, %v4560, 0.0
        %4596 = vadd.xlane.f32.xlu0 %v4595
        %v4597 = vpop.xlane.xlu0 %4596
        %v4598 = vsel %vm868, %v4562, 0.0
        %4599 = vadd.xlane.f32.xlu0 %v4598
        %v4600 = vpop.xlane.xlu0 %4599
        %v4601 = vsel %vm868, %v4564, 0.0
        %4602 = vadd.xlane.f32.xlu0 %v4601
        %v4603 = vpop.xlane.xlu0 %4602
        %v4604 = vsel %vm868, %v4566, 0.0
        %4605 = vadd.xlane.f32.xlu0 %v4604
        %v4606 = vpop.xlane.xlu0 %4605
        %v4607 = vsel %vm868, %v4568, 0.0
        %4608 = vadd.xlane.f32.xlu0 %v4607
        %v4609 = vpop.xlane.xlu0 %4608
        %v4610 = vsel %vm868, %v4570, 0.0
        %4611 = vadd.xlane.f32.xlu0 %v4610
        %v4612 = vpop.xlane.xlu0 %4611
        %v4613 = vsel %vm868, %v4572, 0.0
        %4614 = vadd.xlane.f32.xlu0 %v4613
        %v4615 = vpop.xlane.xlu0 %4614
        %v4616 = vsel %vm868, %v4574, 0.0
        %4617 = vadd.xlane.f32.xlu0 %v4616
        %v4618 = vpop.xlane.xlu0 %4617
        %v4619 = vsel %vm868, %v4576, 0.0
        %4620 = vadd.xlane.f32.xlu0 %v4619
        %v4621 = vpop.xlane.xlu0 %4620
        %v4622 = vsel %vm868, %v4578, 0.0
        %4623 = vadd.xlane.f32.xlu0 %v4622
        %v4624 = vpop.xlane.xlu0 %4623
        %v4625 = vsel %vm868, %v4580, 0.0
        %4626 = vadd.xlane.f32.xlu0 %v4625
        %v4627 = vpop.xlane.xlu0 %4626
        %v4628 = vsel %vm868, %v4582, 0.0
        %4629 = vadd.xlane.f32.xlu0 %v4628
        %v4630 = vpop.xlane.xlu0 %4629
        %v4631 = vrcp.pop %v4585
        %v4632 = vrcp.pop %v4588
        %v4633 = vrcp.pop %v4591
        %v4634 = vrcp.pop %v4594
        %v4635 = vrcp.pop %v4597
        %v4636 = vrcp.pop %v4600
        %v4637 = vrcp.pop %v4603
        %v4638 = vrcp.pop %v4606
        %v4639 = vrcp.pop %v4609
        %v4640 = vrcp.pop %v4612
        %v4641 = vrcp.pop %v4615
        %v4642 = vrcp.pop %v4618
        %v4643 = vrcp.pop %v4621
        %v4644 = vrcp.pop %v4624
        %v4645 = vrcp.pop %v4627
        %v4646 = vrcp.pop %v4630
        %v4647 = vmul.f32 %v4552, %v4631
        %v4648 = vmul.f32 %v4554, %v4632
        %v4649 = vmul.f32 %v4556, %v4633
        %v4650 = vmul.f32 %v4558, %v4634
        %v4651 = vmul.f32 %v4560, %v4635
        %v4652 = vmul.f32 %v4562, %v4636
        %v4653 = vmul.f32 %v4564, %v4637
        %v4654 = vmul.f32 %v4566, %v4638
        %v4655 = vmul.f32 %v4568, %v4639
        %v4656 = vmul.f32 %v4570, %v4640
        %v4657 = vmul.f32 %v4572, %v4641
        %v4658 = vmul.f32 %v4574, %v4642
        %v4659 = vmul.f32 %v4576, %v4643
        %v4660 = vmul.f32 %v4578, %v4644
        %v4661 = vmul.f32 %v4580, %v4645
        %v4662 = vmul.f32 %v4582, %v4646
        %v4663 = vlog2.pop %v4585
        %v4664 = vmul.f32 %v4663, 0.6931472
        %v4665 = vlog2.pop %v4588
        %v4666 = vmul.f32 %v4665, 0.6931472
        %v4667 = vlog2.pop %v4591
        %v4668 = vmul.f32 %v4667, 0.6931472
        %v4669 = vlog2.pop %v4594
        %v4670 = vmul.f32 %v4669, 0.6931472
        %v4671 = vlog2.pop %v4597
        %v4672 = vmul.f32 %v4671, 0.6931472
        %v4673 = vlog2.pop %v4600
        %v4674 = vmul.f32 %v4673, 0.6931472
        %v4675 = vlog2.pop %v4603
        %v4676 = vmul.f32 %v4675, 0.6931472
        %v4677 = vlog2.pop %v4606
        %v4678 = vmul.f32 %v4677, 0.6931472
        %v4679 = vlog2.pop %v4609
        %v4680 = vmul.f32 %v4679, 0.6931472
        %v4681 = vlog2.pop %v4612
        %v4682 = vmul.f32 %v4681, 0.6931472
        %v4683 = vlog2.pop %v4615
        %v4684 = vmul.f32 %v4683, 0.6931472
        %v4685 = vlog2.pop %v4618
        %v4686 = vmul.f32 %v4685, 0.6931472
        %v4687 = vlog2.pop %v4621
        %v4688 = vmul.f32 %v4687, 0.6931472
        %v4689 = vlog2.pop %v4624
        %v4690 = vmul.f32 %v4689, 0.6931472
        %v4691 = vlog2.pop %v4627
        %v4692 = vmul.f32 %v4691, 0.6931472
        %v4693 = vlog2.pop %v4630
        %v4694 = vmul.f32 %v4693, 0.6931472
        %v4695 = vsub.f32 %v4535, %v4664
        %v4696 = vsub.f32 %v4536, %v4666
        %v4697 = vsub.f32 %v4537, %v4668
        %v4698 = vsub.f32 %v4538, %v4670
        %v4699 = vsub.f32 %v4539, %v4672
        %v4700 = vsub.f32 %v4540, %v4674
        %v4701 = vsub.f32 %v4541, %v4676
        %v4702 = vsub.f32 %v4542, %v4678
        %v4703 = vsub.f32 %v4543, %v4680
        %v4704 = vsub.f32 %v4544, %v4682
        %v4705 = vsub.f32 %v4545, %v4684
        %v4706 = vsub.f32 %v4546, %v4686
        %v4707 = vsub.f32 %v4547, %v4688
        %v4708 = vsub.f32 %v4548, %v4690
        %v4709 = vsub.f32 %v4549, %v4692
        %v4710 = vsub.f32 %v4550, %v4694
        %v4711 = vpack.c.bf16 %v4648, %v4647
        %v4712 = vpack.c.bf16 %v4650, %v4649
        %v4713 = vpack.c.bf16 %v4652, %v4651
        %v4714 = vpack.c.bf16 %v4654, %v4653
        %v4715 = vpack.c.bf16 %v4656, %v4655
        %v4716 = vpack.c.bf16 %v4658, %v4657
        %v4717 = vpack.c.bf16 %v4660, %v4659
        %v4718 = vpack.c.bf16 %v4662, %v4661
        %4719 = vxpose.xlu0.c.b16.start [1/8] %v4711, 128
        %4720 = vxpose.xlu0.c.b16.cont [2/8] %v4712, 128
        %4721 = vxpose.xlu0.c.b16.cont [3/8] %v4713, 128
        %4722 = vxpose.xlu0.c.b16.cont [4/8] %v4714, 128
        %4723 = vxpose.xlu0.c.b16.cont [5/8] %v4715, 128
        %4724 = vxpose.xlu0.c.b16.cont [6/8] %v4716, 128
        %4725 = vxpose.xlu0.c.b16.cont [7/8] %v4717, 128
        %4726 = vxpose.xlu0.c.b16.end [8/8] %v4718, 128
        %v4727 = vpop.trf.xlu0
        %v4728 = vpop.trf.xlu0
        %v4729 = vpop.trf.xlu0
        %v4730 = vpop.trf.xlu0
        %v4731 = vpop.trf.xlu0
        %v4732 = vpop.trf.xlu0
        %v4733 = vpop.trf.xlu0
        %v4734 = vpop.trf.xlu0
        %4735 = vmatpush.bf16.msra.mxu0 %v4065
        %4736 = vmatpush.bf16.msra.mxu0 %v4064
        %4737 = vmatpush.bf16.msra.mxu0 %v4063
        %4738 = vmatpush.bf16.msra.mxu0 %v4062
        %4739 = vmatpush.bf16.msra.mxu0 %v4061
        %4740 = vmatpush.bf16.msra.mxu0 %v4060
        %4741 = vmatpush.bf16.msra.mxu0 %v4059
        %4742 = vmatpush.bf16.msra.mxu0 %v4058
        %4743 = vmatmul.bf16.gmra.mxu0 %v4727
        %v4744 = vpop.f32.mrf.mxu0
        %v4745 = vadd.f32 0.0, %v4744
        %v4746 = vpop.f32.mrf.mxu0
        %v4747 = vadd.f32 0.0, %v4746
        %4748 = vmatmul.bf16.gmra.mxu0 %v4728
        %v4749 = vpop.f32.mrf.mxu0
        %v4750 = vadd.f32 0.0, %v4749
        %v4751 = vpop.f32.mrf.mxu0
        %v4752 = vadd.f32 0.0, %v4751
        %4753 = vdwg.mxu0
        %s4754 = scalar_lea.vmem %s457, 96 [#allocation7]
        %4755 = vst [vmem:[%s4754] sm:$0xff] %v4745
        %4756 = vst [vmem:[%s4754 + $0x8] sm:$0xff] %v4747
        %4757 = vst [vmem:[%s4754 + $0x10] sm:$0xff] %v4750
        %4758 = vst [vmem:[%s4754 + $0x18] sm:$0xff] %v4752
        %4759 = vmatpush.bf16.msra.mxu0 %v4017
        %4760 = vmatpush.bf16.msra.mxu0 %v4016
        %4761 = vmatpush.bf16.msra.mxu0 %v4015
        %4762 = vmatpush.bf16.msra.mxu0 %v4014
        %4763 = vmatpush.bf16.msra.mxu0 %v4013
        %4764 = vmatpush.bf16.msra.mxu0 %v4012
        %4765 = vmatpush.bf16.msra.mxu0 %v4011
        %4766 = vmatpush.bf16.msra.mxu0 %v4010
        %4767 = vmatmul.bf16.gmra.mxu0 %v4727
        %v4768 = vpop.f32.mrf.mxu0
        %v4769 = vadd.f32 0.0, %v4768
        %v4770 = vpop.f32.mrf.mxu0
        %v4771 = vadd.f32 0.0, %v4770
        %4772 = vmatmul.bf16.gmra.mxu0 %v4728
        %v4773 = vpop.f32.mrf.mxu0
        %v4774 = vadd.f32 0.0, %v4773
        %v4775 = vpop.f32.mrf.mxu0
        %v4776 = vadd.f32 0.0, %v4775
        %4777 = vdwg.mxu0
        %4778 = vmatpush.msra.mxu0 %v4662
        %4779 = vmatpush.msra.mxu0 %v4661
        %4780 = vmatpush.msra.mxu0 %v4660
        %4781 = vmatpush.msra.mxu0 %v4659
        %4782 = vmatpush.msra.mxu0 %v4658
        %4783 = vmatpush.msra.mxu0 %v4657
        %4784 = vmatpush.msra.mxu0 %v4656
        %4785 = vmatpush.msra.mxu0 %v4655
        %4786 = vmatpush.msra.mxu0 %v4654
        %4787 = vmatpush.msra.mxu0 %v4653
        %4788 = vmatpush.msra.mxu0 %v4652
        %4789 = vmatpush.msra.mxu0 %v4651
        %4790 = vmatpush.msra.mxu0 %v4650
        %4791 = vmatpush.msra.mxu0 %v4649
        %4792 = vmatpush.msra.mxu0 %v4648
        %4793 = vmatpush.msra.mxu0 %v4647
        %4794 = vmatmul.f32.gmra.mxu0 %v4769
        %v4795 = vpop.f32.mrf.mxu0
        %v4796 = vadd.f32 0.0, %v4795
        %4797 = vmatmul.f32.gmra.mxu0 %v4771
        %v4798 = vpop.f32.mrf.mxu0
        %v4799 = vadd.f32 0.0, %v4798
        %4800 = vmatmul.f32.gmra.mxu0 %v4774
        %v4801 = vpop.f32.mrf.mxu0
        %v4802 = vadd.f32 0.0, %v4801
        %4803 = vmatmul.f32.gmra.mxu0 %v4776
        %v4804 = vpop.f32.mrf.mxu0
        %v4805 = vadd.f32 0.0, %v4804
        %4806 = vdwg.mxu0
        %s4807 = scalar_lea.vmem %s464, 96 [#allocation8]
        %4808 = vst.msk [vmem:[%s4807] sm:$0xff] %vm868, %v4796
        %4809 = vst.msk [vmem:[%s4807 + $0x8] sm:$0xff] %vm868, %v4799
        %4810 = vst.msk [vmem:[%s4807 + $0x10] sm:$0xff] %vm868, %v4802
        %4811 = vst.msk [vmem:[%s4807 + $0x18] sm:$0xff] %vm868, %v4805
        %v4812 = vunpack.c.l.bf16 %v3946
        %v4813 = vunpack.c.l.bf16 %v3947
        %v4814 = vunpack.c.l.bf16 %v3948
        %v4815 = vunpack.c.l.bf16 %v3949
        %v4816 = vunpack.c.l.bf16 %v3950
        %v4817 = vunpack.c.l.bf16 %v3951
        %v4818 = vunpack.c.l.bf16 %v3952
        %v4819 = vunpack.c.l.bf16 %v3953
        %v4820 = vunpack.c.l.bf16 %v3954
        %v4821 = vunpack.c.l.bf16 %v3955
        %v4822 = vunpack.c.l.bf16 %v3956
        %v4823 = vunpack.c.l.bf16 %v3957
        %v4824 = vunpack.c.l.bf16 %v3958
        %v4825 = vunpack.c.l.bf16 %v3959
        %v4826 = vunpack.c.l.bf16 %v3960
        %v4827 = vunpack.c.l.bf16 %v3961
        %v4828 = vmul.f32 %v4812, %v4812
        %v4829 = vmul.f32 %v4813, %v4813
        %v4830 = vmul.f32 %v4814, %v4814
        %v4831 = vmul.f32 %v4815, %v4815
        %v4832 = vmul.f32 %v4816, %v4816
        %v4833 = vmul.f32 %v4817, %v4817
        %v4834 = vmul.f32 %v4818, %v4818
        %v4835 = vmul.f32 %v4819, %v4819
        %v4836 = vmul.f32 %v4820, %v4820
        %v4837 = vmul.f32 %v4821, %v4821
        %v4838 = vmul.f32 %v4822, %v4822
        %v4839 = vmul.f32 %v4823, %v4823
        %v4840 = vmul.f32 %v4824, %v4824
        %v4841 = vmul.f32 %v4825, %v4825
        %v4842 = vmul.f32 %v4826, %v4826
        %v4843 = vmul.f32 %v4827, %v4827
        %4844 = vadd.xlane.f32.xlu0 %v4828
        %v4845 = vpop.xlane.xlu0 %4844
        %4846 = vadd.xlane.f32.xlu0 %v4829
        %v4847 = vpop.xlane.xlu0 %4846
        %4848 = vadd.xlane.f32.xlu0 %v4830
        %v4849 = vpop.xlane.xlu0 %4848
        %4850 = vadd.xlane.f32.xlu0 %v4831
        %v4851 = vpop.xlane.xlu0 %4850
        %4852 = vadd.xlane.f32.xlu0 %v4832
        %v4853 = vpop.xlane.xlu0 %4852
        %4854 = vadd.xlane.f32.xlu0 %v4833
        %v4855 = vpop.xlane.xlu0 %4854
        %4856 = vadd.xlane.f32.xlu0 %v4834
        %v4857 = vpop.xlane.xlu0 %4856
        %4858 = vadd.xlane.f32.xlu0 %v4835
        %v4859 = vpop.xlane.xlu0 %4858
        %4860 = vadd.xlane.f32.xlu0 %v4836
        %v4861 = vpop.xlane.xlu0 %4860
        %4862 = vadd.xlane.f32.xlu0 %v4837
        %v4863 = vpop.xlane.xlu0 %4862
        %4864 = vadd.xlane.f32.xlu0 %v4838
        %v4865 = vpop.xlane.xlu0 %4864
        %4866 = vadd.xlane.f32.xlu0 %v4839
        %v4867 = vpop.xlane.xlu0 %4866
        %4868 = vadd.xlane.f32.xlu0 %v4840
        %v4869 = vpop.xlane.xlu0 %4868
        %4870 = vadd.xlane.f32.xlu0 %v4841
        %v4871 = vpop.xlane.xlu0 %4870
        %4872 = vadd.xlane.f32.xlu0 %v4842
        %v4873 = vpop.xlane.xlu0 %4872
        %4874 = vadd.xlane.f32.xlu0 %v4843
        %v4875 = vpop.xlane.xlu0 %4874
        %v4876 = vadd.f32 %v4845, %v4847
        %v4877 = vadd.f32 %v4876, %v4849
        %v4878 = vadd.f32 %v4877, %v4851
        %v4879 = vadd.f32 %v4878, %v4853
        %v4880 = vadd.f32 %v4879, %v4855
        %v4881 = vadd.f32 %v4880, %v4857
        %v4882 = vadd.f32 %v4881, %v4859
        %v4883 = vadd.f32 %v4882, %v4861
        %v4884 = vadd.f32 %v4883, %v4863
        %v4885 = vadd.f32 %v4884, %v4865
        %v4886 = vadd.f32 %v4885, %v4867
        %v4887 = vadd.f32 %v4886, %v4869
        %v4888 = vadd.f32 %v4887, %v4871
        %v4889 = vadd.f32 %v4888, %v4873
        %v4890 = vadd.f32 %v4889, %v4875
        %v4891 = vrot.slane %v4890, 4
        %v4892 = vadd.f32 %v4890, %v4891
        %v4893 = vrot.slane %v4892, 2
        %v4894 = vadd.f32 %v4892, %v4893
        %v4895 = vrot.slane %v4894, 1
        %v4896 = vadd.f32 %v4894, %v4895
        %v4897 = vmul.f32 %v4796, %v527
        %v4898 = vmul.f32 %v4799, %v528
        %v4899 = vmul.f32 %v4802, %v529
        %v4900 = vmul.f32 %v4805, %v530
        %v4901 = vsel %vm868, %v4897, 0.0
        %4902 = vadd.xlane.f32.xlu0 %v4901
        %v4903 = vpop.xlane.xlu0 %4902
        %v4904 = vsel %vm868, %v4898, 0.0
        %4905 = vadd.xlane.f32.xlu0 %v4904
        %v4906 = vpop.xlane.xlu0 %4905
        %v4907 = vsel %vm868, %v4899, 0.0
        %4908 = vadd.xlane.f32.xlu0 %v4907
        %v4909 = vpop.xlane.xlu0 %4908
        %v4910 = vsel %vm868, %v4900, 0.0
        %4911 = vadd.xlane.f32.xlu0 %v4910
        %v4912 = vpop.xlane.xlu0 %4911
        %v4913 = vadd.f32 %v4903, %v4906
        %v4914 = vadd.f32 %v4913, %v4909
        %v4915 = vadd.f32 %v4914, %v4912
        %v4916 = vrot.slane %v4915, 4
        %v4917 = vadd.f32 %v4915, %v4916
        %v4918 = vrot.slane %v4917, 2
        %v4919 = vadd.f32 %v4917, %v4918
        %v4920 = vrot.slane %v4919, 1
        %v4921 = vadd.f32 %v4919, %v4920
        %4922 = vmatpush.bf16.msra.mxu0 %v4718
        %4923 = vmatpush.bf16.msra.mxu0 %v4717
        %4924 = vmatpush.bf16.msra.mxu0 %v4716
        %4925 = vmatpush.bf16.msra.mxu0 %v4715
        %4926 = vmatpush.bf16.msra.mxu0 %v4714
        %4927 = vmatpush.bf16.msra.mxu0 %v4713
        %4928 = vmatpush.bf16.msra.mxu0 %v4712
        %4929 = vmatpush.bf16.msra.mxu0 %v4711
        %4930 = vmatmul.bf16.gmra.mxu0 %v4727
        %v4931 = vpop.f32.mrf.mxu0
        %v4932 = vadd.f32 0.0, %v4931
        %v4933 = vpop.f32.mrf.mxu0
        %v4934 = vadd.f32 0.0, %v4933
        %4935 = vmatmul.bf16.gmra.mxu0 %v4728
        %v4936 = vpop.f32.mrf.mxu0
        %v4937 = vadd.f32 0.0, %v4936
        %v4938 = vpop.f32.mrf.mxu0
        %v4939 = vadd.f32 0.0, %v4938
        %4940 = vdwg.mxu0
        %v4941 = vmul.f32 %v4921, 2.0
        %v4942 = vsub.f32 %v4896, %v4941
        %v4943 = vmul.f32 %v4932, %v4932
        %v4944 = vmul.f32 %v4934, %v4934
        %v4945 = vmul.f32 %v4937, %v4937
        %v4946 = vmul.f32 %v4939, %v4939
        %v4947 = vsel %vm868, %v4943, 0.0
        %4948 = vadd.xlane.f32.xlu0 %v4947
        %v4949 = vpop.xlane.xlu0 %4948
        %v4950 = vsel %vm868, %v4944, 0.0
        %4951 = vadd.xlane.f32.xlu0 %v4950
        %v4952 = vpop.xlane.xlu0 %4951
        %v4953 = vsel %vm868, %v4945, 0.0
        %4954 = vadd.xlane.f32.xlu0 %v4953
        %v4955 = vpop.xlane.xlu0 %4954
        %v4956 = vsel %vm868, %v4946, 0.0
        %4957 = vadd.xlane.f32.xlu0 %v4956
        %v4958 = vpop.xlane.xlu0 %4957
        %v4959 = vadd.f32 %v4949, %v4952
        %v4960 = vadd.f32 %v4959, %v4955
        %v4961 = vadd.f32 %v4960, %v4958
        %v4962 = vrot.slane %v4961, 4
        %v4963 = vadd.f32 %v4961, %v4962
        %v4964 = vrot.slane %v4963, 2
        %v4965 = vadd.f32 %v4963, %v4964
        %v4966 = vrot.slane %v4965, 1
        %v4967 = vadd.f32 %v4965, %v4966
        %v4968 = vadd.f32 %v4942, %v4967
        %v4969 = vmul.f32 %v4647, %v4695
        %v4970 = vmul.f32 %v4648, %v4696
        %v4971 = vmul.f32 %v4649, %v4697
        %v4972 = vmul.f32 %v4650, %v4698
        %v4973 = vmul.f32 %v4651, %v4699
        %v4974 = vmul.f32 %v4652, %v4700
        %v4975 = vmul.f32 %v4653, %v4701
        %v4976 = vmul.f32 %v4654, %v4702
        %v4977 = vmul.f32 %v4655, %v4703
        %v4978 = vmul.f32 %v4656, %v4704
        %v4979 = vmul.f32 %v4657, %v4705
        %v4980 = vmul.f32 %v4658, %v4706
        %v4981 = vmul.f32 %v4659, %v4707
        %v4982 = vmul.f32 %v4660, %v4708
        %v4983 = vmul.f32 %v4661, %v4709
        %v4984 = vmul.f32 %v4662, %v4710
        %v4985 = vsel %vm868, %v4969, 0.0
        %4986 = vadd.xlane.f32.xlu0 %v4985
        %v4987 = vpop.xlane.xlu0 %4986
        %v4988 = vsel %vm868, %v4970, 0.0
        %4989 = vadd.xlane.f32.xlu0 %v4988
        %v4990 = vpop.xlane.xlu0 %4989
        %v4991 = vsel %vm868, %v4971, 0.0
        %4992 = vadd.xlane.f32.xlu0 %v4991
        %v4993 = vpop.xlane.xlu0 %4992
        %v4994 = vsel %vm868, %v4972, 0.0
        %4995 = vadd.xlane.f32.xlu0 %v4994
        %v4996 = vpop.xlane.xlu0 %4995
        %v4997 = vsel %vm868, %v4973, 0.0
        %4998 = vadd.xlane.f32.xlu0 %v4997
        %v4999 = vpop.xlane.xlu0 %4998
        %v5000 = vsel %vm868, %v4974, 0.0
        %5001 = vadd.xlane.f32.xlu0 %v5000
        %v5002 = vpop.xlane.xlu0 %5001
        %v5003 = vsel %vm868, %v4975, 0.0
        %5004 = vadd.xlane.f32.xlu0 %v5003
        %v5005 = vpop.xlane.xlu0 %5004
        %v5006 = vsel %vm868, %v4976, 0.0
        %5007 = vadd.xlane.f32.xlu0 %v5006
        %v5008 = vpop.xlane.xlu0 %5007
        %v5009 = vsel %vm868, %v4977, 0.0
        %5010 = vadd.xlane.f32.xlu0 %v5009
        %v5011 = vpop.xlane.xlu0 %5010
        %v5012 = vsel %vm868, %v4978, 0.0
        %5013 = vadd.xlane.f32.xlu0 %v5012
        %v5014 = vpop.xlane.xlu0 %5013
        %v5015 = vsel %vm868, %v4979, 0.0
        %5016 = vadd.xlane.f32.xlu0 %v5015
        %v5017 = vpop.xlane.xlu0 %5016
        %v5018 = vsel %vm868, %v4980, 0.0
        %5019 = vadd.xlane.f32.xlu0 %v5018
        %v5020 = vpop.xlane.xlu0 %5019
        %v5021 = vsel %vm868, %v4981, 0.0
        %5022 = vadd.xlane.f32.xlu0 %v5021
        %v5023 = vpop.xlane.xlu0 %5022
        %v5024 = vsel %vm868, %v4982, 0.0
        %5025 = vadd.xlane.f32.xlu0 %v5024
        %v5026 = vpop.xlane.xlu0 %5025
        %v5027 = vsel %vm868, %v4983, 0.0
        %5028 = vadd.xlane.f32.xlu0 %v5027
        %v5029 = vpop.xlane.xlu0 %5028
        %v5030 = vsel %vm868, %v4984, 0.0
        %5031 = vadd.xlane.f32.xlu0 %v5030
        %v5032 = vpop.xlane.xlu0 %5031
        %v5033 = vadd.f32 %v4987, %v4990
        %v5034 = vadd.f32 %v5033, %v4993
        %v5035 = vadd.f32 %v5034, %v4996
        %v5036 = vadd.f32 %v5035, %v4999
        %v5037 = vadd.f32 %v5036, %v5002
        %v5038 = vadd.f32 %v5037, %v5005
        %v5039 = vadd.f32 %v5038, %v5008
        %v5040 = vadd.f32 %v5039, %v5011
        %v5041 = vadd.f32 %v5040, %v5014
        %v5042 = vadd.f32 %v5041, %v5017
        %v5043 = vadd.f32 %v5042, %v5020
        %v5044 = vadd.f32 %v5043, %v5023
        %v5045 = vadd.f32 %v5044, %v5026
        %v5046 = vadd.f32 %v5045, %v5029
        %v5047 = vadd.f32 %v5046, %v5032
        %v5048 = vrot.slane %v5047, 4
        %v5049 = vadd.f32 %v5047, %v5048
        %v5050 = vrot.slane %v5049, 2
        %v5051 = vadd.f32 %v5049, %v5050
        %v5052 = vrot.slane %v5051, 1
        %v5053 = vadd.f32 %v5051, %v5052
        %v5054 = vsub.f32 0.0, %v5053
        %s5055 = scalar_lea.vmem %s471, 3 [#allocation10]
        %5056 = vst [vmem:[%s5055] sm:$0x1] %v4968
        %s5057 = scalar_lea.vmem %s478, 3 [#allocation11]
        %5058 = vst [vmem:[%s5057] sm:$0x1] %v5054
        %s5059 = sand.u32 %s224, 1
        %s5060 = scalar_lea.sflag [#allocation4], %s5059
        %s5061 = sand.u32 %s224, 1
        %s5062 = smul.addr %s5061, 128
        %s5063 = scalar_lea.vmem [#allocation7], %s5062
        %s5064 = sand.u32 %s38, 1
        %s5065 = scalar_lea.sflag [#allocation9], %s5064
        %s5066 = sand.u32 %s250, 1
        %s5067 = smul.addr %s5066, 128
        %s5068 = scalar_lea.vmem [#allocation8], %s5067
        %s5069 = sand.u32 %s38, 1
        %s5070 = scalar_lea.sflag [#allocation9], %s5069
        %s5071 = sand.u32 %s276, 1
        %s5072 = smul.addr %s5071, 4
        %s5073 = scalar_lea.vmem [#allocation10], %s5072
        %s5074 = sand.u32 %s302, 1
        %s5075 = scalar_lea.sflag [#allocation12], %s5074
        %s5076 = sand.u32 %s302, 1
        %s5077 = smul.addr %s5076, 4
        %s5078 = scalar_lea.vmem [#allocation11], %s5077
        // Predicated region
        $region61: #{tpu_custom_call.1} parent=51 // pred_check
          %p5079 = pneg %p234
        $region62: #{tpu_custom_call.1} parent=51 // pred_check_branch
          %5081 = sbr.rel (%p5079) target = $region64
        $region63: #{tpu_custom_call.1} parent=51 // pred_region
          %s5082 = smul.u32 4, %s38
          %5084 = vsyncadd %s5060, 0
          %s5085 = smul.addr %s5082, 4
          %s5086 = smul.addr %s5085, 8
          %s5087 = scalar_lea.hbm %s8, %s5086
          %s5088 = sshll.u32 %s5063, 4
          %s5089 = int_to_ptr.vmem [resolvable:$true] %s5088
          %s5090 = sshll.u32 %s5087, 4
          %s5091 = int_to_ptr.hbm [resolvable:$true] %s5090
          %5096 = dma.vmem_to_hbm [thread:$0]  %s5089, 2048, %s5091, %s5060, 128, 128, 8
        $region64: #{tpu_custom_call.1} parent=51 // pred_fallthru
          _
        // Predicated region
        $region65: #{tpu_custom_call.1} parent=51 // pred_check
          %p5097 = pneg %p260
        $region66: #{tpu_custom_call.1} parent=51 // pred_check_branch
          %5099 = sbr.rel (%p5097) target = $region68
        $region67: #{tpu_custom_call.1} parent=51 // pred_region
          %s5100 = smul.u32 4, %s38
          %5102 = vsyncadd %s5065, 0
          %s5103 = smul.addr %s5100, 4
          %s5104 = smul.addr %s5103, 8
          %s5105 = scalar_lea.hbm %s9, %s5104
          %s5106 = sshll.u32 %s5068, 4
          %s5107 = int_to_ptr.vmem [resolvable:$true] %s5106
          %s5108 = sshll.u32 %s5105, 4
          %s5109 = int_to_ptr.hbm [resolvable:$true] %s5108
          %5114 = dma.vmem_to_hbm [thread:$0]  %s5107, 2048, %s5109, %s5065, 128, 128, 8
        $region68: #{tpu_custom_call.1} parent=51 // pred_fallthru
          _
        // Predicated region
        $region69: #{tpu_custom_call.1} parent=51 // pred_check
          %p5115 = pneg %p286
        $region70: #{tpu_custom_call.1} parent=51 // pred_check_branch
          %5117 = sbr.rel (%p5115) target = $region72
        $region71: #{tpu_custom_call.1} parent=51 // pred_region
          %s5118 = smul.u32 4, %s38
          %5120 = vsyncadd %s5070, 0
          %s5121 = scalar_lea.hbm %s10, %s5118
          %s5122 = sshll.u32 %s5073, 4
          %s5123 = int_to_ptr.vmem [resolvable:$true] %s5122
          %s5124 = sshll.u32 %s5121, 4
          %s5125 = int_to_ptr.hbm [resolvable:$true] %s5124
          %5130 = dma.vmem_to_hbm [thread:$0]  %s5123, 64, %s5125, %s5070, 16, 16, 1
        $region72: #{tpu_custom_call.1} parent=51 // pred_fallthru
          _
        // Predicated region
        $region73: #{tpu_custom_call.1} parent=51 // pred_check
          %p5131 = pneg %p312
        $region74: #{tpu_custom_call.1} parent=51 // pred_check_branch
          %5133 = sbr.rel (%p5131) target = $region76
        $region75: #{tpu_custom_call.1} parent=51 // pred_region
          %s5134 = smul.u32 4, %s38
          %5136 = vsyncadd %s5075, 0
          %s5137 = scalar_lea.hbm %s11, %s5134
          %s5138 = sshll.u32 %s5078, 4
          %s5139 = int_to_ptr.vmem [resolvable:$true] %s5138
          %s5140 = sshll.u32 %s5137, 4
          %s5141 = int_to_ptr.hbm [resolvable:$true] %s5140
          %5146 = dma.vmem_to_hbm [thread:$0]  %s5139, 64, %s5141, %s5075, 16, 16, 1
        $region76: #{tpu_custom_call.1} parent=51 // pred_fallthru
          _
      $region52: #{tpu_custom_call.1} parent=5 // pred_fallthru
        _
      %p5147 = scmp.le.s32.totalorder 2, %s33
      // Predicated region
      $region77: #{tpu_custom_call.1} parent=5 // pred_check
        %p5148 = pneg %p5147
      $region78: #{tpu_custom_call.1} parent=5 // pred_check_branch
        %5150 = sbr.rel (%p5148) target = $region80
      $region79: #{tpu_custom_call.1} parent=5 // pred_region
        %s5151 = ssub.s32 %s33, 2
        // Predicated region
        $region81: #{tpu_custom_call.1} parent=79 // pred_check
          %p5152 = pneg %p240
        $region82: #{tpu_custom_call.1} parent=79 // pred_check_branch
          %5154 = sbr.rel (%p5152) target = $region84
        $region83: #{tpu_custom_call.1} parent=79 // pred_region
          %s5155 = sand.u32 %s225, 1
          %s5156 = scalar_lea.sflag [#allocation4], %s5155
          %s5157 = sand.u32 %s225, 1
          %s5158 = smul.addr %s5157, 128
          %s5159 = scalar_lea.vmem [#allocation7], %s5158
          %5161 = dma.done %s5156, 2048
        $region84: #{tpu_custom_call.1} parent=79 // pred_fallthru
          _
        // Predicated region
        $region85: #{tpu_custom_call.1} parent=79 // pred_check
          %p5162 = pneg %p266
        $region86: #{tpu_custom_call.1} parent=79 // pred_check_branch
          %5164 = sbr.rel (%p5162) target = $region88
        $region87: #{tpu_custom_call.1} parent=79 // pred_region
          %s5165 = sand.u32 %s39, 1
          %s5166 = scalar_lea.sflag [#allocation9], %s5165
          %s5167 = sand.u32 %s251, 1
          %s5168 = smul.addr %s5167, 128
          %s5169 = scalar_lea.vmem [#allocation8], %s5168
          %5171 = dma.done %s5166, 2048
        $region88: #{tpu_custom_call.1} parent=79 // pred_fallthru
          _
        // Predicated region
        $region89: #{tpu_custom_call.1} parent=79 // pred_check
          %p5172 = pneg %p292
        $region90: #{tpu_custom_call.1} parent=79 // pred_check_branch
          %5174 = sbr.rel (%p5172) target = $region92
        $region91: #{tpu_custom_call.1} parent=79 // pred_region
          %s5175 = sand.u32 %s39, 1
          %s5176 = scalar_lea.sflag [#allocation9], %s5175
          %s5177 = sand.u32 %s277, 1
          %s5178 = smul.addr %s5177, 4
          %s5179 = scalar_lea.vmem [#allocation10], %s5178
          %5181 = dma.done %s5176, 64
        $region92: #{tpu_custom_call.1} parent=79 // pred_fallthru
          _
        // Predicated region
        $region93: #{tpu_custom_call.1} parent=79 // pred_check
          %p5182 = pneg %p318
        $region94: #{tpu_custom_call.1} parent=79 // pred_check_branch
          %5184 = sbr.rel (%p5182) target = $region96
        $region95: #{tpu_custom_call.1} parent=79 // pred_region
          %s5185 = sand.u32 %s303, 1
          %s5186 = scalar_lea.sflag [#allocation12], %s5185
          %s5187 = sand.u32 %s303, 1
          %s5188 = smul.addr %s5187, 4
          %s5189 = scalar_lea.vmem [#allocation11], %s5188
          %5191 = dma.done %s5186, 64
        $region96: #{tpu_custom_call.1} parent=79 // pred_fallthru
          _
      $region80: #{tpu_custom_call.1} parent=5 // pred_fallthru
        _
    $region6: #{tpu_custom_call.1} parent=1 // loop_footer
      %s37 = sadd.s32 1, %s33
    $region7: #{tpu_custom_call.1} parent=1 // loop_footer_branch
      %32 = sbr.rel target = $region3
    $region8: #{tpu_custom_call.1} parent=1 // loop_exit
      _
    %5192 = vsyncpa [#allocation3], 1
    %s5193 = scalar_lea.sflag [#allocation3], 1
    %5194 = vsyncpa %s5193, 1
    %5195 = vsyncpa [#allocation6], 1
    %s5196 = scalar_lea.sflag [#allocation6], 1
    %5197 = vsyncpa %s5196, 1
    %5198 = vsyncpa [#allocation4], 1
    %s5199 = scalar_lea.sflag [#allocation4], 1
    %5200 = vsyncpa %s5199, 1
    %5201 = vsyncpa [#allocation9], 1
    %s5202 = scalar_lea.sflag [#allocation9], 1
    %5203 = vsyncpa %s5202, 1
    %5204 = vsyncpa [#allocation12], 1
    %s5205 = scalar_lea.sflag [#allocation12], 1
    %5206 = vsyncpa %s5205, 1

</llo_original>
